<compile_context>
chip_gen: v7x
topology: tpu7x:2x2x1
jax: 0.10.0
libtpu: 0.0.40
codegen_flags: <defaults>
</compile_context>

<pallas_src>
import jax
import jax.numpy as jnp
from jax.experimental import pallas as pl
from jax.experimental.pallas import tpu as pltpu

BN_EPS = 1e-5


def _conv_rows(x0_ref, x1_ref, x2_ref, w_ref, f, t_len):
    """Conv output for local frequency row `f`: [Cout, T] in float32.

    x*_ref: [Cin, TF, T+1] tap slabs (kf = 0, 1, 2); w_ref: [3, 2, Cout, Cin].
    """
    acc = None
    for kf, x_ref in enumerate((x0_ref, x1_ref, x2_ref)):
        xf = x_ref[:, f, :]                                   # [Cin, T+1]
        for kt in range(2):
            part = jnp.dot(w_ref[kf, kt], xf[:, kt:kt + t_len],
                           preferred_element_type=jnp.float32)
            acc = part if acc is None else acc + part
    return acc


def _stats_kernel(x0_ref, x1_ref, x2_ref, w_ref, b_ref, part_ref):
    """Per-tile BN partials: part_ref[:, 0] = sum(y), part_ref[:, 1] = sum(y*y)."""
    _, tf_rows, t1 = x0_ref.shape
    t_len = t1 - 1
    n_out = w_ref.shape[2]
    s1 = jnp.zeros((n_out, 1), jnp.float32)
    s2 = jnp.zeros((n_out, 1), jnp.float32)
    for f in range(tf_rows):
        y = _conv_rows(x0_ref, x1_ref, x2_ref, w_ref, f, t_len) + b_ref[...]
        s1 = s1 + jnp.sum(y, axis=1, keepdims=True)
        s2 = s2 + jnp.sum(y * y, axis=1, keepdims=True)
    part_ref[...] = jnp.concatenate([s1, s2], axis=1)          # [Cout, 2]


def _apply_kernel(x0_ref, x1_ref, x2_ref, w_ref, b_ref, o_ref):
    """Conv with BN-folded weight/bias, then ELU; o_ref: [Cout, TF, T] (NCHW block)."""
    _, tf_rows, t1 = x0_ref.shape
    t_len = t1 - 1
    for f in range(tf_rows):
        z = _conv_rows(x0_ref, x1_ref, x2_ref, w_ref, f, t_len) + b_ref[...]
        # ELU(alpha=1). exp(z)-1 keeps the Mosaic lowering simple (expm1 nit noted).
        o_ref[:, f, :] = jnp.where(z > 0, z, jnp.exp(z) - 1.0).astype(o_ref.dtype)


def causal_conv_block(x, weight, bias, gamma, beta, *, operand_dtype=jnp.float32):
    """x: [B, Cin, F, T] (NCHW). weight: [Cout, Cin, 3, 2]. Returns [B, Cout, F_out, T].

    operand_dtype=jnp.bfloat16 halves HBM traffic of the tap streams on v6e/v5e
    (accumulation, BN and ELU stay in float32); the demo keeps float32 for a
    tight correctness check.
    """
    B, Cin, F, T = x.shape
    Cout = weight.shape[0]
    F_out = (F - 3) // 2 + 1               # kernel 3, stride 2, no pad along F
    assert F_out >= 1

    # Conv2d pads T by 1 on both sides and the module slices off the last output
    # frame, which is equivalent to a left-pad of 1 only (causal).
    xp = jnp.pad(x, ((0, 0), (0, 0), (0, 0), (1, 0)))          # [B, Cin, F, T+1]

    # Three strided tap views (kf = 0, 1, 2): tap_kf[b, ci, f, u] = xp[b, ci, 2f+kf, u].
    def tap(kf):
        return xp[:, :, kf: kf + 2 * F_out - 1: 2, :].astype(operand_dtype)

    x0, x1, x2 = tap(0), tap(1), tap(2)                        # each [B, Cin, F_out, T+1]

    # Conv weight rearranged so w[kf, kt] is the [Cout, Cin] matrix of that tap.
    w_taps = weight.transpose(2, 3, 0, 1)                      # [3, 2, Cout, Cin]

    # Tile F_out. The output block's second-minor dim must be a multiple of 8 or
    # the full extent, so fall back to the whole axis when 8 does not divide it.
    TF = 8 if (F_out % 8 == 0) else F_out
    n_ft = F_out // TF
    grid = (B, n_ft)

    tap_spec = pl.BlockSpec((None, Cin, TF, T + 1), lambda b, i: (b, 0, i, 0))
    w_spec = pl.BlockSpec((3, 2, Cout, Cin), lambda b, i: (0, 0, 0, 0))
    b_spec = pl.BlockSpec((Cout, 1), lambda b, i: (0, 0))
    cparams = pltpu.CompilerParams(
        dimension_semantics=("parallel", "parallel"),
        vmem_limit_bytes=32 * 1024 * 1024,
    )

    # ---- Pass 1: per-tile (sum, sum_sq) partials of y = conv + bias. ----
    partials = pl.pallas_call(
        _stats_kernel,
        out_shape=jax.ShapeDtypeStruct((B, n_ft, Cout, 2), jnp.float32),
        grid=grid,
        in_specs=[tap_spec, tap_spec, tap_spec, w_spec, b_spec],
        out_specs=pl.BlockSpec((None, None, Cout, 2), lambda b, i: (b, i, 0, 0)),
        compiler_params=cparams,
    )(x0, x1, x2, w_taps.astype(operand_dtype),
      bias.reshape(Cout, 1).astype(jnp.float32))

    sums = jnp.sum(partials, axis=(0, 1))                      # [Cout, 2] (tiny)
    m = B * F_out * T
    mu = sums[:, 0] / m
    var = jnp.maximum(sums[:, 1] / m - mu * mu, 0.0)           # one-pass moments (biased)
    scale = gamma * jax.lax.rsqrt(var + BN_EPS)                # fold BN into conv affine
    w_folded = (w_taps * scale[None, None, :, None]).astype(operand_dtype)
    b_folded = ((bias - mu) * scale + beta).reshape(Cout, 1).astype(jnp.float32)

    # ---- Pass 2: conv (BN folded) + ELU, streamed straight into the NCHW output. ----
    out = pl.pallas_call(
        _apply_kernel,
        out_shape=jax.ShapeDtypeStruct((B, Cout, F_out, T), jnp.float32),
        grid=grid,
        in_specs=[tap_spec, tap_spec, tap_spec, w_spec, b_spec],
        out_specs=pl.BlockSpec((None, Cout, TF, T), lambda b, i: (b, 0, i, 0)),
        compiler_params=cparams,
    )(x0, x1, x2, w_folded, b_folded)
    return out                                                 # NCHW, no transpose


def _reference(x, weight, bias, gamma, beta):
    """Pure-JAX reference of the torch forward (train-mode BN, ELU)."""
    y = jax.lax.conv_general_dilated(
        x, weight, window_strides=(2, 1), padding=((0, 0), (1, 1)),
        dimension_numbers=("NCHW", "OIHW", "NCHW"))
    y = y + bias[None, :, None, None]
    y = y[:, :, :, :-1]
    mu = y.mean(axis=(0, 2, 3), keepdims=True)
    var = ((y - mu) ** 2).mean(axis=(0, 2, 3), keepdims=True)
    y = (y - mu) * jax.lax.rsqrt(var + BN_EPS)
    y = y * gamma[None, :, None, None] + beta[None, :, None, None]
    return jnp.where(y > 0, y, jnp.exp(y) - 1.0)


if __name__ == "__main__":
    key = jax.random.PRNGKey(0)
    k_x, k_w, k_b, k_g, k_beta = jax.random.split(key, 5)

    # F=33 -> F_out=16 -> two frequency tiles of 8; T=128 keeps output stores lane-dense.
    B, Cin, Cout, F, T = 2, 4, 8, 33, 128

    x = jax.random.normal(k_x, (B, Cin, F, T), dtype=jnp.float32)
    weight = 0.1 * jax.random.normal(k_w, (Cout, Cin, 3, 2), dtype=jnp.float32)
    bias = 0.05 * jax.random.normal(k_b, (Cout,), dtype=jnp.float32)
    gamma = 1.0 + 0.1 * jax.random.normal(k_g, (Cout,), dtype=jnp.float32)
    beta = 0.1 * jax.random.normal(k_beta, (Cout,), dtype=jnp.float32)

    out = jax.block_until_ready(causal_conv_block(x, weight, bias, gamma, beta))

    ref = _reference(x, weight, bias, gamma, beta)
    F_out = (F - 3) // 2 + 1
    assert out.shape == (B, Cout, F_out, T), out.shape
    max_err = float(jnp.max(jnp.abs(out - ref)))
    assert jnp.allclose(out, ref, atol=1e-4, rtol=1e-4), max_err

    print("KERNEL_OK")
</pallas_src>

<mosaic_0001>
module attributes {stable_mosaic.version = 11 : i64} {
  func.func @_stats_kernel(%arg0: i32, %arg1: i32, %arg2: memref<1x4x8x129xf32, #tpu.memory_space<vmem>>, %arg3: memref<1x4x8x129xf32, #tpu.memory_space<vmem>>, %arg4: memref<1x4x8x129xf32, #tpu.memory_space<vmem>>, %arg5: memref<3x2x8x4xf32, #tpu.memory_space<vmem>>, %arg6: memref<8x1xf32, #tpu.memory_space<vmem>>, %arg7: memref<1x1x8x2xf32, #tpu.memory_space<vmem>>) attributes {dimension_semantics = [#tpu.dimension_semantics<parallel>, #tpu.dimension_semantics<parallel>], iteration_bounds = array<i64: 2, 2>, scalar_prefetch = 0 : i64, scratch_operands = 0 : i64, tpu.core_type = #tpu.core_type<tc>, window_params = [{transform_indices = @transform_0, window_bounds = array<i64: 1, 4, 8, 129>}, {transform_indices = @transform_1, window_bounds = array<i64: 1, 4, 8, 129>}, {transform_indices = @transform_2, window_bounds = array<i64: 1, 4, 8, 129>}, {pipeline_mode = #tpu.pipeline_mode<synchronous>, transform_indices = @transform_3, window_bounds = array<i64: 3, 2, 8, 4>}, {pipeline_mode = #tpu.pipeline_mode<synchronous>, transform_indices = @transform_4, window_bounds = array<i64: 8, 1>}, {transform_indices = @transform_5, window_bounds = array<i64: 1, 1, 8, 2>}]} {
    %cst = arith.constant 0.000000e+00 : f32
    %0 = vector.broadcast %cst : f32 to vector<8x1xf32>
    %cst_0 = arith.constant 0.000000e+00 : f32
    %1 = vector.broadcast %cst_0 : f32 to vector<8x1xf32>
    %c0 = arith.constant 0 : index
    %c0_1 = arith.constant 0 : index
    %c0_2 = arith.constant 0 : index
    %c0_3 = arith.constant 0 : index
    %2 = vector.load %arg2[%c0, %c0_1, %c0_2, %c0_3] : memref<1x4x8x129xf32, #tpu.memory_space<vmem>>, vector<1x4x1x129xf32>
    %3 = vector.shape_cast %2 : vector<1x4x1x129xf32> to vector<4x129xf32>
    %c0_4 = arith.constant 0 : index
    %c0_5 = arith.constant 0 : index
    %c0_6 = arith.constant 0 : index
    %c0_7 = arith.constant 0 : index
    %4 = vector.load %arg5[%c0_4, %c0_5, %c0_6, %c0_7] : memref<3x2x8x4xf32, #tpu.memory_space<vmem>>, vector<1x1x8x4xf32>
    %5 = vector.shape_cast %4 : vector<1x1x8x4xf32> to vector<8x4xf32>
    %6 = vector.extract_strided_slice %3 {offsets = [0, 0], sizes = [4, 128], strides = [1, 1]} : vector<4x129xf32> to vector<4x128xf32>
    %cst_8 = arith.constant dense<0.000000e+00> : vector<8x128xf32>
    %7 = tpu.matmul %5, %6, %cst_8 {dimension_numbers = #tpu.dot_dimension_numbers<[1], [0], [0], [1], [0, 0, 1, 1], [], []>} : vector<8x4xf32>, vector<4x128xf32>, vector<8x128xf32> -> vector<8x128xf32>
    %c0_9 = arith.constant 0 : index
    %c1 = arith.constant 1 : index
    %c0_10 = arith.constant 0 : index
    %c0_11 = arith.constant 0 : index
    %8 = vector.load %arg5[%c0_9, %c1, %c0_10, %c0_11] : memref<3x2x8x4xf32, #tpu.memory_space<vmem>>, vector<1x1x8x4xf32>
    %9 = vector.shape_cast %8 : vector<1x1x8x4xf32> to vector<8x4xf32>
    %10 = vector.extract_strided_slice %3 {offsets = [0, 1], sizes = [4, 128], strides = [1, 1]} : vector<4x129xf32> to vector<4x128xf32>
    %cst_12 = arith.constant dense<0.000000e+00> : vector<8x128xf32>
    %11 = tpu.matmul %9, %10, %cst_12 {dimension_numbers = #tpu.dot_dimension_numbers<[1], [0], [0], [1], [0, 0, 1, 1], [], []>} : vector<8x4xf32>, vector<4x128xf32>, vector<8x128xf32> -> vector<8x128xf32>
    %12 = arith.addf %7, %11 : vector<8x128xf32>
    %c0_13 = arith.constant 0 : index
    %c0_14 = arith.constant 0 : index
    %c0_15 = arith.constant 0 : index
    %c0_16 = arith.constant 0 : index
    %13 = vector.load %arg3[%c0_13, %c0_14, %c0_15, %c0_16] : memref<1x4x8x129xf32, #tpu.memory_space<vmem>>, vector<1x4x1x129xf32>
    %14 = vector.shape_cast %13 : vector<1x4x1x129xf32> to vector<4x129xf32>
    %c1_17 = arith.constant 1 : index
    %c0_18 = arith.constant 0 : index
    %c0_19 = arith.constant 0 : index
    %c0_20 = arith.constant 0 : index
    %15 = vector.load %arg5[%c1_17, %c0_18, %c0_19, %c0_20] : memref<3x2x8x4xf32, #tpu.memory_space<vmem>>, vector<1x1x8x4xf32>
    %16 = vector.shape_cast %15 : vector<1x1x8x4xf32> to vector<8x4xf32>
    %17 = vector.extract_strided_slice %14 {offsets = [0, 0], sizes = [4, 128], strides = [1, 1]} : vector<4x129xf32> to vector<4x128xf32>
    %cst_21 = arith.constant dense<0.000000e+00> : vector<8x128xf32>
    %18 = tpu.matmul %16, %17, %cst_21 {dimension_numbers = #tpu.dot_dimension_numbers<[1], [0], [0], [1], [0, 0, 1, 1], [], []>} : vector<8x4xf32>, vector<4x128xf32>, vector<8x128xf32> -> vector<8x128xf32>
    %19 = arith.addf %12, %18 : vector<8x128xf32>
    %c1_22 = arith.constant 1 : index
    %c1_23 = arith.constant 1 : index
    %c0_24 = arith.constant 0 : index
    %c0_25 = arith.constant 0 : index
    %20 = vector.load %arg5[%c1_22, %c1_23, %c0_24, %c0_25] : memref<3x2x8x4xf32, #tpu.memory_space<vmem>>, vector<1x1x8x4xf32>
    %21 = vector.shape_cast %20 : vector<1x1x8x4xf32> to vector<8x4xf32>
    %22 = vector.extract_strided_slice %14 {offsets = [0, 1], sizes = [4, 128], strides = [1, 1]} : vector<4x129xf32> to vector<4x128xf32>
    %cst_26 = arith.constant dense<0.000000e+00> : vector<8x128xf32>
    %23 = tpu.matmul %21, %22, %cst_26 {dimension_numbers = #tpu.dot_dimension_numbers<[1], [0], [0], [1], [0, 0, 1, 1], [], []>} : vector<8x4xf32>, vector<4x128xf32>, vector<8x128xf32> -> vector<8x128xf32>
    %24 = arith.addf %19, %23 : vector<8x128xf32>
    %c0_27 = arith.constant 0 : index
    %c0_28 = arith.constant 0 : index
    %c0_29 = arith.constant 0 : index
    %c0_30 = arith.constant 0 : index
    %25 = vector.load %arg4[%c0_27, %c0_28, %c0_29, %c0_30] : memref<1x4x8x129xf32, #tpu.memory_space<vmem>>, vector<1x4x1x129xf32>
    %26 = vector.shape_cast %25 : vector<1x4x1x129xf32> to vector<4x129xf32>
    %c2 = arith.constant 2 : index
    %c0_31 = arith.constant 0 : index
    %c0_32 = arith.constant 0 : index
    %c0_33 = arith.constant 0 : index
    %27 = vector.load %arg5[%c2, %c0_31, %c0_32, %c0_33] : memref<3x2x8x4xf32, #tpu.memory_space<vmem>>, vector<1x1x8x4xf32>
    %28 = vector.shape_cast %27 : vector<1x1x8x4xf32> to vector<8x4xf32>
    %29 = vector.extract_strided_slice %26 {offsets = [0, 0], sizes = [4, 128], strides = [1, 1]} : vector<4x129xf32> to vector<4x128xf32>
    %cst_34 = arith.constant dense<0.000000e+00> : vector<8x128xf32>
    %30 = tpu.matmul %28, %29, %cst_34 {dimension_numbers = #tpu.dot_dimension_numbers<[1], [0], [0], [1], [0, 0, 1, 1], [], []>} : vector<8x4xf32>, vector<4x128xf32>, vector<8x128xf32> -> vector<8x128xf32>
    %31 = arith.addf %24, %30 : vector<8x128xf32>
    %c2_35 = arith.constant 2 : index
    %c1_36 = arith.constant 1 : index
    %c0_37 = arith.constant 0 : index
    %c0_38 = arith.constant 0 : index
    %32 = vector.load %arg5[%c2_35, %c1_36, %c0_37, %c0_38] : memref<3x2x8x4xf32, #tpu.memory_space<vmem>>, vector<1x1x8x4xf32>
    %33 = vector.shape_cast %32 : vector<1x1x8x4xf32> to vector<8x4xf32>
    %34 = vector.extract_strided_slice %26 {offsets = [0, 1], sizes = [4, 128], strides = [1, 1]} : vector<4x129xf32> to vector<4x128xf32>
    %cst_39 = arith.constant dense<0.000000e+00> : vector<8x128xf32>
    %35 = tpu.matmul %33, %34, %cst_39 {dimension_numbers = #tpu.dot_dimension_numbers<[1], [0], [0], [1], [0, 0, 1, 1], [], []>} : vector<8x4xf32>, vector<4x128xf32>, vector<8x128xf32> -> vector<8x128xf32>
    %36 = arith.addf %31, %35 : vector<8x128xf32>
    %c0_40 = arith.constant 0 : index
    %c0_41 = arith.constant 0 : index
    %37 = vector.load %arg6[%c0_40, %c0_41] : memref<8x1xf32, #tpu.memory_space<vmem>>, vector<8x1xf32>
    %38 = vector.broadcast %37 : vector<8x1xf32> to vector<8x128xf32>
    %39 = arith.addf %36, %38 : vector<8x128xf32>
    %cst_42 = arith.constant dense<0.000000e+00> : vector<8xf32>
    %40 = vector.multi_reduction <add>, %39, %cst_42 [1] : vector<8x128xf32> to vector<8xf32>
    %41 = vector.shape_cast %40 : vector<8xf32> to vector<8x1xf32>
    %42 = arith.addf %0, %41 : vector<8x1xf32>
    %43 = arith.mulf %39, %39 : vector<8x128xf32>
    %cst_43 = arith.constant dense<0.000000e+00> : vector<8xf32>
    %44 = vector.multi_reduction <add>, %43, %cst_43 [1] : vector<8x128xf32> to vector<8xf32>
    %45 = vector.shape_cast %44 : vector<8xf32> to vector<8x1xf32>
    %46 = arith.addf %1, %45 : vector<8x1xf32>
    %c0_44 = arith.constant 0 : index
    %c0_45 = arith.constant 0 : index
    %c1_46 = arith.constant 1 : index
    %c0_47 = arith.constant 0 : index
    %47 = vector.load %arg2[%c0_44, %c0_45, %c1_46, %c0_47] : memref<1x4x8x129xf32, #tpu.memory_space<vmem>>, vector<1x4x1x129xf32>
    %48 = vector.shape_cast %47 : vector<1x4x1x129xf32> to vector<4x129xf32>
    %c0_48 = arith.constant 0 : index
    %c0_49 = arith.constant 0 : index
    %c0_50 = arith.constant 0 : index
    %c0_51 = arith.constant 0 : index
    %49 = vector.load %arg5[%c0_48, %c0_49, %c0_50, %c0_51] : memref<3x2x8x4xf32, #tpu.memory_space<vmem>>, vector<1x1x8x4xf32>
    %50 = vector.shape_cast %49 : vector<1x1x8x4xf32> to vector<8x4xf32>
    %51 = vector.extract_strided_slice %48 {offsets = [0, 0], sizes = [4, 128], strides = [1, 1]} : vector<4x129xf32> to vector<4x128xf32>
    %cst_52 = arith.constant dense<0.000000e+00> : vector<8x128xf32>
    %52 = tpu.matmul %50, %51, %cst_52 {dimension_numbers = #tpu.dot_dimension_numbers<[1], [0], [0], [1], [0, 0, 1, 1], [], []>} : vector<8x4xf32>, vector<4x128xf32>, vector<8x128xf32> -> vector<8x128xf32>
    %c0_53 = arith.constant 0 : index
    %c1_54 = arith.constant 1 : index
    %c0_55 = arith.constant 0 : index
    %c0_56 = arith.constant 0 : index
    %53 = vector.load %arg5[%c0_53, %c1_54, %c0_55, %c0_56] : memref<3x2x8x4xf32, #tpu.memory_space<vmem>>, vector<1x1x8x4xf32>
    %54 = vector.shape_cast %53 : vector<1x1x8x4xf32> to vector<8x4xf32>
    %55 = vector.extract_strided_slice %48 {offsets = [0, 1], sizes = [4, 128], strides = [1, 1]} : vector<4x129xf32> to vector<4x128xf32>
    %cst_57 = arith.constant dense<0.000000e+00> : vector<8x128xf32>
    %56 = tpu.matmul %54, %55, %cst_57 {dimension_numbers = #tpu.dot_dimension_numbers<[1], [0], [0], [1], [0, 0, 1, 1], [], []>} : vector<8x4xf32>, vector<4x128xf32>, vector<8x128xf32> -> vector<8x128xf32>
    %57 = arith.addf %52, %56 : vector<8x128xf32>
    %c0_58 = arith.constant 0 : index
    %c0_59 = arith.constant 0 : index
    %c1_60 = arith.constant 1 : index
    %c0_61 = arith.constant 0 : index
    %58 = vector.load %arg3[%c0_58, %c0_59, %c1_60, %c0_61] : memref<1x4x8x129xf32, #tpu.memory_space<vmem>>, vector<1x4x1x129xf32>
    %59 = vector.shape_cast %58 : vector<1x4x1x129xf32> to vector<4x129xf32>
    %c1_62 = arith.constant 1 : index
    %c0_63 = arith.constant 0 : index
    %c0_64 = arith.constant 0 : index
    %c0_65 = arith.constant 0 : index
    %60 = vector.load %arg5[%c1_62, %c0_63, %c0_64, %c0_65] : memref<3x2x8x4xf32, #tpu.memory_space<vmem>>, vector<1x1x8x4xf32>
    %61 = vector.shape_cast %60 : vector<1x1x8x4xf32> to vector<8x4xf32>
    %62 = vector.extract_strided_slice %59 {offsets = [0, 0], sizes = [4, 128], strides = [1, 1]} : vector<4x129xf32> to vector<4x128xf32>
    %cst_66 = arith.constant dense<0.000000e+00> : vector<8x128xf32>
    %63 = tpu.matmul %61, %62, %cst_66 {dimension_numbers = #tpu.dot_dimension_numbers<[1], [0], [0], [1], [0, 0, 1, 1], [], []>} : vector<8x4xf32>, vector<4x128xf32>, vector<8x128xf32> -> vector<8x128xf32>
    %64 = arith.addf %57, %63 : vector<8x128xf32>
    %c1_67 = arith.constant 1 : index
    %c1_68 = arith.constant 1 : index
    %c0_69 = arith.constant 0 : index
    %c0_70 = arith.constant 0 : index
    %65 = vector.load %arg5[%c1_67, %c1_68, %c0_69, %c0_70] : memref<3x2x8x4xf32, #tpu.memory_space<vmem>>, vector<1x1x8x4xf32>
    %66 = vector.shape_cast %65 : vector<1x1x8x4xf32> to vector<8x4xf32>
    %67 = vector.extract_strided_slice %59 {offsets = [0, 1], sizes = [4, 128], strides = [1, 1]} : vector<4x129xf32> to vector<4x128xf32>
    %cst_71 = arith.constant dense<0.000000e+00> : vector<8x128xf32>
    %68 = tpu.matmul %66, %67, %cst_71 {dimension_numbers = #tpu.dot_dimension_numbers<[1], [0], [0], [1], [0, 0, 1, 1], [], []>} : vector<8x4xf32>, vector<4x128xf32>, vector<8x128xf32> -> vector<8x128xf32>
    %69 = arith.addf %64, %68 : vector<8x128xf32>
    %c0_72 = arith.constant 0 : index
    %c0_73 = arith.constant 0 : index
    %c1_74 = arith.constant 1 : index
    %c0_75 = arith.constant 0 : index
    %70 = vector.load %arg4[%c0_72, %c0_73, %c1_74, %c0_75] : memref<1x4x8x129xf32, #tpu.memory_space<vmem>>, vector<1x4x1x129xf32>
    %71 = vector.shape_cast %70 : vector<1x4x1x129xf32> to vector<4x129xf32>
    %c2_76 = arith.constant 2 : index
    %c0_77 = arith.constant 0 : index
    %c0_78 = arith.constant 0 : index
    %c0_79 = arith.constant 0 : index
    %72 = vector.load %arg5[%c2_76, %c0_77, %c0_78, %c0_79] : memref<3x2x8x4xf32, #tpu.memory_space<vmem>>, vector<1x1x8x4xf32>
    %73 = vector.shape_cast %72 : vector<1x1x8x4xf32> to vector<8x4xf32>
    %74 = vector.extract_strided_slice %71 {offsets = [0, 0], sizes = [4, 128], strides = [1, 1]} : vector<4x129xf32> to vector<4x128xf32>
    %cst_80 = arith.constant dense<0.000000e+00> : vector<8x128xf32>
    %75 = tpu.matmul %73, %74, %cst_80 {dimension_numbers = #tpu.dot_dimension_numbers<[1], [0], [0], [1], [0, 0, 1, 1], [], []>} : vector<8x4xf32>, vector<4x128xf32>, vector<8x128xf32> -> vector<8x128xf32>
    %76 = arith.addf %69, %75 : vector<8x128xf32>
    %c2_81 = arith.constant 2 : index
    %c1_82 = arith.constant 1 : index
    %c0_83 = arith.constant 0 : index
    %c0_84 = arith.constant 0 : index
    %77 = vector.load %arg5[%c2_81, %c1_82, %c0_83, %c0_84] : memref<3x2x8x4xf32, #tpu.memory_space<vmem>>, vector<1x1x8x4xf32>
    %78 = vector.shape_cast %77 : vector<1x1x8x4xf32> to vector<8x4xf32>
    %79 = vector.extract_strided_slice %71 {offsets = [0, 1], sizes = [4, 128], strides = [1, 1]} : vector<4x129xf32> to vector<4x128xf32>
    %cst_85 = arith.constant dense<0.000000e+00> : vector<8x128xf32>
    %80 = tpu.matmul %78, %79, %cst_85 {dimension_numbers = #tpu.dot_dimension_numbers<[1], [0], [0], [1], [0, 0, 1, 1], [], []>} : vector<8x4xf32>, vector<4x128xf32>, vector<8x128xf32> -> vector<8x128xf32>
    %81 = arith.addf %76, %80 : vector<8x128xf32>
    %c0_86 = arith.constant 0 : index
    %c0_87 = arith.constant 0 : index
    %82 = vector.load %arg6[%c0_86, %c0_87] : memref<8x1xf32, #tpu.memory_space<vmem>>, vector<8x1xf32>
    %83 = vector.broadcast %82 : vector<8x1xf32> to vector<8x128xf32>
    %84 = arith.addf %81, %83 : vector<8x128xf32>
    %cst_88 = arith.constant dense<0.000000e+00> : vector<8xf32>
    %85 = vector.multi_reduction <add>, %84, %cst_88 [1] : vector<8x128xf32> to vector<8xf32>
    %86 = vector.shape_cast %85 : vector<8xf32> to vector<8x1xf32>
    %87 = arith.addf %42, %86 : vector<8x1xf32>
    %88 = arith.mulf %84, %84 : vector<8x128xf32>
    %cst_89 = arith.constant dense<0.000000e+00> : vector<8xf32>
    %89 = vector.multi_reduction <add>, %88, %cst_89 [1] : vector<8x128xf32> to vector<8xf32>
    %90 = vector.shape_cast %89 : vector<8xf32> to vector<8x1xf32>
    %91 = arith.addf %46, %90 : vector<8x1xf32>
    %c0_90 = arith.constant 0 : index
    %c0_91 = arith.constant 0 : index
    %c2_92 = arith.constant 2 : index
    %c0_93 = arith.constant 0 : index
    %92 = vector.load %arg2[%c0_90, %c0_91, %c2_92, %c0_93] : memref<1x4x8x129xf32, #tpu.memory_space<vmem>>, vector<1x4x1x129xf32>
    %93 = vector.shape_cast %92 : vector<1x4x1x129xf32> to vector<4x129xf32>
    %c0_94 = arith.constant 0 : index
    %c0_95 = arith.constant 0 : index
    %c0_96 = arith.constant 0 : index
    %c0_97 = arith.constant 0 : index
    %94 = vector.load %arg5[%c0_94, %c0_95, %c0_96, %c0_97] : memref<3x2x8x4xf32, #tpu.memory_space<vmem>>, vector<1x1x8x4xf32>
    %95 = vector.shape_cast %94 : vector<1x1x8x4xf32> to vector<8x4xf32>
    %96 = vector.extract_strided_slice %93 {offsets = [0, 0], sizes = [4, 128], strides = [1, 1]} : vector<4x129xf32> to vector<4x128xf32>
    %cst_98 = arith.constant dense<0.000000e+00> : vector<8x128xf32>
    %97 = tpu.matmul %95, %96, %cst_98 {dimension_numbers = #tpu.dot_dimension_numbers<[1], [0], [0], [1], [0, 0, 1, 1], [], []>} : vector<8x4xf32>, vector<4x128xf32>, vector<8x128xf32> -> vector<8x128xf32>
    %c0_99 = arith.constant 0 : index
    %c1_100 = arith.constant 1 : index
    %c0_101 = arith.constant 0 : index
    %c0_102 = arith.constant 0 : index
    %98 = vector.load %arg5[%c0_99, %c1_100, %c0_101, %c0_102] : memref<3x2x8x4xf32, #tpu.memory_space<vmem>>, vector<1x1x8x4xf32>
    %99 = vector.shape_cast %98 : vector<1x1x8x4xf32> to vector<8x4xf32>
    %100 = vector.extract_strided_slice %93 {offsets = [0, 1], sizes = [4, 128], strides = [1, 1]} : vector<4x129xf32> to vector<4x128xf32>
    %cst_103 = arith.constant dense<0.000000e+00> : vector<8x128xf32>
    %101 = tpu.matmul %99, %100, %cst_103 {dimension_numbers = #tpu.dot_dimension_numbers<[1], [0], [0], [1], [0, 0, 1, 1], [], []>} : vector<8x4xf32>, vector<4x128xf32>, vector<8x128xf32> -> vector<8x128xf32>
    %102 = arith.addf %97, %101 : vector<8x128xf32>
    %c0_104 = arith.constant 0 : index
    %c0_105 = arith.constant 0 : index
    %c2_106 = arith.constant 2 : index
    %c0_107 = arith.constant 0 : index
    %103 = vector.load %arg3[%c0_104, %c0_105, %c2_106, %c0_107] : memref<1x4x8x129xf32, #tpu.memory_space<vmem>>, vector<1x4x1x129xf32>
    %104 = vector.shape_cast %103 : vector<1x4x1x129xf32> to vector<4x129xf32>
    %c1_108 = arith.constant 1 : index
    %c0_109 = arith.constant 0 : index
    %c0_110 = arith.constant 0 : index
    %c0_111 = arith.constant 0 : index
    %105 = vector.load %arg5[%c1_108, %c0_109, %c0_110, %c0_111] : memref<3x2x8x4xf32, #tpu.memory_space<vmem>>, vector<1x1x8x4xf32>
    %106 = vector.shape_cast %105 : vector<1x1x8x4xf32> to vector<8x4xf32>
    %107 = vector.extract_strided_slice %104 {offsets = [0, 0], sizes = [4, 128], strides = [1, 1]} : vector<4x129xf32> to vector<4x128xf32>
    %cst_112 = arith.constant dense<0.000000e+00> : vector<8x128xf32>
    %108 = tpu.matmul %106, %107, %cst_112 {dimension_numbers = #tpu.dot_dimension_numbers<[1], [0], [0], [1], [0, 0, 1, 1], [], []>} : vector<8x4xf32>, vector<4x128xf32>, vector<8x128xf32> -> vector<8x128xf32>
    %109 = arith.addf %102, %108 : vector<8x128xf32>
    %c1_113 = arith.constant 1 : index
    %c1_114 = arith.constant 1 : index
    %c0_115 = arith.constant 0 : index
    %c0_116 = arith.constant 0 : index
    %110 = vector.load %arg5[%c1_113, %c1_114, %c0_115, %c0_116] : memref<3x2x8x4xf32, #tpu.memory_space<vmem>>, vector<1x1x8x4xf32>
    %111 = vector.shape_cast %110 : vector<1x1x8x4xf32> to vector<8x4xf32>
    %112 = vector.extract_strided_slice %104 {offsets = [0, 1], sizes = [4, 128], strides = [1, 1]} : vector<4x129xf32> to vector<4x128xf32>
    %cst_117 = arith.constant dense<0.000000e+00> : vector<8x128xf32>
    %113 = tpu.matmul %111, %112, %cst_117 {dimension_numbers = #tpu.dot_dimension_numbers<[1], [0], [0], [1], [0, 0, 1, 1], [], []>} : vector<8x4xf32>, vector<4x128xf32>, vector<8x128xf32> -> vector<8x128xf32>
    %114 = arith.addf %109, %113 : vector<8x128xf32>
    %c0_118 = arith.constant 0 : index
    %c0_119 = arith.constant 0 : index
    %c2_120 = arith.constant 2 : index
    %c0_121 = arith.constant 0 : index
    %115 = vector.load %arg4[%c0_118, %c0_119, %c2_120, %c0_121] : memref<1x4x8x129xf32, #tpu.memory_space<vmem>>, vector<1x4x1x129xf32>
    %116 = vector.shape_cast %115 : vector<1x4x1x129xf32> to vector<4x129xf32>
    %c2_122 = arith.constant 2 : index
    %c0_123 = arith.constant 0 : index
    %c0_124 = arith.constant 0 : index
    %c0_125 = arith.constant 0 : index
    %117 = vector.load %arg5[%c2_122, %c0_123, %c0_124, %c0_125] : memref<3x2x8x4xf32, #tpu.memory_space<vmem>>, vector<1x1x8x4xf32>
    %118 = vector.shape_cast %117 : vector<1x1x8x4xf32> to vector<8x4xf32>
    %119 = vector.extract_strided_slice %116 {offsets = [0, 0], sizes = [4, 128], strides = [1, 1]} : vector<4x129xf32> to vector<4x128xf32>
    %cst_126 = arith.constant dense<0.000000e+00> : vector<8x128xf32>
    %120 = tpu.matmul %118, %119, %cst_126 {dimension_numbers = #tpu.dot_dimension_numbers<[1], [0], [0], [1], [0, 0, 1, 1], [], []>} : vector<8x4xf32>, vector<4x128xf32>, vector<8x128xf32> -> vector<8x128xf32>
    %121 = arith.addf %114, %120 : vector<8x128xf32>
    %c2_127 = arith.constant 2 : index
    %c1_128 = arith.constant 1 : index
    %c0_129 = arith.constant 0 : index
    %c0_130 = arith.constant 0 : index
    %122 = vector.load %arg5[%c2_127, %c1_128, %c0_129, %c0_130] : memref<3x2x8x4xf32, #tpu.memory_space<vmem>>, vector<1x1x8x4xf32>
    %123 = vector.shape_cast %122 : vector<1x1x8x4xf32> to vector<8x4xf32>
    %124 = vector.extract_strided_slice %116 {offsets = [0, 1], sizes = [4, 128], strides = [1, 1]} : vector<4x129xf32> to vector<4x128xf32>
    %cst_131 = arith.constant dense<0.000000e+00> : vector<8x128xf32>
    %125 = tpu.matmul %123, %124, %cst_131 {dimension_numbers = #tpu.dot_dimension_numbers<[1], [0], [0], [1], [0, 0, 1, 1], [], []>} : vector<8x4xf32>, vector<4x128xf32>, vector<8x128xf32> -> vector<8x128xf32>
    %126 = arith.addf %121, %125 : vector<8x128xf32>
    %c0_132 = arith.constant 0 : index
    %c0_133 = arith.constant 0 : index
    %127 = vector.load %arg6[%c0_132, %c0_133] : memref<8x1xf32, #tpu.memory_space<vmem>>, vector<8x1xf32>
    %128 = vector.broadcast %127 : vector<8x1xf32> to vector<8x128xf32>
    %129 = arith.addf %126, %128 : vector<8x128xf32>
    %cst_134 = arith.constant dense<0.000000e+00> : vector<8xf32>
    %130 = vector.multi_reduction <add>, %129, %cst_134 [1] : vector<8x128xf32> to vector<8xf32>
    %131 = vector.shape_cast %130 : vector<8xf32> to vector<8x1xf32>
    %132 = arith.addf %87, %131 : vector<8x1xf32>
    %133 = arith.mulf %129, %129 : vector<8x128xf32>
    %cst_135 = arith.constant dense<0.000000e+00> : vector<8xf32>
    %134 = vector.multi_reduction <add>, %133, %cst_135 [1] : vector<8x128xf32> to vector<8xf32>
    %135 = vector.shape_cast %134 : vector<8xf32> to vector<8x1xf32>
    %136 = arith.addf %91, %135 : vector<8x1xf32>
    %c0_136 = arith.constant 0 : index
    %c0_137 = arith.constant 0 : index
    %c3 = arith.constant 3 : index
    %c0_138 = arith.constant 0 : index
    %137 = vector.load %arg2[%c0_136, %c0_137, %c3, %c0_138] : memref<1x4x8x129xf32, #tpu.memory_space<vmem>>, vector<1x4x1x129xf32>
    %138 = vector.shape_cast %137 : vector<1x4x1x129xf32> to vector<4x129xf32>
    %c0_139 = arith.constant 0 : index
    %c0_140 = arith.constant 0 : index
    %c0_141 = arith.constant 0 : index
    %c0_142 = arith.constant 0 : index
    %139 = vector.load %arg5[%c0_139, %c0_140, %c0_141, %c0_142] : memref<3x2x8x4xf32, #tpu.memory_space<vmem>>, vector<1x1x8x4xf32>
    %140 = vector.shape_cast %139 : vector<1x1x8x4xf32> to vector<8x4xf32>
    %141 = vector.extract_strided_slice %138 {offsets = [0, 0], sizes = [4, 128], strides = [1, 1]} : vector<4x129xf32> to vector<4x128xf32>
    %cst_143 = arith.constant dense<0.000000e+00> : vector<8x128xf32>
    %142 = tpu.matmul %140, %141, %cst_143 {dimension_numbers = #tpu.dot_dimension_numbers<[1], [0], [0], [1], [0, 0, 1, 1], [], []>} : vector<8x4xf32>, vector<4x128xf32>, vector<8x128xf32> -> vector<8x128xf32>
    %c0_144 = arith.constant 0 : index
    %c1_145 = arith.constant 1 : index
    %c0_146 = arith.constant 0 : index
    %c0_147 = arith.constant 0 : index
    %143 = vector.load %arg5[%c0_144, %c1_145, %c0_146, %c0_147] : memref<3x2x8x4xf32, #tpu.memory_space<vmem>>, vector<1x1x8x4xf32>
    %144 = vector.shape_cast %143 : vector<1x1x8x4xf32> to vector<8x4xf32>
    %145 = vector.extract_strided_slice %138 {offsets = [0, 1], sizes = [4, 128], strides = [1, 1]} : vector<4x129xf32> to vector<4x128xf32>
    %cst_148 = arith.constant dense<0.000000e+00> : vector<8x128xf32>
    %146 = tpu.matmul %144, %145, %cst_148 {dimension_numbers = #tpu.dot_dimension_numbers<[1], [0], [0], [1], [0, 0, 1, 1], [], []>} : vector<8x4xf32>, vector<4x128xf32>, vector<8x128xf32> -> vector<8x128xf32>
    %147 = arith.addf %142, %146 : vector<8x128xf32>
    %c0_149 = arith.constant 0 : index
    %c0_150 = arith.constant 0 : index
    %c3_151 = arith.constant 3 : index
    %c0_152 = arith.constant 0 : index
    %148 = vector.load %arg3[%c0_149, %c0_150, %c3_151, %c0_152] : memref<1x4x8x129xf32, #tpu.memory_space<vmem>>, vector<1x4x1x129xf32>
    %149 = vector.shape_cast %148 : vector<1x4x1x129xf32> to vector<4x129xf32>
    %c1_153 = arith.constant 1 : index
    %c0_154 = arith.constant 0 : index
    %c0_155 = arith.constant 0 : index
    %c0_156 = arith.constant 0 : index
    %150 = vector.load %arg5[%c1_153, %c0_154, %c0_155, %c0_156] : memref<3x2x8x4xf32, #tpu.memory_space<vmem>>, vector<1x1x8x4xf32>
    %151 = vector.shape_cast %150 : vector<1x1x8x4xf32> to vector<8x4xf32>
    %152 = vector.extract_strided_slice %149 {offsets = [0, 0], sizes = [4, 128], strides = [1, 1]} : vector<4x129xf32> to vector<4x128xf32>
    %cst_157 = arith.constant dense<0.000000e+00> : vector<8x128xf32>
    %153 = tpu.matmul %151, %152, %cst_157 {dimension_numbers = #tpu.dot_dimension_numbers<[1], [0], [0], [1], [0, 0, 1, 1], [], []>} : vector<8x4xf32>, vector<4x128xf32>, vector<8x128xf32> -> vector<8x128xf32>
    %154 = arith.addf %147, %153 : vector<8x128xf32>
    %c1_158 = arith.constant 1 : index
    %c1_159 = arith.constant 1 : index
    %c0_160 = arith.constant 0 : index
    %c0_161 = arith.constant 0 : index
    %155 = vector.load %arg5[%c1_158, %c1_159, %c0_160, %c0_161] : memref<3x2x8x4xf32, #tpu.memory_space<vmem>>, vector<1x1x8x4xf32>
    %156 = vector.shape_cast %155 : vector<1x1x8x4xf32> to vector<8x4xf32>
    %157 = vector.extract_strided_slice %149 {offsets = [0, 1], sizes = [4, 128], strides = [1, 1]} : vector<4x129xf32> to vector<4x128xf32>
    %cst_162 = arith.constant dense<0.000000e+00> : vector<8x128xf32>
    %158 = tpu.matmul %156, %157, %cst_162 {dimension_numbers = #tpu.dot_dimension_numbers<[1], [0], [0], [1], [0, 0, 1, 1], [], []>} : vector<8x4xf32>, vector<4x128xf32>, vector<8x128xf32> -> vector<8x128xf32>
    %159 = arith.addf %154, %158 : vector<8x128xf32>
    %c0_163 = arith.constant 0 : index
    %c0_164 = arith.constant 0 : index
    %c3_165 = arith.constant 3 : index
    %c0_166 = arith.constant 0 : index
    %160 = vector.load %arg4[%c0_163, %c0_164, %c3_165, %c0_166] : memref<1x4x8x129xf32, #tpu.memory_space<vmem>>, vector<1x4x1x129xf32>
    %161 = vector.shape_cast %160 : vector<1x4x1x129xf32> to vector<4x129xf32>
    %c2_167 = arith.constant 2 : index
    %c0_168 = arith.constant 0 : index
    %c0_169 = arith.constant 0 : index
    %c0_170 = arith.constant 0 : index
    %162 = vector.load %arg5[%c2_167, %c0_168, %c0_169, %c0_170] : memref<3x2x8x4xf32, #tpu.memory_space<vmem>>, vector<1x1x8x4xf32>
    %163 = vector.shape_cast %162 : vector<1x1x8x4xf32> to vector<8x4xf32>
    %164 = vector.extract_strided_slice %161 {offsets = [0, 0], sizes = [4, 128], strides = [1, 1]} : vector<4x129xf32> to vector<4x128xf32>
    %cst_171 = arith.constant dense<0.000000e+00> : vector<8x128xf32>
    %165 = tpu.matmul %163, %164, %cst_171 {dimension_numbers = #tpu.dot_dimension_numbers<[1], [0], [0], [1], [0, 0, 1, 1], [], []>} : vector<8x4xf32>, vector<4x128xf32>, vector<8x128xf32> -> vector<8x128xf32>
    %166 = arith.addf %159, %165 : vector<8x128xf32>
    %c2_172 = arith.constant 2 : index
    %c1_173 = arith.constant 1 : index
    %c0_174 = arith.constant 0 : index
    %c0_175 = arith.constant 0 : index
    %167 = vector.load %arg5[%c2_172, %c1_173, %c0_174, %c0_175] : memref<3x2x8x4xf32, #tpu.memory_space<vmem>>, vector<1x1x8x4xf32>
    %168 = vector.shape_cast %167 : vector<1x1x8x4xf32> to vector<8x4xf32>
    %169 = vector.extract_strided_slice %161 {offsets = [0, 1], sizes = [4, 128], strides = [1, 1]} : vector<4x129xf32> to vector<4x128xf32>
    %cst_176 = arith.constant dense<0.000000e+00> : vector<8x128xf32>
    %170 = tpu.matmul %168, %169, %cst_176 {dimension_numbers = #tpu.dot_dimension_numbers<[1], [0], [0], [1], [0, 0, 1, 1], [], []>} : vector<8x4xf32>, vector<4x128xf32>, vector<8x128xf32> -> vector<8x128xf32>
    %171 = arith.addf %166, %170 : vector<8x128xf32>
    %c0_177 = arith.constant 0 : index
    %c0_178 = arith.constant 0 : index
    %172 = vector.load %arg6[%c0_177, %c0_178] : memref<8x1xf32, #tpu.memory_space<vmem>>, vector<8x1xf32>
    %173 = vector.broadcast %172 : vector<8x1xf32> to vector<8x128xf32>
    %174 = arith.addf %171, %173 : vector<8x128xf32>
    %cst_179 = arith.constant dense<0.000000e+00> : vector<8xf32>
    %175 = vector.multi_reduction <add>, %174, %cst_179 [1] : vector<8x128xf32> to vector<8xf32>
    %176 = vector.shape_cast %175 : vector<8xf32> to vector<8x1xf32>
    %177 = arith.addf %132, %176 : vector<8x1xf32>
    %178 = arith.mulf %174, %174 : vector<8x128xf32>
    %cst_180 = arith.constant dense<0.000000e+00> : vector<8xf32>
    %179 = vector.multi_reduction <add>, %178, %cst_180 [1] : vector<8x128xf32> to vector<8xf32>
    %180 = vector.shape_cast %179 : vector<8xf32> to vector<8x1xf32>
    %181 = arith.addf %136, %180 : vector<8x1xf32>
    %c0_181 = arith.constant 0 : index
    %c0_182 = arith.constant 0 : index
    %c4 = arith.constant 4 : index
    %c0_183 = arith.constant 0 : index
    %182 = vector.load %arg2[%c0_181, %c0_182, %c4, %c0_183] : memref<1x4x8x129xf32, #tpu.memory_space<vmem>>, vector<1x4x1x129xf32>
    %183 = vector.shape_cast %182 : vector<1x4x1x129xf32> to vector<4x129xf32>
    %c0_184 = arith.constant 0 : index
    %c0_185 = arith.constant 0 : index
    %c0_186 = arith.constant 0 : index
    %c0_187 = arith.constant 0 : index
    %184 = vector.load %arg5[%c0_184, %c0_185, %c0_186, %c0_187] : memref<3x2x8x4xf32, #tpu.memory_space<vmem>>, vector<1x1x8x4xf32>
    %185 = vector.shape_cast %184 : vector<1x1x8x4xf32> to vector<8x4xf32>
    %186 = vector.extract_strided_slice %183 {offsets = [0, 0], sizes = [4, 128], strides = [1, 1]} : vector<4x129xf32> to vector<4x128xf32>
    %cst_188 = arith.constant dense<0.000000e+00> : vector<8x128xf32>
    %187 = tpu.matmul %185, %186, %cst_188 {dimension_numbers = #tpu.dot_dimension_numbers<[1], [0], [0], [1], [0, 0, 1, 1], [], []>} : vector<8x4xf32>, vector<4x128xf32>, vector<8x128xf32> -> vector<8x128xf32>
    %c0_189 = arith.constant 0 : index
    %c1_190 = arith.constant 1 : index
    %c0_191 = arith.constant 0 : index
    %c0_192 = arith.constant 0 : index
    %188 = vector.load %arg5[%c0_189, %c1_190, %c0_191, %c0_192] : memref<3x2x8x4xf32, #tpu.memory_space<vmem>>, vector<1x1x8x4xf32>
    %189 = vector.shape_cast %188 : vector<1x1x8x4xf32> to vector<8x4xf32>
    %190 = vector.extract_strided_slice %183 {offsets = [0, 1], sizes = [4, 128], strides = [1, 1]} : vector<4x129xf32> to vector<4x128xf32>
    %cst_193 = arith.constant dense<0.000000e+00> : vector<8x128xf32>
    %191 = tpu.matmul %189, %190, %cst_193 {dimension_numbers = #tpu.dot_dimension_numbers<[1], [0], [0], [1], [0, 0, 1, 1], [], []>} : vector<8x4xf32>, vector<4x128xf32>, vector<8x128xf32> -> vector<8x128xf32>
    %192 = arith.addf %187, %191 : vector<8x128xf32>
    %c0_194 = arith.constant 0 : index
    %c0_195 = arith.constant 0 : index
    %c4_196 = arith.constant 4 : index
    %c0_197 = arith.constant 0 : index
    %193 = vector.load %arg3[%c0_194, %c0_195, %c4_196, %c0_197] : memref<1x4x8x129xf32, #tpu.memory_space<vmem>>, vector<1x4x1x129xf32>
    %194 = vector.shape_cast %193 : vector<1x4x1x129xf32> to vector<4x129xf32>
    %c1_198 = arith.constant 1 : index
    %c0_199 = arith.constant 0 : index
    %c0_200 = arith.constant 0 : index
    %c0_201 = arith.constant 0 : index
    %195 = vector.load %arg5[%c1_198, %c0_199, %c0_200, %c0_201] : memref<3x2x8x4xf32, #tpu.memory_space<vmem>>, vector<1x1x8x4xf32>
    %196 = vector.shape_cast %195 : vector<1x1x8x4xf32> to vector<8x4xf32>
    %197 = vector.extract_strided_slice %194 {offsets = [0, 0], sizes = [4, 128], strides = [1, 1]} : vector<4x129xf32> to vector<4x128xf32>
    %cst_202 = arith.constant dense<0.000000e+00> : vector<8x128xf32>
    %198 = tpu.matmul %196, %197, %cst_202 {dimension_numbers = #tpu.dot_dimension_numbers<[1], [0], [0], [1], [0, 0, 1, 1], [], []>} : vector<8x4xf32>, vector<4x128xf32>, vector<8x128xf32> -> vector<8x128xf32>
    %199 = arith.addf %192, %198 : vector<8x128xf32>
    %c1_203 = arith.constant 1 : index
    %c1_204 = arith.constant 1 : index
    %c0_205 = arith.constant 0 : index
    %c0_206 = arith.constant 0 : index
    %200 = vector.load %arg5[%c1_203, %c1_204, %c0_205, %c0_206] : memref<3x2x8x4xf32, #tpu.memory_space<vmem>>, vector<1x1x8x4xf32>
    %201 = vector.shape_cast %200 : vector<1x1x8x4xf32> to vector<8x4xf32>
    %202 = vector.extract_strided_slice %194 {offsets = [0, 1], sizes = [4, 128], strides = [1, 1]} : vector<4x129xf32> to vector<4x128xf32>
    %cst_207 = arith.constant dense<0.000000e+00> : vector<8x128xf32>
    %203 = tpu.matmul %201, %202, %cst_207 {dimension_numbers = #tpu.dot_dimension_numbers<[1], [0], [0], [1], [0, 0, 1, 1], [], []>} : vector<8x4xf32>, vector<4x128xf32>, vector<8x128xf32> -> vector<8x128xf32>
    %204 = arith.addf %199, %203 : vector<8x128xf32>
    %c0_208 = arith.constant 0 : index
    %c0_209 = arith.constant 0 : index
    %c4_210 = arith.constant 4 : index
    %c0_211 = arith.constant 0 : index
    %205 = vector.load %arg4[%c0_208, %c0_209, %c4_210, %c0_211] : memref<1x4x8x129xf32, #tpu.memory_space<vmem>>, vector<1x4x1x129xf32>
    %206 = vector.shape_cast %205 : vector<1x4x1x129xf32> to vector<4x129xf32>
    %c2_212 = arith.constant 2 : index
    %c0_213 = arith.constant 0 : index
    %c0_214 = arith.constant 0 : index
    %c0_215 = arith.constant 0 : index
    %207 = vector.load %arg5[%c2_212, %c0_213, %c0_214, %c0_215] : memref<3x2x8x4xf32, #tpu.memory_space<vmem>>, vector<1x1x8x4xf32>
    %208 = vector.shape_cast %207 : vector<1x1x8x4xf32> to vector<8x4xf32>
    %209 = vector.extract_strided_slice %206 {offsets = [0, 0], sizes = [4, 128], strides = [1, 1]} : vector<4x129xf32> to vector<4x128xf32>
    %cst_216 = arith.constant dense<0.000000e+00> : vector<8x128xf32>
    %210 = tpu.matmul %208, %209, %cst_216 {dimension_numbers = #tpu.dot_dimension_numbers<[1], [0], [0], [1], [0, 0, 1, 1], [], []>} : vector<8x4xf32>, vector<4x128xf32>, vector<8x128xf32> -> vector<8x128xf32>
    %211 = arith.addf %204, %210 : vector<8x128xf32>
    %c2_217 = arith.constant 2 : index
    %c1_218 = arith.constant 1 : index
    %c0_219 = arith.constant 0 : index
    %c0_220 = arith.constant 0 : index
    %212 = vector.load %arg5[%c2_217, %c1_218, %c0_219, %c0_220] : memref<3x2x8x4xf32, #tpu.memory_space<vmem>>, vector<1x1x8x4xf32>
    %213 = vector.shape_cast %212 : vector<1x1x8x4xf32> to vector<8x4xf32>
    %214 = vector.extract_strided_slice %206 {offsets = [0, 1], sizes = [4, 128], strides = [1, 1]} : vector<4x129xf32> to vector<4x128xf32>
    %cst_221 = arith.constant dense<0.000000e+00> : vector<8x128xf32>
    %215 = tpu.matmul %213, %214, %cst_221 {dimension_numbers = #tpu.dot_dimension_numbers<[1], [0], [0], [1], [0, 0, 1, 1], [], []>} : vector<8x4xf32>, vector<4x128xf32>, vector<8x128xf32> -> vector<8x128xf32>
    %216 = arith.addf %211, %215 : vector<8x128xf32>
    %c0_222 = arith.constant 0 : index
    %c0_223 = arith.constant 0 : index
    %217 = vector.load %arg6[%c0_222, %c0_223] : memref<8x1xf32, #tpu.memory_space<vmem>>, vector<8x1xf32>
    %218 = vector.broadcast %217 : vector<8x1xf32> to vector<8x128xf32>
    %219 = arith.addf %216, %218 : vector<8x128xf32>
    %cst_224 = arith.constant dense<0.000000e+00> : vector<8xf32>
    %220 = vector.multi_reduction <add>, %219, %cst_224 [1] : vector<8x128xf32> to vector<8xf32>
    %221 = vector.shape_cast %220 : vector<8xf32> to vector<8x1xf32>
    %222 = arith.addf %177, %221 : vector<8x1xf32>
    %223 = arith.mulf %219, %219 : vector<8x128xf32>
    %cst_225 = arith.constant dense<0.000000e+00> : vector<8xf32>
    %224 = vector.multi_reduction <add>, %223, %cst_225 [1] : vector<8x128xf32> to vector<8xf32>
    %225 = vector.shape_cast %224 : vector<8xf32> to vector<8x1xf32>
    %226 = arith.addf %181, %225 : vector<8x1xf32>
    %c0_226 = arith.constant 0 : index
    %c0_227 = arith.constant 0 : index
    %c5 = arith.constant 5 : index
    %c0_228 = arith.constant 0 : index
    %227 = vector.load %arg2[%c0_226, %c0_227, %c5, %c0_228] : memref<1x4x8x129xf32, #tpu.memory_space<vmem>>, vector<1x4x1x129xf32>
    %228 = vector.shape_cast %227 : vector<1x4x1x129xf32> to vector<4x129xf32>
    %c0_229 = arith.constant 0 : index
    %c0_230 = arith.constant 0 : index
    %c0_231 = arith.constant 0 : index
    %c0_232 = arith.constant 0 : index
    %229 = vector.load %arg5[%c0_229, %c0_230, %c0_231, %c0_232] : memref<3x2x8x4xf32, #tpu.memory_space<vmem>>, vector<1x1x8x4xf32>
    %230 = vector.shape_cast %229 : vector<1x1x8x4xf32> to vector<8x4xf32>
    %231 = vector.extract_strided_slice %228 {offsets = [0, 0], sizes = [4, 128], strides = [1, 1]} : vector<4x129xf32> to vector<4x128xf32>
    %cst_233 = arith.constant dense<0.000000e+00> : vector<8x128xf32>
    %232 = tpu.matmul %230, %231, %cst_233 {dimension_numbers = #tpu.dot_dimension_numbers<[1], [0], [0], [1], [0, 0, 1, 1], [], []>} : vector<8x4xf32>, vector<4x128xf32>, vector<8x128xf32> -> vector<8x128xf32>
    %c0_234 = arith.constant 0 : index
    %c1_235 = arith.constant 1 : index
    %c0_236 = arith.constant 0 : index
    %c0_237 = arith.constant 0 : index
    %233 = vector.load %arg5[%c0_234, %c1_235, %c0_236, %c0_237] : memref<3x2x8x4xf32, #tpu.memory_space<vmem>>, vector<1x1x8x4xf32>
    %234 = vector.shape_cast %233 : vector<1x1x8x4xf32> to vector<8x4xf32>
    %235 = vector.extract_strided_slice %228 {offsets = [0, 1], sizes = [4, 128], strides = [1, 1]} : vector<4x129xf32> to vector<4x128xf32>
    %cst_238 = arith.constant dense<0.000000e+00> : vector<8x128xf32>
    %236 = tpu.matmul %234, %235, %cst_238 {dimension_numbers = #tpu.dot_dimension_numbers<[1], [0], [0], [1], [0, 0, 1, 1], [], []>} : vector<8x4xf32>, vector<4x128xf32>, vector<8x128xf32> -> vector<8x128xf32>
    %237 = arith.addf %232, %236 : vector<8x128xf32>
    %c0_239 = arith.constant 0 : index
    %c0_240 = arith.constant 0 : index
    %c5_241 = arith.constant 5 : index
    %c0_242 = arith.constant 0 : index
    %238 = vector.load %arg3[%c0_239, %c0_240, %c5_241, %c0_242] : memref<1x4x8x129xf32, #tpu.memory_space<vmem>>, vector<1x4x1x129xf32>
    %239 = vector.shape_cast %238 : vector<1x4x1x129xf32> to vector<4x129xf32>
    %c1_243 = arith.constant 1 : index
    %c0_244 = arith.constant 0 : index
    %c0_245 = arith.constant 0 : index
    %c0_246 = arith.constant 0 : index
    %240 = vector.load %arg5[%c1_243, %c0_244, %c0_245, %c0_246] : memref<3x2x8x4xf32, #tpu.memory_space<vmem>>, vector<1x1x8x4xf32>
    %241 = vector.shape_cast %240 : vector<1x1x8x4xf32> to vector<8x4xf32>
    %242 = vector.extract_strided_slice %239 {offsets = [0, 0], sizes = [4, 128], strides = [1, 1]} : vector<4x129xf32> to vector<4x128xf32>
    %cst_247 = arith.constant dense<0.000000e+00> : vector<8x128xf32>
    %243 = tpu.matmul %241, %242, %cst_247 {dimension_numbers = #tpu.dot_dimension_numbers<[1], [0], [0], [1], [0, 0, 1, 1], [], []>} : vector<8x4xf32>, vector<4x128xf32>, vector<8x128xf32> -> vector<8x128xf32>
    %244 = arith.addf %237, %243 : vector<8x128xf32>
    %c1_248 = arith.constant 1 : index
    %c1_249 = arith.constant 1 : index
    %c0_250 = arith.constant 0 : index
    %c0_251 = arith.constant 0 : index
    %245 = vector.load %arg5[%c1_248, %c1_249, %c0_250, %c0_251] : memref<3x2x8x4xf32, #tpu.memory_space<vmem>>, vector<1x1x8x4xf32>
    %246 = vector.shape_cast %245 : vector<1x1x8x4xf32> to vector<8x4xf32>
    %247 = vector.extract_strided_slice %239 {offsets = [0, 1], sizes = [4, 128], strides = [1, 1]} : vector<4x129xf32> to vector<4x128xf32>
    %cst_252 = arith.constant dense<0.000000e+00> : vector<8x128xf32>
    %248 = tpu.matmul %246, %247, %cst_252 {dimension_numbers = #tpu.dot_dimension_numbers<[1], [0], [0], [1], [0, 0, 1, 1], [], []>} : vector<8x4xf32>, vector<4x128xf32>, vector<8x128xf32> -> vector<8x128xf32>
    %249 = arith.addf %244, %248 : vector<8x128xf32>
    %c0_253 = arith.constant 0 : index
    %c0_254 = arith.constant 0 : index
    %c5_255 = arith.constant 5 : index
    %c0_256 = arith.constant 0 : index
    %250 = vector.load %arg4[%c0_253, %c0_254, %c5_255, %c0_256] : memref<1x4x8x129xf32, #tpu.memory_space<vmem>>, vector<1x4x1x129xf32>
    %251 = vector.shape_cast %250 : vector<1x4x1x129xf32> to vector<4x129xf32>
    %c2_257 = arith.constant 2 : index
    %c0_258 = arith.constant 0 : index
    %c0_259 = arith.constant 0 : index
    %c0_260 = arith.constant 0 : index
    %252 = vector.load %arg5[%c2_257, %c0_258, %c0_259, %c0_260] : memref<3x2x8x4xf32, #tpu.memory_space<vmem>>, vector<1x1x8x4xf32>
    %253 = vector.shape_cast %252 : vector<1x1x8x4xf32> to vector<8x4xf32>
    %254 = vector.extract_strided_slice %251 {offsets = [0, 0], sizes = [4, 128], strides = [1, 1]} : vector<4x129xf32> to vector<4x128xf32>
    %cst_261 = arith.constant dense<0.000000e+00> : vector<8x128xf32>
    %255 = tpu.matmul %253, %254, %cst_261 {dimension_numbers = #tpu.dot_dimension_numbers<[1], [0], [0], [1], [0, 0, 1, 1], [], []>} : vector<8x4xf32>, vector<4x128xf32>, vector<8x128xf32> -> vector<8x128xf32>
    %256 = arith.addf %249, %255 : vector<8x128xf32>
    %c2_262 = arith.constant 2 : index
    %c1_263 = arith.constant 1 : index
    %c0_264 = arith.constant 0 : index
    %c0_265 = arith.constant 0 : index
    %257 = vector.load %arg5[%c2_262, %c1_263, %c0_264, %c0_265] : memref<3x2x8x4xf32, #tpu.memory_space<vmem>>, vector<1x1x8x4xf32>
    %258 = vector.shape_cast %257 : vector<1x1x8x4xf32> to vector<8x4xf32>
    %259 = vector.extract_strided_slice %251 {offsets = [0, 1], sizes = [4, 128], strides = [1, 1]} : vector<4x129xf32> to vector<4x128xf32>
    %cst_266 = arith.constant dense<0.000000e+00> : vector<8x128xf32>
    %260 = tpu.matmul %258, %259, %cst_266 {dimension_numbers = #tpu.dot_dimension_numbers<[1], [0], [0], [1], [0, 0, 1, 1], [], []>} : vector<8x4xf32>, vector<4x128xf32>, vector<8x128xf32> -> vector<8x128xf32>
    %261 = arith.addf %256, %260 : vector<8x128xf32>
    %c0_267 = arith.constant 0 : index
    %c0_268 = arith.constant 0 : index
    %262 = vector.load %arg6[%c0_267, %c0_268] : memref<8x1xf32, #tpu.memory_space<vmem>>, vector<8x1xf32>
    %263 = vector.broadcast %262 : vector<8x1xf32> to vector<8x128xf32>
    %264 = arith.addf %261, %263 : vector<8x128xf32>
    %cst_269 = arith.constant dense<0.000000e+00> : vector<8xf32>
    %265 = vector.multi_reduction <add>, %264, %cst_269 [1] : vector<8x128xf32> to vector<8xf32>
    %266 = vector.shape_cast %265 : vector<8xf32> to vector<8x1xf32>
    %267 = arith.addf %222, %266 : vector<8x1xf32>
    %268 = arith.mulf %264, %264 : vector<8x128xf32>
    %cst_270 = arith.constant dense<0.000000e+00> : vector<8xf32>
    %269 = vector.multi_reduction <add>, %268, %cst_270 [1] : vector<8x128xf32> to vector<8xf32>
    %270 = vector.shape_cast %269 : vector<8xf32> to vector<8x1xf32>
    %271 = arith.addf %226, %270 : vector<8x1xf32>
    %c0_271 = arith.constant 0 : index
    %c0_272 = arith.constant 0 : index
    %c6 = arith.constant 6 : index
    %c0_273 = arith.constant 0 : index
    %272 = vector.load %arg2[%c0_271, %c0_272, %c6, %c0_273] : memref<1x4x8x129xf32, #tpu.memory_space<vmem>>, vector<1x4x1x129xf32>
    %273 = vector.shape_cast %272 : vector<1x4x1x129xf32> to vector<4x129xf32>
    %c0_274 = arith.constant 0 : index
    %c0_275 = arith.constant 0 : index
    %c0_276 = arith.constant 0 : index
    %c0_277 = arith.constant 0 : index
    %274 = vector.load %arg5[%c0_274, %c0_275, %c0_276, %c0_277] : memref<3x2x8x4xf32, #tpu.memory_space<vmem>>, vector<1x1x8x4xf32>
    %275 = vector.shape_cast %274 : vector<1x1x8x4xf32> to vector<8x4xf32>
    %276 = vector.extract_strided_slice %273 {offsets = [0, 0], sizes = [4, 128], strides = [1, 1]} : vector<4x129xf32> to vector<4x128xf32>
    %cst_278 = arith.constant dense<0.000000e+00> : vector<8x128xf32>
    %277 = tpu.matmul %275, %276, %cst_278 {dimension_numbers = #tpu.dot_dimension_numbers<[1], [0], [0], [1], [0, 0, 1, 1], [], []>} : vector<8x4xf32>, vector<4x128xf32>, vector<8x128xf32> -> vector<8x128xf32>
    %c0_279 = arith.constant 0 : index
    %c1_280 = arith.constant 1 : index
    %c0_281 = arith.constant 0 : index
    %c0_282 = arith.constant 0 : index
    %278 = vector.load %arg5[%c0_279, %c1_280, %c0_281, %c0_282] : memref<3x2x8x4xf32, #tpu.memory_space<vmem>>, vector<1x1x8x4xf32>
    %279 = vector.shape_cast %278 : vector<1x1x8x4xf32> to vector<8x4xf32>
    %280 = vector.extract_strided_slice %273 {offsets = [0, 1], sizes = [4, 128], strides = [1, 1]} : vector<4x129xf32> to vector<4x128xf32>
    %cst_283 = arith.constant dense<0.000000e+00> : vector<8x128xf32>
    %281 = tpu.matmul %279, %280, %cst_283 {dimension_numbers = #tpu.dot_dimension_numbers<[1], [0], [0], [1], [0, 0, 1, 1], [], []>} : vector<8x4xf32>, vector<4x128xf32>, vector<8x128xf32> -> vector<8x128xf32>
    %282 = arith.addf %277, %281 : vector<8x128xf32>
    %c0_284 = arith.constant 0 : index
    %c0_285 = arith.constant 0 : index
    %c6_286 = arith.constant 6 : index
    %c0_287 = arith.constant 0 : index
    %283 = vector.load %arg3[%c0_284, %c0_285, %c6_286, %c0_287] : memref<1x4x8x129xf32, #tpu.memory_space<vmem>>, vector<1x4x1x129xf32>
    %284 = vector.shape_cast %283 : vector<1x4x1x129xf32> to vector<4x129xf32>
    %c1_288 = arith.constant 1 : index
    %c0_289 = arith.constant 0 : index
    %c0_290 = arith.constant 0 : index
    %c0_291 = arith.constant 0 : index
    %285 = vector.load %arg5[%c1_288, %c0_289, %c0_290, %c0_291] : memref<3x2x8x4xf32, #tpu.memory_space<vmem>>, vector<1x1x8x4xf32>
    %286 = vector.shape_cast %285 : vector<1x1x8x4xf32> to vector<8x4xf32>
    %287 = vector.extract_strided_slice %284 {offsets = [0, 0], sizes = [4, 128], strides = [1, 1]} : vector<4x129xf32> to vector<4x128xf32>
    %cst_292 = arith.constant dense<0.000000e+00> : vector<8x128xf32>
    %288 = tpu.matmul %286, %287, %cst_292 {dimension_numbers = #tpu.dot_dimension_numbers<[1], [0], [0], [1], [0, 0, 1, 1], [], []>} : vector<8x4xf32>, vector<4x128xf32>, vector<8x128xf32> -> vector<8x128xf32>
    %289 = arith.addf %282, %288 : vector<8x128xf32>
    %c1_293 = arith.constant 1 : index
    %c1_294 = arith.constant 1 : index
    %c0_295 = arith.constant 0 : index
    %c0_296 = arith.constant 0 : index
    %290 = vector.load %arg5[%c1_293, %c1_294, %c0_295, %c0_296] : memref<3x2x8x4xf32, #tpu.memory_space<vmem>>, vector<1x1x8x4xf32>
    %291 = vector.shape_cast %290 : vector<1x1x8x4xf32> to vector<8x4xf32>
    %292 = vector.extract_strided_slice %284 {offsets = [0, 1], sizes = [4, 128], strides = [1, 1]} : vector<4x129xf32> to vector<4x128xf32>
    %cst_297 = arith.constant dense<0.000000e+00> : vector<8x128xf32>
    %293 = tpu.matmul %291, %292, %cst_297 {dimension_numbers = #tpu.dot_dimension_numbers<[1], [0], [0], [1], [0, 0, 1, 1], [], []>} : vector<8x4xf32>, vector<4x128xf32>, vector<8x128xf32> -> vector<8x128xf32>
    %294 = arith.addf %289, %293 : vector<8x128xf32>
    %c0_298 = arith.constant 0 : index
    %c0_299 = arith.constant 0 : index
    %c6_300 = arith.constant 6 : index
    %c0_301 = arith.constant 0 : index
    %295 = vector.load %arg4[%c0_298, %c0_299, %c6_300, %c0_301] : memref<1x4x8x129xf32, #tpu.memory_space<vmem>>, vector<1x4x1x129xf32>
    %296 = vector.shape_cast %295 : vector<1x4x1x129xf32> to vector<4x129xf32>
    %c2_302 = arith.constant 2 : index
    %c0_303 = arith.constant 0 : index
    %c0_304 = arith.constant 0 : index
    %c0_305 = arith.constant 0 : index
    %297 = vector.load %arg5[%c2_302, %c0_303, %c0_304, %c0_305] : memref<3x2x8x4xf32, #tpu.memory_space<vmem>>, vector<1x1x8x4xf32>
    %298 = vector.shape_cast %297 : vector<1x1x8x4xf32> to vector<8x4xf32>
    %299 = vector.extract_strided_slice %296 {offsets = [0, 0], sizes = [4, 128], strides = [1, 1]} : vector<4x129xf32> to vector<4x128xf32>
    %cst_306 = arith.constant dense<0.000000e+00> : vector<8x128xf32>
    %300 = tpu.matmul %298, %299, %cst_306 {dimension_numbers = #tpu.dot_dimension_numbers<[1], [0], [0], [1], [0, 0, 1, 1], [], []>} : vector<8x4xf32>, vector<4x128xf32>, vector<8x128xf32> -> vector<8x128xf32>
    %301 = arith.addf %294, %300 : vector<8x128xf32>
    %c2_307 = arith.constant 2 : index
    %c1_308 = arith.constant 1 : index
    %c0_309 = arith.constant 0 : index
    %c0_310 = arith.constant 0 : index
    %302 = vector.load %arg5[%c2_307, %c1_308, %c0_309, %c0_310] : memref<3x2x8x4xf32, #tpu.memory_space<vmem>>, vector<1x1x8x4xf32>
    %303 = vector.shape_cast %302 : vector<1x1x8x4xf32> to vector<8x4xf32>
    %304 = vector.extract_strided_slice %296 {offsets = [0, 1], sizes = [4, 128], strides = [1, 1]} : vector<4x129xf32> to vector<4x128xf32>
    %cst_311 = arith.constant dense<0.000000e+00> : vector<8x128xf32>
    %305 = tpu.matmul %303, %304, %cst_311 {dimension_numbers = #tpu.dot_dimension_numbers<[1], [0], [0], [1], [0, 0, 1, 1], [], []>} : vector<8x4xf32>, vector<4x128xf32>, vector<8x128xf32> -> vector<8x128xf32>
    %306 = arith.addf %301, %305 : vector<8x128xf32>
    %c0_312 = arith.constant 0 : index
    %c0_313 = arith.constant 0 : index
    %307 = vector.load %arg6[%c0_312, %c0_313] : memref<8x1xf32, #tpu.memory_space<vmem>>, vector<8x1xf32>
    %308 = vector.broadcast %307 : vector<8x1xf32> to vector<8x128xf32>
    %309 = arith.addf %306, %308 : vector<8x128xf32>
    %cst_314 = arith.constant dense<0.000000e+00> : vector<8xf32>
    %310 = vector.multi_reduction <add>, %309, %cst_314 [1] : vector<8x128xf32> to vector<8xf32>
    %311 = vector.shape_cast %310 : vector<8xf32> to vector<8x1xf32>
    %312 = arith.addf %267, %311 : vector<8x1xf32>
    %313 = arith.mulf %309, %309 : vector<8x128xf32>
    %cst_315 = arith.constant dense<0.000000e+00> : vector<8xf32>
    %314 = vector.multi_reduction <add>, %313, %cst_315 [1] : vector<8x128xf32> to vector<8xf32>
    %315 = vector.shape_cast %314 : vector<8xf32> to vector<8x1xf32>
    %316 = arith.addf %271, %315 : vector<8x1xf32>
    %c0_316 = arith.constant 0 : index
    %c0_317 = arith.constant 0 : index
    %c7 = arith.constant 7 : index
    %c0_318 = arith.constant 0 : index
    %317 = vector.load %arg2[%c0_316, %c0_317, %c7, %c0_318] : memref<1x4x8x129xf32, #tpu.memory_space<vmem>>, vector<1x4x1x129xf32>
    %318 = vector.shape_cast %317 : vector<1x4x1x129xf32> to vector<4x129xf32>
    %c0_319 = arith.constant 0 : index
    %c0_320 = arith.constant 0 : index
    %c0_321 = arith.constant 0 : index
    %c0_322 = arith.constant 0 : index
    %319 = vector.load %arg5[%c0_319, %c0_320, %c0_321, %c0_322] : memref<3x2x8x4xf32, #tpu.memory_space<vmem>>, vector<1x1x8x4xf32>
    %320 = vector.shape_cast %319 : vector<1x1x8x4xf32> to vector<8x4xf32>
    %321 = vector.extract_strided_slice %318 {offsets = [0, 0], sizes = [4, 128], strides = [1, 1]} : vector<4x129xf32> to vector<4x128xf32>
    %cst_323 = arith.constant dense<0.000000e+00> : vector<8x128xf32>
    %322 = tpu.matmul %320, %321, %cst_323 {dimension_numbers = #tpu.dot_dimension_numbers<[1], [0], [0], [1], [0, 0, 1, 1], [], []>} : vector<8x4xf32>, vector<4x128xf32>, vector<8x128xf32> -> vector<8x128xf32>
    %c0_324 = arith.constant 0 : index
    %c1_325 = arith.constant 1 : index
    %c0_326 = arith.constant 0 : index
    %c0_327 = arith.constant 0 : index
    %323 = vector.load %arg5[%c0_324, %c1_325, %c0_326, %c0_327] : memref<3x2x8x4xf32, #tpu.memory_space<vmem>>, vector<1x1x8x4xf32>
    %324 = vector.shape_cast %323 : vector<1x1x8x4xf32> to vector<8x4xf32>
    %325 = vector.extract_strided_slice %318 {offsets = [0, 1], sizes = [4, 128], strides = [1, 1]} : vector<4x129xf32> to vector<4x128xf32>
    %cst_328 = arith.constant dense<0.000000e+00> : vector<8x128xf32>
    %326 = tpu.matmul %324, %325, %cst_328 {dimension_numbers = #tpu.dot_dimension_numbers<[1], [0], [0], [1], [0, 0, 1, 1], [], []>} : vector<8x4xf32>, vector<4x128xf32>, vector<8x128xf32> -> vector<8x128xf32>
    %327 = arith.addf %322, %326 : vector<8x128xf32>
    %c0_329 = arith.constant 0 : index
    %c0_330 = arith.constant 0 : index
    %c7_331 = arith.constant 7 : index
    %c0_332 = arith.constant 0 : index
    %328 = vector.load %arg3[%c0_329, %c0_330, %c7_331, %c0_332] : memref<1x4x8x129xf32, #tpu.memory_space<vmem>>, vector<1x4x1x129xf32>
    %329 = vector.shape_cast %328 : vector<1x4x1x129xf32> to vector<4x129xf32>
    %c1_333 = arith.constant 1 : index
    %c0_334 = arith.constant 0 : index
    %c0_335 = arith.constant 0 : index
    %c0_336 = arith.constant 0 : index
    %330 = vector.load %arg5[%c1_333, %c0_334, %c0_335, %c0_336] : memref<3x2x8x4xf32, #tpu.memory_space<vmem>>, vector<1x1x8x4xf32>
    %331 = vector.shape_cast %330 : vector<1x1x8x4xf32> to vector<8x4xf32>
    %332 = vector.extract_strided_slice %329 {offsets = [0, 0], sizes = [4, 128], strides = [1, 1]} : vector<4x129xf32> to vector<4x128xf32>
    %cst_337 = arith.constant dense<0.000000e+00> : vector<8x128xf32>
    %333 = tpu.matmul %331, %332, %cst_337 {dimension_numbers = #tpu.dot_dimension_numbers<[1], [0], [0], [1], [0, 0, 1, 1], [], []>} : vector<8x4xf32>, vector<4x128xf32>, vector<8x128xf32> -> vector<8x128xf32>
    %334 = arith.addf %327, %333 : vector<8x128xf32>
    %c1_338 = arith.constant 1 : index
    %c1_339 = arith.constant 1 : index
    %c0_340 = arith.constant 0 : index
    %c0_341 = arith.constant 0 : index
    %335 = vector.load %arg5[%c1_338, %c1_339, %c0_340, %c0_341] : memref<3x2x8x4xf32, #tpu.memory_space<vmem>>, vector<1x1x8x4xf32>
    %336 = vector.shape_cast %335 : vector<1x1x8x4xf32> to vector<8x4xf32>
    %337 = vector.extract_strided_slice %329 {offsets = [0, 1], sizes = [4, 128], strides = [1, 1]} : vector<4x129xf32> to vector<4x128xf32>
    %cst_342 = arith.constant dense<0.000000e+00> : vector<8x128xf32>
    %338 = tpu.matmul %336, %337, %cst_342 {dimension_numbers = #tpu.dot_dimension_numbers<[1], [0], [0], [1], [0, 0, 1, 1], [], []>} : vector<8x4xf32>, vector<4x128xf32>, vector<8x128xf32> -> vector<8x128xf32>
    %339 = arith.addf %334, %338 : vector<8x128xf32>
    %c0_343 = arith.constant 0 : index
    %c0_344 = arith.constant 0 : index
    %c7_345 = arith.constant 7 : index
    %c0_346 = arith.constant 0 : index
    %340 = vector.load %arg4[%c0_343, %c0_344, %c7_345, %c0_346] : memref<1x4x8x129xf32, #tpu.memory_space<vmem>>, vector<1x4x1x129xf32>
    %341 = vector.shape_cast %340 : vector<1x4x1x129xf32> to vector<4x129xf32>
    %c2_347 = arith.constant 2 : index
    %c0_348 = arith.constant 0 : index
    %c0_349 = arith.constant 0 : index
    %c0_350 = arith.constant 0 : index
    %342 = vector.load %arg5[%c2_347, %c0_348, %c0_349, %c0_350] : memref<3x2x8x4xf32, #tpu.memory_space<vmem>>, vector<1x1x8x4xf32>
    %343 = vector.shape_cast %342 : vector<1x1x8x4xf32> to vector<8x4xf32>
    %344 = vector.extract_strided_slice %341 {offsets = [0, 0], sizes = [4, 128], strides = [1, 1]} : vector<4x129xf32> to vector<4x128xf32>
    %cst_351 = arith.constant dense<0.000000e+00> : vector<8x128xf32>
    %345 = tpu.matmul %343, %344, %cst_351 {dimension_numbers = #tpu.dot_dimension_numbers<[1], [0], [0], [1], [0, 0, 1, 1], [], []>} : vector<8x4xf32>, vector<4x128xf32>, vector<8x128xf32> -> vector<8x128xf32>
    %346 = arith.addf %339, %345 : vector<8x128xf32>
    %c2_352 = arith.constant 2 : index
    %c1_353 = arith.constant 1 : index
    %c0_354 = arith.constant 0 : index
    %c0_355 = arith.constant 0 : index
    %347 = vector.load %arg5[%c2_352, %c1_353, %c0_354, %c0_355] : memref<3x2x8x4xf32, #tpu.memory_space<vmem>>, vector<1x1x8x4xf32>
    %348 = vector.shape_cast %347 : vector<1x1x8x4xf32> to vector<8x4xf32>
    %349 = vector.extract_strided_slice %341 {offsets = [0, 1], sizes = [4, 128], strides = [1, 1]} : vector<4x129xf32> to vector<4x128xf32>
    %cst_356 = arith.constant dense<0.000000e+00> : vector<8x128xf32>
    %350 = tpu.matmul %348, %349, %cst_356 {dimension_numbers = #tpu.dot_dimension_numbers<[1], [0], [0], [1], [0, 0, 1, 1], [], []>} : vector<8x4xf32>, vector<4x128xf32>, vector<8x128xf32> -> vector<8x128xf32>
    %351 = arith.addf %346, %350 : vector<8x128xf32>
    %c0_357 = arith.constant 0 : index
    %c0_358 = arith.constant 0 : index
    %352 = vector.load %arg6[%c0_357, %c0_358] : memref<8x1xf32, #tpu.memory_space<vmem>>, vector<8x1xf32>
    %353 = vector.broadcast %352 : vector<8x1xf32> to vector<8x128xf32>
    %354 = arith.addf %351, %353 : vector<8x128xf32>
    %cst_359 = arith.constant dense<0.000000e+00> : vector<8xf32>
    %355 = vector.multi_reduction <add>, %354, %cst_359 [1] : vector<8x128xf32> to vector<8xf32>
    %356 = vector.shape_cast %355 : vector<8xf32> to vector<8x1xf32>
    %357 = arith.addf %312, %356 : vector<8x1xf32>
    %358 = arith.mulf %354, %354 : vector<8x128xf32>
    %cst_360 = arith.constant dense<0.000000e+00> : vector<8xf32>
    %359 = vector.multi_reduction <add>, %358, %cst_360 [1] : vector<8x128xf32> to vector<8xf32>
    %360 = vector.shape_cast %359 : vector<8xf32> to vector<8x1xf32>
    %361 = arith.addf %316, %360 : vector<8x1xf32>
    %362 = tpu.concatenate %357, %361 in 1 : vector<8x1xf32>, vector<8x1xf32> -> vector<8x2xf32>
    %c0_361 = arith.constant 0 : index
    %c0_362 = arith.constant 0 : index
    %c0_363 = arith.constant 0 : index
    %c0_364 = arith.constant 0 : index
    %363 = vector.load %arg7[%c0_361, %c0_362, %c0_363, %c0_364] : memref<1x1x8x2xf32, #tpu.memory_space<vmem>>, vector<1x1x8x2xf32>
    %364 = vector.shape_cast %363 : vector<1x1x8x2xf32> to vector<8x2xf32>
    %365 = vector.shape_cast %362 : vector<8x2xf32> to vector<1x1x8x2xf32>
    tpu.vector_store %arg7[%c0_361, %c0_362, %c0_363, %c0_364], %365 {strides = array<i32>} : memref<1x1x8x2xf32, #tpu.memory_space<vmem>>, vector<1x1x8x2xf32>,
    return
  }
  func.func @transform_0(%arg0: i32, %arg1: i32) -> (i32, i32, i32, i32) {
    %c0_i32 = arith.constant 0 : i32
    %c0_i32_0 = arith.constant 0 : i32
    %c0_i32_1 = arith.constant 0 : i32
    return %arg0, %c0_i32, %arg1, %c0_i32_0 : i32, i32, i32, i32
  }
  func.func @transform_1(%arg0: i32, %arg1: i32) -> (i32, i32, i32, i32) {
    %c0_i32 = arith.constant 0 : i32
    %c0_i32_0 = arith.constant 0 : i32
    %c0_i32_1 = arith.constant 0 : i32
    return %arg0, %c0_i32, %arg1, %c0_i32_0 : i32, i32, i32, i32
  }
  func.func @transform_2(%arg0: i32, %arg1: i32) -> (i32, i32, i32, i32) {
    %c0_i32 = arith.constant 0 : i32
    %c0_i32_0 = arith.constant 0 : i32
    %c0_i32_1 = arith.constant 0 : i32
    return %arg0, %c0_i32, %arg1, %c0_i32_0 : i32, i32, i32, i32
  }
  func.func @transform_3(%arg0: i32, %arg1: i32) -> (i32, i32, i32, i32) {
    %c0_i32 = arith.constant 0 : i32
    %c0_i32_0 = arith.constant 0 : i32
    %c0_i32_1 = arith.constant 0 : i32
    %c0_i32_2 = arith.constant 0 : i32
    %c0_i32_3 = arith.constant 0 : i32
    return %c0_i32, %c0_i32_0, %c0_i32_1, %c0_i32_2 : i32, i32, i32, i32
  }
  func.func @transform_4(%arg0: i32, %arg1: i32) -> (i32, i32) {
    %c0_i32 = arith.constant 0 : i32
    %c0_i32_0 = arith.constant 0 : i32
    %c0_i32_1 = arith.constant 0 : i32
    return %c0_i32, %c0_i32_0 : i32, i32
  }
  func.func @transform_5(%arg0: i32, %arg1: i32) -> (i32, i32, i32, i32) {
    %c0_i32 = arith.constant 0 : i32
    %c0_i32_0 = arith.constant 0 : i32
    %c0_i32_1 = arith.constant 0 : i32
    return %arg0, %arg1, %c0_i32, %c0_i32_0 : i32, i32, i32, i32
  }
}

</mosaic_0001>

<llo_original>
// kernel: tpu_custom_call.1
$region0: #{tpu_custom_call.1}
  #allocation0 [shape = 'u32[]', space=smem, size = 0x4, offset = 0x4, fixed_abs, tag = 'smem constant byte address 0x4 - core index']
  #allocation1 [shape = 'u32[144,128]{1,0:T(1,128)}', space=vmem, size = 0x12000, scoped, tag = 'internal scratch']
  %s0 = inlined_call_operand.hbm [shape: f32[2,4,16,129], index: 0, kind: input, shape index: {}]
  %s1 = inlined_call_operand.hbm [shape: f32[2,4,16,129], index: 1, kind: input, shape index: {}]
  %s2 = inlined_call_operand.hbm [shape: f32[2,4,16,129], index: 2, kind: input, shape index: {}]
  %s3 = inlined_call_operand.vmem [shape: f32[3,2,8,4], index: 3, kind: input, shape index: {}]
  %s4 = inlined_call_operand.vmem [shape: f32[8,1], index: 4, kind: input, shape index: {}]
  %s5 = inlined_call_operand.vmem [shape: f32[2,2,8,2], index: 5, kind: output, shape index: {}]
  %s6 = sld [smem:[#allocation0]]
  $region65: #{tpu_custom_call.1} parent=0
    _
  %s8 = ssub.s32 1, %s6
  %s9 = scalar_select 0, %s8, %s6
  $region1: #{tpu_custom_call.1} parent=0
    #allocation2 [shape = 'u8[65536]{0}', space=vmem, size = 0x10000, scoped, tag = 'input window, operand 0']
    #allocation3 [shape = 's32[2]{0}', space=sflag, size = 0x8, scoped, tag = 'scoped memory for tpu_custom_call.1']
    #allocation4 [shape = 'u8[65536]{0}', space=vmem, size = 0x10000, scoped, tag = 'input window, operand 1']
    #allocation5 [shape = 's32[2]{0}', space=sflag, size = 0x8, scoped, tag = 'scoped memory for tpu_custom_call.1']
    #allocation6 [shape = 'u8[65536]{0}', space=vmem, size = 0x10000, scoped, tag = 'input window, operand 2']
    %10 = vsyncpa [#allocation3], 0
    %s11 = scalar_lea.sflag [#allocation3], 1
    %12 = vsyncpa %s11, 0
    %13 = vsyncpa [#allocation5], 0
    %s14 = scalar_lea.sflag [#allocation5], 1
    %15 = vsyncpa %s14, 0
    loop: start=0, step=1, limit=6
    $region2: #{tpu_custom_call.1} parent=1 // loop_pre_header
      _
    $region3: #{tpu_custom_call.1} parent=1 // loop_header
      %s17 = sphi 0, %s21
      %p18 = scmp.ge.s32.totalorder %s17, 6
      %s24 = sphi 0, %s36
      %s25 = sphi 0, %s32
      %s26 = sphi 0, %s24
      %s27 = sphi 0, %s25
      %s28 = sphi 0, %s26
      %s29 = sphi 0, %s27
      %s41 = sphi 0, %s43
      %s44 = sphi 0, %s41
      %s45 = sphi 0, %s44
      %s61 = sphi 0, %s45
      %s69 = sphi 0, %s71
      %s72 = sphi 0, %s69
      %s73 = sphi 0, %s72
      %s89 = sphi 0, %s73
      %s97 = sphi 0, %s99
      %s100 = sphi 0, %s97
      %s101 = sphi 0, %s100
      %s117 = sphi 0, %s101
      %s121 = sphi 0, %s121
      %s123 = sphi 0, %s121
      %s124 = sphi 0, %s123
      %s138 = sphi 0, %s124
      %s142 = sphi 0, %s142
      %s144 = sphi 0, %s142
      %s145 = sphi 0, %s144
      %s159 = sphi 0, %s145
      %s167 = sphi 0, %s169
      %s170 = sphi 0, %s167
      %s171 = sphi 0, %s170
      %s187 = sphi 0, %s171
    $region4: #{tpu_custom_call.1} parent=1 // loop_header_branch
      %20 = sbr.rel (%p18) target = $region8
    $region5: #{tpu_custom_call.1} parent=1 // loop_body
      %s22 = ssub.s32 %s17, 1
      %s23 = ssub.s32 %s17, 2
      %s30 = sadd.s32 1, %s25
      %p31 = scmp.ge.s32.totalorder %s30, 2
      %s32 = scalar_select %p31, 0, %s30
      %s33 = sadd.s32 1, %s24
      %s34 = scalar_select %p31, %s33, %s24
      %p35 = scmp.ge.s32.totalorder %s34, 2
      %s36 = scalar_select %p35, 0, %s34
      %s37 = ssub.s32 %s24, %s36
      %s38 = ssub.s32 %s25, %s32
      %s39 = sor.u32 %s37, %s38
      %p40 = scmp.eq.s32.totalorder %s39, 0
      %s42 = sadd.s32 %s41, 1
      %s43 = scalar_select %p40, %s41, %s42
      %p46 = pneg %p40
      %p47 = scmp.eq.s32.totalorder %s17, 3
      %p48 = por %p46, %p47
      %p49 = scmp.ne.s32.totalorder %s41, %s44
      %p50 = scmp.eq.s32.totalorder %s17, 0
      %p51 = por %p49, %p50
      %p52 = scmp.ne.s32.totalorder %s41, %s44
      %p53 = scmp.eq.s32.totalorder %s22, 3
      %p54 = por %p52, %p53
      %p55 = scmp.ne.s32.totalorder %s44, %s45
      %p56 = scmp.eq.s32.totalorder %s22, 0
      %p57 = por %p55, %p56
      %p58 = scmp.ne.s32.totalorder %s44, %s45
      %p59 = scmp.eq.s32.totalorder %s23, 3
      %p60 = por %p58, %p59
      %p62 = scmp.ne.s32.totalorder %s45, %s61
      %p63 = scmp.eq.s32.totalorder %s23, 0
      %p64 = por %p62, %p63
      %s65 = ssub.s32 %s24, %s36
      %s66 = ssub.s32 %s25, %s32
      %s67 = sor.u32 %s65, %s66
      %p68 = scmp.eq.s32.totalorder %s67, 0
      %s70 = sadd.s32 %s69, 1
      %s71 = scalar_select %p68, %s69, %s70
      %p74 = pneg %p68
      %p75 = scmp.eq.s32.totalorder %s17, 3
      %p76 = por %p74, %p75
      %p77 = scmp.ne.s32.totalorder %s69, %s72
      %p78 = scmp.eq.s32.totalorder %s17, 0
      %p79 = por %p77, %p78
      %p80 = scmp.ne.s32.totalorder %s69, %s72
      %p81 = scmp.eq.s32.totalorder %s22, 3
      %p82 = por %p80, %p81
      %p83 = scmp.ne.s32.totalorder %s72, %s73
      %p84 = scmp.eq.s32.totalorder %s22, 0
      %p85 = por %p83, %p84
      %p86 = scmp.ne.s32.totalorder %s72, %s73
      %p87 = scmp.eq.s32.totalorder %s23, 3
      %p88 = por %p86, %p87
      %p90 = scmp.ne.s32.totalorder %s73, %s89
      %p91 = scmp.eq.s32.totalorder %s23, 0
      %p92 = por %p90, %p91
      %s93 = ssub.s32 %s24, %s36
      %s94 = ssub.s32 %s25, %s32
      %s95 = sor.u32 %s93, %s94
      %p96 = scmp.eq.s32.totalorder %s95, 0
      %s98 = sadd.s32 %s97, 1
      %s99 = scalar_select %p96, %s97, %s98
      %p102 = pneg %p96
      %p103 = scmp.eq.s32.totalorder %s17, 3
      %p104 = por %p102, %p103
      %p105 = scmp.ne.s32.totalorder %s97, %s100
      %p106 = scmp.eq.s32.totalorder %s17, 0
      %p107 = por %p105, %p106
      %p108 = scmp.ne.s32.totalorder %s97, %s100
      %p109 = scmp.eq.s32.totalorder %s22, 3
      %p110 = por %p108, %p109
      %p111 = scmp.ne.s32.totalorder %s100, %s101
      %p112 = scmp.eq.s32.totalorder %s22, 0
      %p113 = por %p111, %p112
      %p114 = scmp.ne.s32.totalorder %s100, %s101
      %p115 = scmp.eq.s32.totalorder %s23, 3
      %p116 = por %p114, %p115
      %p118 = scmp.ne.s32.totalorder %s101, %s117
      %p119 = scmp.eq.s32.totalorder %s23, 0
      %p120 = por %p118, %p119
      %s122 = sadd.s32 %s121, 1
      %p125 = scmp.eq.s32.totalorder %s17, 3
      %p126 = scmp.ne.s32.totalorder %s121, %s123
      %p127 = scmp.eq.s32.totalorder %s17, 0
      %p128 = por %p126, %p127
      %p129 = scmp.ne.s32.totalorder %s121, %s123
      %p130 = scmp.eq.s32.totalorder %s22, 3
      %p131 = por %p129, %p130
      %p132 = scmp.ne.s32.totalorder %s123, %s124
      %p133 = scmp.eq.s32.totalorder %s22, 0
      %p134 = por %p132, %p133
      %p135 = scmp.ne.s32.totalorder %s123, %s124
      %p136 = scmp.eq.s32.totalorder %s23, 3
      %p137 = por %p135, %p136
      %p139 = scmp.ne.s32.totalorder %s124, %s138
      %p140 = scmp.eq.s32.totalorder %s23, 0
      %p141 = por %p139, %p140
      %s143 = sadd.s32 %s142, 1
      %p146 = scmp.eq.s32.totalorder %s17, 3
      %p147 = scmp.ne.s32.totalorder %s142, %s144
      %p148 = scmp.eq.s32.totalorder %s17, 0
      %p149 = por %p147, %p148
      %p150 = scmp.ne.s32.totalorder %s142, %s144
      %p151 = scmp.eq.s32.totalorder %s22, 3
      %p152 = por %p150, %p151
      %p153 = scmp.ne.s32.totalorder %s144, %s145
      %p154 = scmp.eq.s32.totalorder %s22, 0
      %p155 = por %p153, %p154
      %p156 = scmp.ne.s32.totalorder %s144, %s145
      %p157 = scmp.eq.s32.totalorder %s23, 3
      %p158 = por %p156, %p157
      %p160 = scmp.ne.s32.totalorder %s145, %s159
      %p161 = scmp.eq.s32.totalorder %s23, 0
      %p162 = por %p160, %p161
      %s163 = ssub.s32 %s24, %s36
      %s164 = ssub.s32 %s25, %s32
      %s165 = sor.u32 %s163, %s164
      %p166 = scmp.eq.s32.totalorder %s165, 0
      %s168 = sadd.s32 %s167, 1
      %s169 = scalar_select %p166, %s167, %s168
      %p172 = pneg %p166
      %p173 = scmp.eq.s32.totalorder %s17, 3
      %p174 = por %p172, %p173
      %p175 = scmp.ne.s32.totalorder %s167, %s170
      %p176 = scmp.eq.s32.totalorder %s17, 0
      %p177 = por %p175, %p176
      %p178 = scmp.ne.s32.totalorder %s167, %s170
      %p179 = scmp.eq.s32.totalorder %s22, 3
      %p180 = por %p178, %p179
      %p181 = scmp.ne.s32.totalorder %s170, %s171
      %p182 = scmp.eq.s32.totalorder %s22, 0
      %p183 = por %p181, %p182
      %p184 = scmp.ne.s32.totalorder %s170, %s171
      %p185 = scmp.eq.s32.totalorder %s23, 3
      %p186 = por %p184, %p185
      %p188 = scmp.ne.s32.totalorder %s171, %s187
      %p189 = scmp.eq.s32.totalorder %s23, 0
      %p190 = por %p188, %p189
      %p191 = scmp.le.s32.totalorder 1, %s17
      %p192 = scmp.lt.s32.totalorder %s17, 5
      %p193 = pnand %p191, %p192
      %p194 = pneg %p193
      // Predicated region
      $region9: #{tpu_custom_call.1} parent=5 // pred_check
        _
      $region10: #{tpu_custom_call.1} parent=5 // pred_check_branch
        %196 = sbr.rel (%p193) target = $region12
      $region11: #{tpu_custom_call.1} parent=5 // pred_region
        %s197 = ssub.s32 %s17, 1
        // Predicated region
        $region13: #{tpu_custom_call.1} parent=11 // pred_check
          %p198 = pneg %p134
        $region14: #{tpu_custom_call.1} parent=11 // pred_check_branch
          %200 = sbr.rel (%p198) target = $region16
        $region15: #{tpu_custom_call.1} parent=11 // pred_region
          _
        $region16: #{tpu_custom_call.1} parent=11 // pred_fallthru
          _
        // Predicated region
        $region17: #{tpu_custom_call.1} parent=11 // pred_check
          %p201 = pneg %p155
        $region18: #{tpu_custom_call.1} parent=11 // pred_check_branch
          %203 = sbr.rel (%p201) target = $region20
        $region19: #{tpu_custom_call.1} parent=11 // pred_region
          _
        $region20: #{tpu_custom_call.1} parent=11 // pred_fallthru
          _
      $region12: #{tpu_custom_call.1} parent=5 // pred_fallthru
        _
      %p204 = scmp.lt.s32.totalorder %s17, 4
      // Predicated region
      $region21: #{tpu_custom_call.1} parent=5 // pred_check
        %p205 = pneg %p204
      $region22: #{tpu_custom_call.1} parent=5 // pred_check_branch
        %207 = sbr.rel (%p205) target = $region24
      $region23: #{tpu_custom_call.1} parent=5 // pred_region
        // Predicated region
        $region25: #{tpu_custom_call.1} parent=23 // pred_check
          %p208 = pneg %p51
        $region26: #{tpu_custom_call.1} parent=23 // pred_check_branch
          %210 = sbr.rel (%p208) target = $region28
        $region27: #{tpu_custom_call.1} parent=23 // pred_region
          %s211 = sand.u32 %s41, 1
          %s212 = scalar_lea.sflag [#allocation3], %s211
          %s213 = sand.u32 %s41, 1
          %s214 = smul.addr %s213, 64
          %s215 = scalar_lea.vmem [#allocation2], %s214
          %s217 = ssub.s32 1024, 1024
          %218 = vsyncadd %s212, %s217
          %s219 = smul.addr %s25, 2
          %s220 = smul.addr %s24, 16
          %s221 = sadd.s32 %s219, %s220
          %s222 = smul.addr %s221, 128
          %s223 = scalar_lea.hbm %s0, %s222
          %s224 = sshll.u32 %s215, 4
          %s225 = int_to_ptr.vmem [resolvable:$true] %s224
          %230 = dma.hbm_to_vmem [thread:$0]  %s223, 1024, %s225, %s212, 512, 256, 16
        $region28: #{tpu_custom_call.1} parent=23 // pred_fallthru
          _
        // Predicated region
        $region29: #{tpu_custom_call.1} parent=23 // pred_check
          %p231 = pneg %p79
        $region30: #{tpu_custom_call.1} parent=23 // pred_check_branch
          %233 = sbr.rel (%p231) target = $region32
        $region31: #{tpu_custom_call.1} parent=23 // pred_region
          %s234 = sand.u32 %s17, 1
          %s235 = scalar_lea.sflag [#allocation5], %s234
          %s236 = sand.u32 %s69, 1
          %s237 = smul.addr %s236, 64
          %s238 = scalar_lea.vmem [#allocation4], %s237
          %s240 = ssub.s32 1024, 1024
          %241 = vsyncadd %s235, %s240
          %s242 = smul.addr %s25, 2
          %s243 = smul.addr %s24, 16
          %s244 = sadd.s32 %s242, %s243
          %s245 = smul.addr %s244, 128
          %s246 = scalar_lea.hbm %s1, %s245
          %s247 = sshll.u32 %s238, 4
          %s248 = int_to_ptr.vmem [resolvable:$true] %s247
          %253 = dma.hbm_to_vmem [thread:$0]  %s246, 1024, %s248, %s235, 512, 256, 16
        $region32: #{tpu_custom_call.1} parent=23 // pred_fallthru
          _
        // Predicated region
        $region33: #{tpu_custom_call.1} parent=23 // pred_check
          %p254 = pneg %p107
        $region34: #{tpu_custom_call.1} parent=23 // pred_check_branch
          %256 = sbr.rel (%p254) target = $region36
        $region35: #{tpu_custom_call.1} parent=23 // pred_region
          %s257 = sand.u32 %s17, 1
          %s258 = scalar_lea.sflag [#allocation5], %s257
          %s259 = sand.u32 %s97, 1
          %s260 = smul.addr %s259, 64
          %s261 = scalar_lea.vmem [#allocation6], %s260
          %s263 = ssub.s32 1024, 1024
          %264 = vsyncadd %s258, %s263
          %s265 = smul.addr %s25, 2
          %s266 = smul.addr %s24, 16
          %s267 = sadd.s32 %s265, %s266
          %s268 = smul.addr %s267, 128
          %s269 = scalar_lea.hbm %s2, %s268
          %s270 = sshll.u32 %s261, 4
          %s271 = int_to_ptr.vmem [resolvable:$true] %s270
          %276 = dma.hbm_to_vmem [thread:$0]  %s269, 1024, %s271, %s258, 512, 256, 16
        $region36: #{tpu_custom_call.1} parent=23 // pred_fallthru
          _
      $region24: #{tpu_custom_call.1} parent=5 // pred_fallthru
        _
      %p277 = scmp.le.s32.totalorder 1, %s17
      %p278 = scmp.lt.s32.totalorder %s17, 5
      %p279 = pnand %p277, %p278
      %p280 = pneg %p279
      // Predicated region
      $region37: #{tpu_custom_call.1} parent=5 // pred_check
        _
      $region38: #{tpu_custom_call.1} parent=5 // pred_check_branch
        %282 = sbr.rel (%p279) target = $region40
      $region39: #{tpu_custom_call.1} parent=5 // pred_region
        %s283 = ssub.s32 %s17, 1
        %s284 = sand.u32 %s44, 1
        %s285 = scalar_lea.sflag [#allocation3], %s284
        %s286 = sand.u32 %s44, 1
        %s287 = smul.addr %s286, 64
        %s288 = scalar_lea.vmem [#allocation2], %s287
        // Predicated region
        $region41: #{tpu_custom_call.1} parent=39 // pred_check
          %p289 = pneg %p57
        $region42: #{tpu_custom_call.1} parent=39 // pred_check_branch
          %291 = sbr.rel (%p289) target = $region44
        $region43: #{tpu_custom_call.1} parent=39 // pred_region
          %292 = dma.done %s285, 1024
        $region44: #{tpu_custom_call.1} parent=39 // pred_fallthru
          _
        %s293 = sand.u32 %s22, 1
        %s294 = scalar_lea.sflag [#allocation5], %s293
        %s295 = sand.u32 %s72, 1
        %s296 = smul.addr %s295, 64
        %s297 = scalar_lea.vmem [#allocation4], %s296
        // Predicated region
        $region45: #{tpu_custom_call.1} parent=39 // pred_check
          %p298 = pneg %p85
        $region46: #{tpu_custom_call.1} parent=39 // pred_check_branch
          %300 = sbr.rel (%p298) target = $region48
        $region47: #{tpu_custom_call.1} parent=39 // pred_region
          %301 = dma.done %s294, 1024
        $region48: #{tpu_custom_call.1} parent=39 // pred_fallthru
          _
        %s302 = sand.u32 %s22, 1
        %s303 = scalar_lea.sflag [#allocation5], %s302
        %s304 = sand.u32 %s100, 1
        %s305 = smul.addr %s304, 64
        %s306 = scalar_lea.vmem [#allocation6], %s305
        // Predicated region
        $region49: #{tpu_custom_call.1} parent=39 // pred_check
          %p307 = pneg %p113
        $region50: #{tpu_custom_call.1} parent=39 // pred_check_branch
          %309 = sbr.rel (%p307) target = $region52
        $region51: #{tpu_custom_call.1} parent=39 // pred_region
          %310 = dma.done %s303, 1024
        $region52: #{tpu_custom_call.1} parent=39 // pred_fallthru
          _
        %s311 = sand.u32 %s44, 1
        %s312 = scalar_lea.sflag [#allocation3], %s311
        %s313 = sand.u32 %s44, 1
        %s314 = smul.addr %s313, 64
        %s315 = scalar_lea.vmem [#allocation2], %s314
        %p316 = pneg %p57
        %p317 = pneg %p54
        %s318 = sand.u32 %s22, 1
        %s319 = scalar_lea.sflag [#allocation5], %s318
        %s320 = sand.u32 %s72, 1
        %s321 = smul.addr %s320, 64
        %s322 = scalar_lea.vmem [#allocation4], %s321
        %p323 = pneg %p85
        %p324 = pneg %p82
        %s325 = sand.u32 %s22, 1
        %s326 = scalar_lea.sflag [#allocation5], %s325
        %s327 = sand.u32 %s100, 1
        %s328 = smul.addr %s327, 64
        %s329 = scalar_lea.vmem [#allocation6], %s328
        %p330 = pneg %p113
        %p331 = pneg %p110
        %p332 = pneg %p134
        %p333 = pneg %p131
        %p334 = pneg %p155
        %p335 = pneg %p152
        %p336 = pneg %p183
        %p337 = pneg %p180
        %p338 = scmp.lt.s32.totalorder %s26, 1
        %s339 = scalar_select %p338, %s26, 1
        %p340 = scmp.lt.s32.totalorder %s27, 1
        %s341 = scalar_select %p340, %s27, 1
        %s342 = smul.addr %s339, 2
        %s343 = sadd.s32 %s341, %s342
        %s344 = smul.addr %s343, 8
        %s345 = scalar_lea.vmem %s5, %s344
        %p346 = scmp.lt.s32.totalorder %s26, 1
        %s347 = scalar_select %p346, %s26, 1
        %p348 = scmp.lt.s32.totalorder %s27, 1
        %s349 = scalar_select %p348, %s27, 1
        %s350 = smul.addr %s347, 2
        %s351 = sadd.s32 %s349, %s350
        %s352 = smul.addr %s351, 8
        %s353 = scalar_lea.vmem %s5, %s352
        %v354 = vld [vmem:[%s288] ss:$8 sm:$0x3]
        %s355 = scalar_lea.vmem %s288, 16 [#allocation2]
        %v356 = vld [vmem:[%s355] ss:$8 sm:$0x3]
        %s357 = scalar_lea.vmem %s288, 32 [#allocation2]
        %v358 = vld [vmem:[%s357] ss:$8 sm:$0x3]
        %s359 = scalar_lea.vmem %s288, 48 [#allocation2]
        %v360 = vld [vmem:[%s359] ss:$8 sm:$0x3]
        %v361 = vld [vmem:[%s3] sm:$0xff]
        %s362 = scalar_lea.vmem %s3, 8
        %v363 = vld [vmem:[%s362] sm:$0xff]
        %v368 = vcombine.low %v354, %v356
        %v369 = vcombine.low %v358, %v360
        %v371 = vunpack.c.l.s4 1966171168
        %v372 = vunpack.c.0.s8 %v371
        %v373 = vlaneseq
        %v374 = vshrl.u32 %v373, 7
        %v375 = vsub.s32 %v372, %v374
        %v376 = vrot.slane %v368, %v375
        %v378 = vunpack.c.l.s4 1966171168
        %v379 = vunpack.c.0.s8 %v378
        %v380 = vlaneseq
        %v381 = vshrl.u32 %v380, 7
        %v382 = vsub.s32 %v379, %v381
        %v383 = vrot.slane %v369, %v382
        %v384 = vcombine.low %v376, %v383
        %v385 = vcombine.high %v376, %v383
        %v387 = vunpack.c.l.s4 1966171168
        %v388 = vunpack.c.0.s8 %v387
        %v389 = vlaneseq
        %v390 = vshrl.u32 %v389, 7
        %v391 = vsub.s32 %v388, %v390
        %v392 = vrot.slane %v384, %v391
        %v394 = vunpack.c.l.s4 1966171168
        %v395 = vunpack.c.0.s8 %v394
        %v396 = vlaneseq
        %v397 = vshrl.u32 %v396, 7
        %v398 = vsub.s32 %v395, %v397
        %v399 = vrot.slane %v385, %v398
        %400 = vrot.lane.b32.xlu0 %v392, 127
        %v401 = vpop.permute.xlu0 %400
        %402 = vrot.lane.b32.xlu0 %v399, 127
        %v403 = vpop.permute.xlu0 %402
        %vm404 = vcmask 1039360
        %v405 = vsel %vm404, %v401, %v403
        %vm406 = vcmask 31744
        %v408 = vsel %vm406, %v363, 0
        %vm410 = vcmask 1043456
        %v411 = vsel %vm410, %v405, 0
        %413 = vmatprep.subr.mxu0 0.0
        %414 = vmatpush1.msra.mxu0 %v411
        %415 = vmatprep.subr.mxu0 0.0
        %416 = vmatpush1.msra.mxu0 0.0
        %417 = vmatprep.subr.mxu0 0.0
        %418 = vmatpush1.msra.mxu0 0.0
        %419 = vmatprep.subr.mxu0 0.0
        %420 = vmatpush1.msra.mxu0 0.0
        %421 = vmatprep.subr.mxu0 0.0
        %422 = vmatpush1.msra.mxu0 0.0
        %423 = vmatprep.subr.mxu0 0.0
        %424 = vmatpush1.msra.mxu0 0.0
        %425 = vmatprep.subr.mxu0 0.0
        %426 = vmatpush1.msra.mxu0 0.0
        %427 = vmatprep.subr.mxu0 0.0
        %428 = vmatpush1.msra.mxu0 0.0
        %429 = vmatprep.subr.mxu0 0.0
        %430 = vmatpush1.msra.mxu0 0.0
        %431 = vmatprep.subr.mxu0 0.0
        %432 = vmatpush1.msra.mxu0 0.0
        %433 = vmatprep.subr.mxu0 0.0
        %434 = vmatpush1.msra.mxu0 0.0
        %435 = vmatprep.subr.mxu0 0.0
        %436 = vmatpush1.msra.mxu0 0.0
        %437 = vmatprep.subr.mxu0 0.0
        %438 = vmatpush1.msra.mxu0 0.0
        %439 = vmatprep.subr.mxu0 0.0
        %440 = vmatpush1.msra.mxu0 0.0
        %441 = vmatprep.subr.mxu0 0.0
        %442 = vmatpush1.msra.mxu0 0.0
        %443 = vmatprep.subr.mxu0 0.0
        %444 = vmatpush1.msra.mxu0 0.0
        %445 = vmatprep.subr.mxu0 0.0
        %446 = vmatpush1.msra.mxu0 0.0
        %447 = vmatprep.subr.mxu0 0.0
        %448 = vmatpush1.msra.mxu0 0.0
        %449 = vmatprep.subr.mxu0 0.0
        %450 = vmatpush1.msra.mxu0 0.0
        %451 = vmatprep.subr.mxu0 0.0
        %452 = vmatpush1.msra.mxu0 0.0
        %453 = vmatprep.subr.mxu0 0.0
        %454 = vmatpush1.msra.mxu0 0.0
        %455 = vmatprep.subr.mxu0 0.0
        %456 = vmatpush1.msra.mxu0 0.0
        %457 = vmatprep.subr.mxu0 0.0
        %458 = vmatpush1.msra.mxu0 0.0
        %459 = vmatprep.subr.mxu0 0.0
        %460 = vmatpush1.msra.mxu0 0.0
        %461 = vmatprep.subr.mxu0 0.0
        %462 = vmatpush1.msra.mxu0 0.0
        %463 = vmatprep.subr.mxu0 0.0
        %464 = vmatpush1.msra.mxu0 0.0
        %465 = vmatprep.subr.mxu0 0.0
        %466 = vmatpush1.msra.mxu0 0.0
        %467 = vmatprep.subr.mxu0 0.0
        %468 = vmatpush1.msra.mxu0 0.0
        %469 = vmatprep.subr.mxu0 0.0
        %470 = vmatpush1.msra.mxu0 0.0
        %471 = vmatprep.subr.mxu0 0.0
        %472 = vmatpush1.msra.mxu0 0.0
        %473 = vmatprep.subr.mxu0 0.0
        %474 = vmatpush1.msra.mxu0 0.0
        %475 = vmatprep.subr.mxu0 0.0
        %476 = vmatpush1.msra.mxu0 0.0
        %477 = vmatprep.mubr.f32.mxu0 0.0
        %478 = vmatmul.mubr.f32.gmra.mrb[0].mxu0 %v408
        %v479 = vpop.f32.mrb[0].mxu0
        %v480 = vadd.f32 0.0, %v479
        %v481 = vpop.f32.mrb[0].mxu0
        %482 = vdwg.mxu0
        %v484 = vsel %vm406, %v361, 0
        %v486 = vsel %vm410, %v392, 0
        %488 = vmatprep.subr.mxu0 0.0
        %489 = vmatpush1.msra.mxu0 %v486
        %490 = vmatprep.subr.mxu0 0.0
        %491 = vmatpush1.msra.mxu0 0.0
        %492 = vmatprep.subr.mxu0 0.0
        %493 = vmatpush1.msra.mxu0 0.0
        %494 = vmatprep.subr.mxu0 0.0
        %495 = vmatpush1.msra.mxu0 0.0
        %496 = vmatprep.subr.mxu0 0.0
        %497 = vmatpush1.msra.mxu0 0.0
        %498 = vmatprep.subr.mxu0 0.0
        %499 = vmatpush1.msra.mxu0 0.0
        %500 = vmatprep.subr.mxu0 0.0
        %501 = vmatpush1.msra.mxu0 0.0
        %502 = vmatprep.subr.mxu0 0.0
        %503 = vmatpush1.msra.mxu0 0.0
        %504 = vmatprep.subr.mxu0 0.0
        %505 = vmatpush1.msra.mxu0 0.0
        %506 = vmatprep.subr.mxu0 0.0
        %507 = vmatpush1.msra.mxu0 0.0
        %508 = vmatprep.subr.mxu0 0.0
        %509 = vmatpush1.msra.mxu0 0.0
        %510 = vmatprep.subr.mxu0 0.0
        %511 = vmatpush1.msra.mxu0 0.0
        %512 = vmatprep.subr.mxu0 0.0
        %513 = vmatpush1.msra.mxu0 0.0
        %514 = vmatprep.subr.mxu0 0.0
        %515 = vmatpush1.msra.mxu0 0.0
        %516 = vmatprep.subr.mxu0 0.0
        %517 = vmatpush1.msra.mxu0 0.0
        %518 = vmatprep.subr.mxu0 0.0
        %519 = vmatpush1.msra.mxu0 0.0
        %520 = vmatprep.subr.mxu0 0.0
        %521 = vmatpush1.msra.mxu0 0.0
        %522 = vmatprep.subr.mxu0 0.0
        %523 = vmatpush1.msra.mxu0 0.0
        %524 = vmatprep.subr.mxu0 0.0
        %525 = vmatpush1.msra.mxu0 0.0
        %526 = vmatprep.subr.mxu0 0.0
        %527 = vmatpush1.msra.mxu0 0.0
        %528 = vmatprep.subr.mxu0 0.0
        %529 = vmatpush1.msra.mxu0 0.0
        %530 = vmatprep.subr.mxu0 0.0
        %531 = vmatpush1.msra.mxu0 0.0
        %532 = vmatprep.subr.mxu0 0.0
        %533 = vmatpush1.msra.mxu0 0.0
        %534 = vmatprep.subr.mxu0 0.0
        %535 = vmatpush1.msra.mxu0 0.0
        %536 = vmatprep.subr.mxu0 0.0
        %537 = vmatpush1.msra.mxu0 0.0
        %538 = vmatprep.subr.mxu0 0.0
        %539 = vmatpush1.msra.mxu0 0.0
        %540 = vmatprep.subr.mxu0 0.0
        %541 = vmatpush1.msra.mxu0 0.0
        %542 = vmatprep.subr.mxu0 0.0
        %543 = vmatpush1.msra.mxu0 0.0
        %544 = vmatprep.subr.mxu0 0.0
        %545 = vmatpush1.msra.mxu0 0.0
        %546 = vmatprep.subr.mxu0 0.0
        %547 = vmatpush1.msra.mxu0 0.0
        %548 = vmatprep.subr.mxu0 0.0
        %549 = vmatpush1.msra.mxu0 0.0
        %550 = vmatprep.subr.mxu0 0.0
        %551 = vmatpush1.msra.mxu0 0.0
        %552 = vmatprep.mubr.f32.mxu0 0.0
        %553 = vmatmul.mubr.f32.gmra.mrb[0].mxu0 %v484
        %v554 = vpop.f32.mrb[0].mxu0
        %v555 = vadd.f32 %v480, %v554
        %v556 = vpop.f32.mrb[0].mxu0
        %557 = vdwg.mxu0
        %v558 = vld [vmem:[%s297] ss:$8 sm:$0x3]
        %s559 = scalar_lea.vmem %s297, 16 [#allocation4]
        %v560 = vld [vmem:[%s559] ss:$8 sm:$0x3]
        %s561 = scalar_lea.vmem %s297, 32 [#allocation4]
        %v562 = vld [vmem:[%s561] ss:$8 sm:$0x3]
        %s563 = scalar_lea.vmem %s297, 48 [#allocation4]
        %v564 = vld [vmem:[%s563] ss:$8 sm:$0x3]
        %s565 = scalar_lea.vmem %s3, 16
        %v566 = vld [vmem:[%s565] sm:$0xff]
        %v571 = vcombine.low %v558, %v560
        %v572 = vcombine.low %v562, %v564
        %v574 = vunpack.c.l.s4 1966171168
        %v575 = vunpack.c.0.s8 %v574
        %v576 = vlaneseq
        %v577 = vshrl.u32 %v576, 7
        %v578 = vsub.s32 %v575, %v577
        %v579 = vrot.slane %v571, %v578
        %v581 = vunpack.c.l.s4 1966171168
        %v582 = vunpack.c.0.s8 %v581
        %v583 = vlaneseq
        %v584 = vshrl.u32 %v583, 7
        %v585 = vsub.s32 %v582, %v584
        %v586 = vrot.slane %v572, %v585
        %v587 = vcombine.low %v579, %v586
        %v589 = vunpack.c.l.s4 1966171168
        %v590 = vunpack.c.0.s8 %v589
        %v591 = vlaneseq
        %v592 = vshrl.u32 %v591, 7
        %v593 = vsub.s32 %v590, %v592
        %v594 = vrot.slane %v587, %v593
        %v596 = vsel %vm406, %v566, 0
        %v598 = vsel %vm410, %v594, 0
        %600 = vmatprep.subr.mxu0 0.0
        %601 = vmatpush1.msra.mxu0 %v598
        %602 = vmatprep.subr.mxu0 0.0
        %603 = vmatpush1.msra.mxu0 0.0
        %604 = vmatprep.subr.mxu0 0.0
        %605 = vmatpush1.msra.mxu0 0.0
        %606 = vmatprep.subr.mxu0 0.0
        %607 = vmatpush1.msra.mxu0 0.0
        %608 = vmatprep.subr.mxu0 0.0
        %609 = vmatpush1.msra.mxu0 0.0
        %610 = vmatprep.subr.mxu0 0.0
        %611 = vmatpush1.msra.mxu0 0.0
        %612 = vmatprep.subr.mxu0 0.0
        %613 = vmatpush1.msra.mxu0 0.0
        %614 = vmatprep.subr.mxu0 0.0
        %615 = vmatpush1.msra.mxu0 0.0
        %616 = vmatprep.subr.mxu0 0.0
        %617 = vmatpush1.msra.mxu0 0.0
        %618 = vmatprep.subr.mxu0 0.0
        %619 = vmatpush1.msra.mxu0 0.0
        %620 = vmatprep.subr.mxu0 0.0
        %621 = vmatpush1.msra.mxu0 0.0
        %622 = vmatprep.subr.mxu0 0.0
        %623 = vmatpush1.msra.mxu0 0.0
        %624 = vmatprep.subr.mxu0 0.0
        %625 = vmatpush1.msra.mxu0 0.0
        %626 = vmatprep.subr.mxu0 0.0
        %627 = vmatpush1.msra.mxu0 0.0
        %628 = vmatprep.subr.mxu0 0.0
        %629 = vmatpush1.msra.mxu0 0.0
        %630 = vmatprep.subr.mxu0 0.0
        %631 = vmatpush1.msra.mxu0 0.0
        %632 = vmatprep.subr.mxu0 0.0
        %633 = vmatpush1.msra.mxu0 0.0
        %634 = vmatprep.subr.mxu0 0.0
        %635 = vmatpush1.msra.mxu0 0.0
        %636 = vmatprep.subr.mxu0 0.0
        %637 = vmatpush1.msra.mxu0 0.0
        %638 = vmatprep.subr.mxu0 0.0
        %639 = vmatpush1.msra.mxu0 0.0
        %640 = vmatprep.subr.mxu0 0.0
        %641 = vmatpush1.msra.mxu0 0.0
        %642 = vmatprep.subr.mxu0 0.0
        %643 = vmatpush1.msra.mxu0 0.0
        %644 = vmatprep.subr.mxu0 0.0
        %645 = vmatpush1.msra.mxu0 0.0
        %646 = vmatprep.subr.mxu0 0.0
        %647 = vmatpush1.msra.mxu0 0.0
        %648 = vmatprep.subr.mxu0 0.0
        %649 = vmatpush1.msra.mxu0 0.0
        %650 = vmatprep.subr.mxu0 0.0
        %651 = vmatpush1.msra.mxu0 0.0
        %652 = vmatprep.subr.mxu0 0.0
        %653 = vmatpush1.msra.mxu0 0.0
        %654 = vmatprep.subr.mxu0 0.0
        %655 = vmatpush1.msra.mxu0 0.0
        %656 = vmatprep.subr.mxu0 0.0
        %657 = vmatpush1.msra.mxu0 0.0
        %658 = vmatprep.subr.mxu0 0.0
        %659 = vmatpush1.msra.mxu0 0.0
        %660 = vmatprep.subr.mxu0 0.0
        %661 = vmatpush1.msra.mxu0 0.0
        %662 = vmatprep.subr.mxu0 0.0
        %663 = vmatpush1.msra.mxu0 0.0
        %664 = vmatprep.mubr.f32.mxu0 0.0
        %665 = vmatmul.mubr.f32.gmra.mrb[0].mxu0 %v596
        %v666 = vpop.f32.mrb[0].mxu0
        %v667 = vadd.f32 0.0, %v666
        %v668 = vpop.f32.mrb[0].mxu0
        %669 = vdwg.mxu0
        %v670 = vadd.f32 %v555, %v667
        %s671 = scalar_lea.vmem %s3, 24
        %v672 = vld [vmem:[%s671] sm:$0xff]
        %v673 = vcombine.high %v579, %v586
        %v675 = vunpack.c.l.s4 1966171168
        %v676 = vunpack.c.0.s8 %v675
        %v677 = vlaneseq
        %v678 = vshrl.u32 %v677, 7
        %v679 = vsub.s32 %v676, %v678
        %v680 = vrot.slane %v673, %v679
        %681 = vrot.lane.b32.xlu0 %v594, 127
        %v682 = vpop.permute.xlu0 %681
        %683 = vrot.lane.b32.xlu0 %v680, 127
        %v684 = vpop.permute.xlu0 %683
        %v685 = vsel %vm404, %v682, %v684
        %v687 = vsel %vm406, %v672, 0
        %v689 = vsel %vm410, %v685, 0
        %691 = vmatprep.subr.mxu0 0.0
        %692 = vmatpush1.msra.mxu0 %v689
        %693 = vmatprep.subr.mxu0 0.0
        %694 = vmatpush1.msra.mxu0 0.0
        %695 = vmatprep.subr.mxu0 0.0
        %696 = vmatpush1.msra.mxu0 0.0
        %697 = vmatprep.subr.mxu0 0.0
        %698 = vmatpush1.msra.mxu0 0.0
        %699 = vmatprep.subr.mxu0 0.0
        %700 = vmatpush1.msra.mxu0 0.0
        %701 = vmatprep.subr.mxu0 0.0
        %702 = vmatpush1.msra.mxu0 0.0
        %703 = vmatprep.subr.mxu0 0.0
        %704 = vmatpush1.msra.mxu0 0.0
        %705 = vmatprep.subr.mxu0 0.0
        %706 = vmatpush1.msra.mxu0 0.0
        %707 = vmatprep.subr.mxu0 0.0
        %708 = vmatpush1.msra.mxu0 0.0
        %709 = vmatprep.subr.mxu0 0.0
        %710 = vmatpush1.msra.mxu0 0.0
        %711 = vmatprep.subr.mxu0 0.0
        %712 = vmatpush1.msra.mxu0 0.0
        %713 = vmatprep.subr.mxu0 0.0
        %714 = vmatpush1.msra.mxu0 0.0
        %715 = vmatprep.subr.mxu0 0.0
        %716 = vmatpush1.msra.mxu0 0.0
        %717 = vmatprep.subr.mxu0 0.0
        %718 = vmatpush1.msra.mxu0 0.0
        %719 = vmatprep.subr.mxu0 0.0
        %720 = vmatpush1.msra.mxu0 0.0
        %721 = vmatprep.subr.mxu0 0.0
        %722 = vmatpush1.msra.mxu0 0.0
        %723 = vmatprep.subr.mxu0 0.0
        %724 = vmatpush1.msra.mxu0 0.0
        %725 = vmatprep.subr.mxu0 0.0
        %726 = vmatpush1.msra.mxu0 0.0
        %727 = vmatprep.subr.mxu0 0.0
        %728 = vmatpush1.msra.mxu0 0.0
        %729 = vmatprep.subr.mxu0 0.0
        %730 = vmatpush1.msra.mxu0 0.0
        %731 = vmatprep.subr.mxu0 0.0
        %732 = vmatpush1.msra.mxu0 0.0
        %733 = vmatprep.subr.mxu0 0.0
        %734 = vmatpush1.msra.mxu0 0.0
        %735 = vmatprep.subr.mxu0 0.0
        %736 = vmatpush1.msra.mxu0 0.0
        %737 = vmatprep.subr.mxu0 0.0
        %738 = vmatpush1.msra.mxu0 0.0
        %739 = vmatprep.subr.mxu0 0.0
        %740 = vmatpush1.msra.mxu0 0.0
        %741 = vmatprep.subr.mxu0 0.0
        %742 = vmatpush1.msra.mxu0 0.0
        %743 = vmatprep.subr.mxu0 0.0
        %744 = vmatpush1.msra.mxu0 0.0
        %745 = vmatprep.subr.mxu0 0.0
        %746 = vmatpush1.msra.mxu0 0.0
        %747 = vmatprep.subr.mxu0 0.0
        %748 = vmatpush1.msra.mxu0 0.0
        %749 = vmatprep.subr.mxu0 0.0
        %750 = vmatpush1.msra.mxu0 0.0
        %751 = vmatprep.subr.mxu0 0.0
        %752 = vmatpush1.msra.mxu0 0.0
        %753 = vmatprep.subr.mxu0 0.0
        %754 = vmatpush1.msra.mxu0 0.0
        %755 = vmatprep.mubr.f32.mxu0 0.0
        %756 = vmatmul.mubr.f32.gmra.mrb[0].mxu0 %v687
        %v757 = vpop.f32.mrb[0].mxu0
        %v758 = vadd.f32 0.0, %v757
        %v759 = vpop.f32.mrb[0].mxu0
        %760 = vdwg.mxu0
        %v761 = vadd.f32 %v670, %v758
        %v762 = vld [vmem:[%s306] ss:$8 sm:$0x3]
        %s763 = scalar_lea.vmem %s306, 16 [#allocation6]
        %v764 = vld [vmem:[%s763] ss:$8 sm:$0x3]
        %s765 = scalar_lea.vmem %s306, 32 [#allocation6]
        %v766 = vld [vmem:[%s765] ss:$8 sm:$0x3]
        %s767 = scalar_lea.vmem %s306, 48 [#allocation6]
        %v768 = vld [vmem:[%s767] ss:$8 sm:$0x3]
        %s769 = scalar_lea.vmem %s3, 32
        %v770 = vld [vmem:[%s769] sm:$0xff]
        %v775 = vcombine.low %v762, %v764
        %v776 = vcombine.low %v766, %v768
        %v778 = vunpack.c.l.s4 1966171168
        %v779 = vunpack.c.0.s8 %v778
        %v780 = vlaneseq
        %v781 = vshrl.u32 %v780, 7
        %v782 = vsub.s32 %v779, %v781
        %v783 = vrot.slane %v775, %v782
        %v785 = vunpack.c.l.s4 1966171168
        %v786 = vunpack.c.0.s8 %v785
        %v787 = vlaneseq
        %v788 = vshrl.u32 %v787, 7
        %v789 = vsub.s32 %v786, %v788
        %v790 = vrot.slane %v776, %v789
        %v791 = vcombine.low %v783, %v790
        %v793 = vunpack.c.l.s4 1966171168
        %v794 = vunpack.c.0.s8 %v793
        %v795 = vlaneseq
        %v796 = vshrl.u32 %v795, 7
        %v797 = vsub.s32 %v794, %v796
        %v798 = vrot.slane %v791, %v797
        %v800 = vsel %vm406, %v770, 0
        %v802 = vsel %vm410, %v798, 0
        %804 = vmatprep.subr.mxu0 0.0
        %805 = vmatpush1.msra.mxu0 %v802
        %806 = vmatprep.subr.mxu0 0.0
        %807 = vmatpush1.msra.mxu0 0.0
        %808 = vmatprep.subr.mxu0 0.0
        %809 = vmatpush1.msra.mxu0 0.0
        %810 = vmatprep.subr.mxu0 0.0
        %811 = vmatpush1.msra.mxu0 0.0
        %812 = vmatprep.subr.mxu0 0.0
        %813 = vmatpush1.msra.mxu0 0.0
        %814 = vmatprep.subr.mxu0 0.0
        %815 = vmatpush1.msra.mxu0 0.0
        %816 = vmatprep.subr.mxu0 0.0
        %817 = vmatpush1.msra.mxu0 0.0
        %818 = vmatprep.subr.mxu0 0.0
        %819 = vmatpush1.msra.mxu0 0.0
        %820 = vmatprep.subr.mxu0 0.0
        %821 = vmatpush1.msra.mxu0 0.0
        %822 = vmatprep.subr.mxu0 0.0
        %823 = vmatpush1.msra.mxu0 0.0
        %824 = vmatprep.subr.mxu0 0.0
        %825 = vmatpush1.msra.mxu0 0.0
        %826 = vmatprep.subr.mxu0 0.0
        %827 = vmatpush1.msra.mxu0 0.0
        %828 = vmatprep.subr.mxu0 0.0
        %829 = vmatpush1.msra.mxu0 0.0
        %830 = vmatprep.subr.mxu0 0.0
        %831 = vmatpush1.msra.mxu0 0.0
        %832 = vmatprep.subr.mxu0 0.0
        %833 = vmatpush1.msra.mxu0 0.0
        %834 = vmatprep.subr.mxu0 0.0
        %835 = vmatpush1.msra.mxu0 0.0
        %836 = vmatprep.subr.mxu0 0.0
        %837 = vmatpush1.msra.mxu0 0.0
        %838 = vmatprep.subr.mxu0 0.0
        %839 = vmatpush1.msra.mxu0 0.0
        %840 = vmatprep.subr.mxu0 0.0
        %841 = vmatpush1.msra.mxu0 0.0
        %842 = vmatprep.subr.mxu0 0.0
        %843 = vmatpush1.msra.mxu0 0.0
        %844 = vmatprep.subr.mxu0 0.0
        %845 = vmatpush1.msra.mxu0 0.0
        %846 = vmatprep.subr.mxu0 0.0
        %847 = vmatpush1.msra.mxu0 0.0
        %848 = vmatprep.subr.mxu0 0.0
        %849 = vmatpush1.msra.mxu0 0.0
        %850 = vmatprep.subr.mxu0 0.0
        %851 = vmatpush1.msra.mxu0 0.0
        %852 = vmatprep.subr.mxu0 0.0
        %853 = vmatpush1.msra.mxu0 0.0
        %854 = vmatprep.subr.mxu0 0.0
        %855 = vmatpush1.msra.mxu0 0.0
        %856 = vmatprep.subr.mxu0 0.0
        %857 = vmatpush1.msra.mxu0 0.0
        %858 = vmatprep.subr.mxu0 0.0
        %859 = vmatpush1.msra.mxu0 0.0
        %860 = vmatprep.subr.mxu0 0.0
        %861 = vmatpush1.msra.mxu0 0.0
        %862 = vmatprep.subr.mxu0 0.0
        %863 = vmatpush1.msra.mxu0 0.0
        %864 = vmatprep.subr.mxu0 0.0
        %865 = vmatpush1.msra.mxu0 0.0
        %866 = vmatprep.subr.mxu0 0.0
        %867 = vmatpush1.msra.mxu0 0.0
        %868 = vmatprep.mubr.f32.mxu0 0.0
        %869 = vmatmul.mubr.f32.gmra.mrb[0].mxu0 %v800
        %v870 = vpop.f32.mrb[0].mxu0
        %v871 = vadd.f32 0.0, %v870
        %v872 = vpop.f32.mrb[0].mxu0
        %873 = vdwg.mxu0
        %v874 = vadd.f32 %v761, %v871
        %s875 = scalar_lea.vmem %s3, 40
        %v876 = vld [vmem:[%s875] sm:$0xff]
        %v877 = vcombine.high %v783, %v790
        %v879 = vunpack.c.l.s4 1966171168
        %v880 = vunpack.c.0.s8 %v879
        %v881 = vlaneseq
        %v882 = vshrl.u32 %v881, 7
        %v883 = vsub.s32 %v880, %v882
        %v884 = vrot.slane %v877, %v883
        %885 = vrot.lane.b32.xlu0 %v798, 127
        %v886 = vpop.permute.xlu0 %885
        %887 = vrot.lane.b32.xlu0 %v884, 127
        %v888 = vpop.permute.xlu0 %887
        %v889 = vsel %vm404, %v886, %v888
        %v891 = vsel %vm406, %v876, 0
        %v893 = vsel %vm410, %v889, 0
        %895 = vmatprep.subr.mxu0 0.0
        %896 = vmatpush1.msra.mxu0 %v893
        %897 = vmatprep.subr.mxu0 0.0
        %898 = vmatpush1.msra.mxu0 0.0
        %899 = vmatprep.subr.mxu0 0.0
        %900 = vmatpush1.msra.mxu0 0.0
        %901 = vmatprep.subr.mxu0 0.0
        %902 = vmatpush1.msra.mxu0 0.0
        %903 = vmatprep.subr.mxu0 0.0
        %904 = vmatpush1.msra.mxu0 0.0
        %905 = vmatprep.subr.mxu0 0.0
        %906 = vmatpush1.msra.mxu0 0.0
        %907 = vmatprep.subr.mxu0 0.0
        %908 = vmatpush1.msra.mxu0 0.0
        %909 = vmatprep.subr.mxu0 0.0
        %910 = vmatpush1.msra.mxu0 0.0
        %911 = vmatprep.subr.mxu0 0.0
        %912 = vmatpush1.msra.mxu0 0.0
        %913 = vmatprep.subr.mxu0 0.0
        %914 = vmatpush1.msra.mxu0 0.0
        %915 = vmatprep.subr.mxu0 0.0
        %916 = vmatpush1.msra.mxu0 0.0
        %917 = vmatprep.subr.mxu0 0.0
        %918 = vmatpush1.msra.mxu0 0.0
        %919 = vmatprep.subr.mxu0 0.0
        %920 = vmatpush1.msra.mxu0 0.0
        %921 = vmatprep.subr.mxu0 0.0
        %922 = vmatpush1.msra.mxu0 0.0
        %923 = vmatprep.subr.mxu0 0.0
        %924 = vmatpush1.msra.mxu0 0.0
        %925 = vmatprep.subr.mxu0 0.0
        %926 = vmatpush1.msra.mxu0 0.0
        %927 = vmatprep.subr.mxu0 0.0
        %928 = vmatpush1.msra.mxu0 0.0
        %929 = vmatprep.subr.mxu0 0.0
        %930 = vmatpush1.msra.mxu0 0.0
        %931 = vmatprep.subr.mxu0 0.0
        %932 = vmatpush1.msra.mxu0 0.0
        %933 = vmatprep.subr.mxu0 0.0
        %934 = vmatpush1.msra.mxu0 0.0
        %935 = vmatprep.subr.mxu0 0.0
        %936 = vmatpush1.msra.mxu0 0.0
        %937 = vmatprep.subr.mxu0 0.0
        %938 = vmatpush1.msra.mxu0 0.0
        %939 = vmatprep.subr.mxu0 0.0
        %940 = vmatpush1.msra.mxu0 0.0
        %941 = vmatprep.subr.mxu0 0.0
        %942 = vmatpush1.msra.mxu0 0.0
        %943 = vmatprep.subr.mxu0 0.0
        %944 = vmatpush1.msra.mxu0 0.0
        %945 = vmatprep.subr.mxu0 0.0
        %946 = vmatpush1.msra.mxu0 0.0
        %947 = vmatprep.subr.mxu0 0.0
        %948 = vmatpush1.msra.mxu0 0.0
        %949 = vmatprep.subr.mxu0 0.0
        %950 = vmatpush1.msra.mxu0 0.0
        %951 = vmatprep.subr.mxu0 0.0
        %952 = vmatpush1.msra.mxu0 0.0
        %953 = vmatprep.subr.mxu0 0.0
        %954 = vmatpush1.msra.mxu0 0.0
        %955 = vmatprep.subr.mxu0 0.0
        %956 = vmatpush1.msra.mxu0 0.0
        %957 = vmatprep.subr.mxu0 0.0
        %958 = vmatpush1.msra.mxu0 0.0
        %959 = vmatprep.mubr.f32.mxu0 0.0
        %960 = vmatmul.mubr.f32.gmra.mrb[0].mxu0 %v891
        %v961 = vpop.f32.mrb[0].mxu0
        %v962 = vadd.f32 0.0, %v961
        %v963 = vpop.f32.mrb[0].mxu0
        %964 = vdwg.mxu0
        %v965 = vadd.f32 %v874, %v962
        %v966 = vld [vmem:[%s4] sm:$0xff]
        %968 = vset.pattern.permute.xlu0 0
        %969 = vperm.xlu0 %968, %v966
        %v970 = vpop.permute.xlu0 %969
        %v972 = vadd.f32 %v965, %v970
        %973 = vadd.xlane.f32.xlu0 %v972
        %v974 = vpop.xlane.xlu0 %973
        %v975 = vadd.f32 %v974, 0.0
        %v976 = vmul.f32 %v972, %v972
        %977 = vadd.xlane.f32.xlu0 %v976
        %v978 = vpop.xlane.xlu0 %977
        %v979 = vadd.f32 %v978, 0.0
        %s980 = scalar_lea.vmem %s288, 1 [#allocation2]
        %v981 = vld [vmem:[%s980] ss:$8 sm:$0x3]
        %s982 = scalar_lea.vmem %s288, 17 [#allocation2]
        %v983 = vld [vmem:[%s982] ss:$8 sm:$0x3]
        %s984 = scalar_lea.vmem %s288, 33 [#allocation2]
        %v985 = vld [vmem:[%s984] ss:$8 sm:$0x3]
        %s986 = scalar_lea.vmem %s288, 49 [#allocation2]
        %v987 = vld [vmem:[%s986] ss:$8 sm:$0x3]
        %v992 = vcombine.low %v981, %v983
        %v993 = vcombine.low %v985, %v987
        %v995 = vunpack.c.l.s4 1966171168
        %v996 = vunpack.c.0.s8 %v995
        %v997 = vlaneseq
        %v998 = vshrl.u32 %v997, 7
        %v999 = vsub.s32 %v996, %v998
        %v1000 = vrot.slane %v992, %v999
        %v1002 = vunpack.c.l.s4 1966171168
        %v1003 = vunpack.c.0.s8 %v1002
        %v1004 = vlaneseq
        %v1005 = vshrl.u32 %v1004, 7
        %v1006 = vsub.s32 %v1003, %v1005
        %v1007 = vrot.slane %v993, %v1006
        %v1008 = vcombine.low %v1000, %v1007
        %v1009 = vcombine.high %v1000, %v1007
        %v1011 = vunpack.c.l.s4 1966171168
        %v1012 = vunpack.c.0.s8 %v1011
        %v1013 = vlaneseq
        %v1014 = vshrl.u32 %v1013, 7
        %v1015 = vsub.s32 %v1012, %v1014
        %v1016 = vrot.slane %v1008, %v1015
        %v1018 = vunpack.c.l.s4 1966171168
        %v1019 = vunpack.c.0.s8 %v1018
        %v1020 = vlaneseq
        %v1021 = vshrl.u32 %v1020, 7
        %v1022 = vsub.s32 %v1019, %v1021
        %v1023 = vrot.slane %v1009, %v1022
        %1024 = vrot.lane.b32.xlu0 %v1016, 127
        %v1025 = vpop.permute.xlu0 %1024
        %1026 = vrot.lane.b32.xlu0 %v1023, 127
        %v1027 = vpop.permute.xlu0 %1026
        %v1028 = vsel %vm404, %v1025, %v1027
        %v1029 = vsel %vm410, %v1028, 0
        %1031 = vmatprep.subr.mxu0 0.0
        %1032 = vmatpush1.msra.mxu0 %v1029
        %1033 = vmatprep.subr.mxu0 0.0
        %1034 = vmatpush1.msra.mxu0 0.0
        %1035 = vmatprep.subr.mxu0 0.0
        %1036 = vmatpush1.msra.mxu0 0.0
        %1037 = vmatprep.subr.mxu0 0.0
        %1038 = vmatpush1.msra.mxu0 0.0
        %1039 = vmatprep.subr.mxu0 0.0
        %1040 = vmatpush1.msra.mxu0 0.0
        %1041 = vmatprep.subr.mxu0 0.0
        %1042 = vmatpush1.msra.mxu0 0.0
        %1043 = vmatprep.subr.mxu0 0.0
        %1044 = vmatpush1.msra.mxu0 0.0
        %1045 = vmatprep.subr.mxu0 0.0
        %1046 = vmatpush1.msra.mxu0 0.0
        %1047 = vmatprep.subr.mxu0 0.0
        %1048 = vmatpush1.msra.mxu0 0.0
        %1049 = vmatprep.subr.mxu0 0.0
        %1050 = vmatpush1.msra.mxu0 0.0
        %1051 = vmatprep.subr.mxu0 0.0
        %1052 = vmatpush1.msra.mxu0 0.0
        %1053 = vmatprep.subr.mxu0 0.0
        %1054 = vmatpush1.msra.mxu0 0.0
        %1055 = vmatprep.subr.mxu0 0.0
        %1056 = vmatpush1.msra.mxu0 0.0
        %1057 = vmatprep.subr.mxu0 0.0
        %1058 = vmatpush1.msra.mxu0 0.0
        %1059 = vmatprep.subr.mxu0 0.0
        %1060 = vmatpush1.msra.mxu0 0.0
        %1061 = vmatprep.subr.mxu0 0.0
        %1062 = vmatpush1.msra.mxu0 0.0
        %1063 = vmatprep.subr.mxu0 0.0
        %1064 = vmatpush1.msra.mxu0 0.0
        %1065 = vmatprep.subr.mxu0 0.0
        %1066 = vmatpush1.msra.mxu0 0.0
        %1067 = vmatprep.subr.mxu0 0.0
        %1068 = vmatpush1.msra.mxu0 0.0
        %1069 = vmatprep.subr.mxu0 0.0
        %1070 = vmatpush1.msra.mxu0 0.0
        %1071 = vmatprep.subr.mxu0 0.0
        %1072 = vmatpush1.msra.mxu0 0.0
        %1073 = vmatprep.subr.mxu0 0.0
        %1074 = vmatpush1.msra.mxu0 0.0
        %1075 = vmatprep.subr.mxu0 0.0
        %1076 = vmatpush1.msra.mxu0 0.0
        %1077 = vmatprep.subr.mxu0 0.0
        %1078 = vmatpush1.msra.mxu0 0.0
        %1079 = vmatprep.subr.mxu0 0.0
        %1080 = vmatpush1.msra.mxu0 0.0
        %1081 = vmatprep.subr.mxu0 0.0
        %1082 = vmatpush1.msra.mxu0 0.0
        %1083 = vmatprep.subr.mxu0 0.0
        %1084 = vmatpush1.msra.mxu0 0.0
        %1085 = vmatprep.subr.mxu0 0.0
        %1086 = vmatpush1.msra.mxu0 0.0
        %1087 = vmatprep.subr.mxu0 0.0
        %1088 = vmatpush1.msra.mxu0 0.0
        %1089 = vmatprep.subr.mxu0 0.0
        %1090 = vmatpush1.msra.mxu0 0.0
        %1091 = vmatprep.subr.mxu0 0.0
        %1092 = vmatpush1.msra.mxu0 0.0
        %1093 = vmatprep.subr.mxu0 0.0
        %1094 = vmatpush1.msra.mxu0 0.0
        %1095 = vmatprep.mubr.f32.mxu0 0.0
        %1096 = vmatmul.mubr.f32.gmra.mrb[0].mxu0 %v408
        %v1097 = vpop.f32.mrb[0].mxu0
        %v1098 = vadd.f32 0.0, %v1097
        %v1099 = vpop.f32.mrb[0].mxu0
        %1100 = vdwg.mxu0
        %v1101 = vsel %vm410, %v1016, 0
        %1103 = vmatprep.subr.mxu0 0.0
        %1104 = vmatpush1.msra.mxu0 %v1101
        %1105 = vmatprep.subr.mxu0 0.0
        %1106 = vmatpush1.msra.mxu0 0.0
        %1107 = vmatprep.subr.mxu0 0.0
        %1108 = vmatpush1.msra.mxu0 0.0
        %1109 = vmatprep.subr.mxu0 0.0
        %1110 = vmatpush1.msra.mxu0 0.0
        %1111 = vmatprep.subr.mxu0 0.0
        %1112 = vmatpush1.msra.mxu0 0.0
        %1113 = vmatprep.subr.mxu0 0.0
        %1114 = vmatpush1.msra.mxu0 0.0
        %1115 = vmatprep.subr.mxu0 0.0
        %1116 = vmatpush1.msra.mxu0 0.0
        %1117 = vmatprep.subr.mxu0 0.0
        %1118 = vmatpush1.msra.mxu0 0.0
        %1119 = vmatprep.subr.mxu0 0.0
        %1120 = vmatpush1.msra.mxu0 0.0
        %1121 = vmatprep.subr.mxu0 0.0
        %1122 = vmatpush1.msra.mxu0 0.0
        %1123 = vmatprep.subr.mxu0 0.0
        %1124 = vmatpush1.msra.mxu0 0.0
        %1125 = vmatprep.subr.mxu0 0.0
        %1126 = vmatpush1.msra.mxu0 0.0
        %1127 = vmatprep.subr.mxu0 0.0
        %1128 = vmatpush1.msra.mxu0 0.0
        %1129 = vmatprep.subr.mxu0 0.0
        %1130 = vmatpush1.msra.mxu0 0.0
        %1131 = vmatprep.subr.mxu0 0.0
        %1132 = vmatpush1.msra.mxu0 0.0
        %1133 = vmatprep.subr.mxu0 0.0
        %1134 = vmatpush1.msra.mxu0 0.0
        %1135 = vmatprep.subr.mxu0 0.0
        %1136 = vmatpush1.msra.mxu0 0.0
        %1137 = vmatprep.subr.mxu0 0.0
        %1138 = vmatpush1.msra.mxu0 0.0
        %1139 = vmatprep.subr.mxu0 0.0
        %1140 = vmatpush1.msra.mxu0 0.0
        %1141 = vmatprep.subr.mxu0 0.0
        %1142 = vmatpush1.msra.mxu0 0.0
        %1143 = vmatprep.subr.mxu0 0.0
        %1144 = vmatpush1.msra.mxu0 0.0
        %1145 = vmatprep.subr.mxu0 0.0
        %1146 = vmatpush1.msra.mxu0 0.0
        %1147 = vmatprep.subr.mxu0 0.0
        %1148 = vmatpush1.msra.mxu0 0.0
        %1149 = vmatprep.subr.mxu0 0.0
        %1150 = vmatpush1.msra.mxu0 0.0
        %1151 = vmatprep.subr.mxu0 0.0
        %1152 = vmatpush1.msra.mxu0 0.0
        %1153 = vmatprep.subr.mxu0 0.0
        %1154 = vmatpush1.msra.mxu0 0.0
        %1155 = vmatprep.subr.mxu0 0.0
        %1156 = vmatpush1.msra.mxu0 0.0
        %1157 = vmatprep.subr.mxu0 0.0
        %1158 = vmatpush1.msra.mxu0 0.0
        %1159 = vmatprep.subr.mxu0 0.0
        %1160 = vmatpush1.msra.mxu0 0.0
        %1161 = vmatprep.subr.mxu0 0.0
        %1162 = vmatpush1.msra.mxu0 0.0
        %1163 = vmatprep.subr.mxu0 0.0
        %1164 = vmatpush1.msra.mxu0 0.0
        %1165 = vmatprep.subr.mxu0 0.0
        %1166 = vmatpush1.msra.mxu0 0.0
        %1167 = vmatprep.mubr.f32.mxu0 0.0
        %1168 = vmatmul.mubr.f32.gmra.mrb[0].mxu0 %v484
        %v1169 = vpop.f32.mrb[0].mxu0
        %v1170 = vadd.f32 %v1098, %v1169
        %v1171 = vpop.f32.mrb[0].mxu0
        %1172 = vdwg.mxu0
        %s1173 = scalar_lea.vmem %s297, 1 [#allocation4]
        %v1174 = vld [vmem:[%s1173] ss:$8 sm:$0x3]
        %s1175 = scalar_lea.vmem %s297, 17 [#allocation4]
        %v1176 = vld [vmem:[%s1175] ss:$8 sm:$0x3]
        %s1177 = scalar_lea.vmem %s297, 33 [#allocation4]
        %v1178 = vld [vmem:[%s1177] ss:$8 sm:$0x3]
        %s1179 = scalar_lea.vmem %s297, 49 [#allocation4]
        %v1180 = vld [vmem:[%s1179] ss:$8 sm:$0x3]
        %v1185 = vcombine.low %v1174, %v1176
        %v1186 = vcombine.low %v1178, %v1180
        %v1188 = vunpack.c.l.s4 1966171168
        %v1189 = vunpack.c.0.s8 %v1188
        %v1190 = vlaneseq
        %v1191 = vshrl.u32 %v1190, 7
        %v1192 = vsub.s32 %v1189, %v1191
        %v1193 = vrot.slane %v1185, %v1192
        %v1195 = vunpack.c.l.s4 1966171168
        %v1196 = vunpack.c.0.s8 %v1195
        %v1197 = vlaneseq
        %v1198 = vshrl.u32 %v1197, 7
        %v1199 = vsub.s32 %v1196, %v1198
        %v1200 = vrot.slane %v1186, %v1199
        %v1201 = vcombine.low %v1193, %v1200
        %v1203 = vunpack.c.l.s4 1966171168
        %v1204 = vunpack.c.0.s8 %v1203
        %v1205 = vlaneseq
        %v1206 = vshrl.u32 %v1205, 7
        %v1207 = vsub.s32 %v1204, %v1206
        %v1208 = vrot.slane %v1201, %v1207
        %v1209 = vsel %vm410, %v1208, 0
        %1211 = vmatprep.subr.mxu0 0.0
        %1212 = vmatpush1.msra.mxu0 %v1209
        %1213 = vmatprep.subr.mxu0 0.0
        %1214 = vmatpush1.msra.mxu0 0.0
        %1215 = vmatprep.subr.mxu0 0.0
        %1216 = vmatpush1.msra.mxu0 0.0
        %1217 = vmatprep.subr.mxu0 0.0
        %1218 = vmatpush1.msra.mxu0 0.0
        %1219 = vmatprep.subr.mxu0 0.0
        %1220 = vmatpush1.msra.mxu0 0.0
        %1221 = vmatprep.subr.mxu0 0.0
        %1222 = vmatpush1.msra.mxu0 0.0
        %1223 = vmatprep.subr.mxu0 0.0
        %1224 = vmatpush1.msra.mxu0 0.0
        %1225 = vmatprep.subr.mxu0 0.0
        %1226 = vmatpush1.msra.mxu0 0.0
        %1227 = vmatprep.subr.mxu0 0.0
        %1228 = vmatpush1.msra.mxu0 0.0
        %1229 = vmatprep.subr.mxu0 0.0
        %1230 = vmatpush1.msra.mxu0 0.0
        %1231 = vmatprep.subr.mxu0 0.0
        %1232 = vmatpush1.msra.mxu0 0.0
        %1233 = vmatprep.subr.mxu0 0.0
        %1234 = vmatpush1.msra.mxu0 0.0
        %1235 = vmatprep.subr.mxu0 0.0
        %1236 = vmatpush1.msra.mxu0 0.0
        %1237 = vmatprep.subr.mxu0 0.0
        %1238 = vmatpush1.msra.mxu0 0.0
        %1239 = vmatprep.subr.mxu0 0.0
        %1240 = vmatpush1.msra.mxu0 0.0
        %1241 = vmatprep.subr.mxu0 0.0
        %1242 = vmatpush1.msra.mxu0 0.0
        %1243 = vmatprep.subr.mxu0 0.0
        %1244 = vmatpush1.msra.mxu0 0.0
        %1245 = vmatprep.subr.mxu0 0.0
        %1246 = vmatpush1.msra.mxu0 0.0
        %1247 = vmatprep.subr.mxu0 0.0
        %1248 = vmatpush1.msra.mxu0 0.0
        %1249 = vmatprep.subr.mxu0 0.0
        %1250 = vmatpush1.msra.mxu0 0.0
        %1251 = vmatprep.subr.mxu0 0.0
        %1252 = vmatpush1.msra.mxu0 0.0
        %1253 = vmatprep.subr.mxu0 0.0
        %1254 = vmatpush1.msra.mxu0 0.0
        %1255 = vmatprep.subr.mxu0 0.0
        %1256 = vmatpush1.msra.mxu0 0.0
        %1257 = vmatprep.subr.mxu0 0.0
        %1258 = vmatpush1.msra.mxu0 0.0
        %1259 = vmatprep.subr.mxu0 0.0
        %1260 = vmatpush1.msra.mxu0 0.0
        %1261 = vmatprep.subr.mxu0 0.0
        %1262 = vmatpush1.msra.mxu0 0.0
        %1263 = vmatprep.subr.mxu0 0.0
        %1264 = vmatpush1.msra.mxu0 0.0
        %1265 = vmatprep.subr.mxu0 0.0
        %1266 = vmatpush1.msra.mxu0 0.0
        %1267 = vmatprep.subr.mxu0 0.0
        %1268 = vmatpush1.msra.mxu0 0.0
        %1269 = vmatprep.subr.mxu0 0.0
        %1270 = vmatpush1.msra.mxu0 0.0
        %1271 = vmatprep.subr.mxu0 0.0
        %1272 = vmatpush1.msra.mxu0 0.0
        %1273 = vmatprep.subr.mxu0 0.0
        %1274 = vmatpush1.msra.mxu0 0.0
        %1275 = vmatprep.mubr.f32.mxu0 0.0
        %1276 = vmatmul.mubr.f32.gmra.mrb[0].mxu0 %v596
        %v1277 = vpop.f32.mrb[0].mxu0
        %v1278 = vadd.f32 0.0, %v1277
        %v1279 = vpop.f32.mrb[0].mxu0
        %1280 = vdwg.mxu0
        %v1281 = vadd.f32 %v1170, %v1278
        %v1282 = vcombine.high %v1193, %v1200
        %v1284 = vunpack.c.l.s4 1966171168
        %v1285 = vunpack.c.0.s8 %v1284
        %v1286 = vlaneseq
        %v1287 = vshrl.u32 %v1286, 7
        %v1288 = vsub.s32 %v1285, %v1287
        %v1289 = vrot.slane %v1282, %v1288
        %1290 = vrot.lane.b32.xlu0 %v1208, 127
        %v1291 = vpop.permute.xlu0 %1290
        %1292 = vrot.lane.b32.xlu0 %v1289, 127
        %v1293 = vpop.permute.xlu0 %1292
        %v1294 = vsel %vm404, %v1291, %v1293
        %v1295 = vsel %vm410, %v1294, 0
        %1297 = vmatprep.subr.mxu0 0.0
        %1298 = vmatpush1.msra.mxu0 %v1295
        %1299 = vmatprep.subr.mxu0 0.0
        %1300 = vmatpush1.msra.mxu0 0.0
        %1301 = vmatprep.subr.mxu0 0.0
        %1302 = vmatpush1.msra.mxu0 0.0
        %1303 = vmatprep.subr.mxu0 0.0
        %1304 = vmatpush1.msra.mxu0 0.0
        %1305 = vmatprep.subr.mxu0 0.0
        %1306 = vmatpush1.msra.mxu0 0.0
        %1307 = vmatprep.subr.mxu0 0.0
        %1308 = vmatpush1.msra.mxu0 0.0
        %1309 = vmatprep.subr.mxu0 0.0
        %1310 = vmatpush1.msra.mxu0 0.0
        %1311 = vmatprep.subr.mxu0 0.0
        %1312 = vmatpush1.msra.mxu0 0.0
        %1313 = vmatprep.subr.mxu0 0.0
        %1314 = vmatpush1.msra.mxu0 0.0
        %1315 = vmatprep.subr.mxu0 0.0
        %1316 = vmatpush1.msra.mxu0 0.0
        %1317 = vmatprep.subr.mxu0 0.0
        %1318 = vmatpush1.msra.mxu0 0.0
        %1319 = vmatprep.subr.mxu0 0.0
        %1320 = vmatpush1.msra.mxu0 0.0
        %1321 = vmatprep.subr.mxu0 0.0
        %1322 = vmatpush1.msra.mxu0 0.0
        %1323 = vmatprep.subr.mxu0 0.0
        %1324 = vmatpush1.msra.mxu0 0.0
        %1325 = vmatprep.subr.mxu0 0.0
        %1326 = vmatpush1.msra.mxu0 0.0
        %1327 = vmatprep.subr.mxu0 0.0
        %1328 = vmatpush1.msra.mxu0 0.0
        %1329 = vmatprep.subr.mxu0 0.0
        %1330 = vmatpush1.msra.mxu0 0.0
        %1331 = vmatprep.subr.mxu0 0.0
        %1332 = vmatpush1.msra.mxu0 0.0
        %1333 = vmatprep.subr.mxu0 0.0
        %1334 = vmatpush1.msra.mxu0 0.0
        %1335 = vmatprep.subr.mxu0 0.0
        %1336 = vmatpush1.msra.mxu0 0.0
        %1337 = vmatprep.subr.mxu0 0.0
        %1338 = vmatpush1.msra.mxu0 0.0
        %1339 = vmatprep.subr.mxu0 0.0
        %1340 = vmatpush1.msra.mxu0 0.0
        %1341 = vmatprep.subr.mxu0 0.0
        %1342 = vmatpush1.msra.mxu0 0.0
        %1343 = vmatprep.subr.mxu0 0.0
        %1344 = vmatpush1.msra.mxu0 0.0
        %1345 = vmatprep.subr.mxu0 0.0
        %1346 = vmatpush1.msra.mxu0 0.0
        %1347 = vmatprep.subr.mxu0 0.0
        %1348 = vmatpush1.msra.mxu0 0.0
        %1349 = vmatprep.subr.mxu0 0.0
        %1350 = vmatpush1.msra.mxu0 0.0
        %1351 = vmatprep.subr.mxu0 0.0
        %1352 = vmatpush1.msra.mxu0 0.0
        %1353 = vmatprep.subr.mxu0 0.0
        %1354 = vmatpush1.msra.mxu0 0.0
        %1355 = vmatprep.subr.mxu0 0.0
        %1356 = vmatpush1.msra.mxu0 0.0
        %1357 = vmatprep.subr.mxu0 0.0
        %1358 = vmatpush1.msra.mxu0 0.0
        %1359 = vmatprep.subr.mxu0 0.0
        %1360 = vmatpush1.msra.mxu0 0.0
        %1361 = vmatprep.mubr.f32.mxu0 0.0
        %1362 = vmatmul.mubr.f32.gmra.mrb[0].mxu0 %v687
        %v1363 = vpop.f32.mrb[0].mxu0
        %v1364 = vadd.f32 0.0, %v1363
        %v1365 = vpop.f32.mrb[0].mxu0
        %1366 = vdwg.mxu0
        %v1367 = vadd.f32 %v1281, %v1364
        %s1368 = scalar_lea.vmem %s306, 1 [#allocation6]
        %v1369 = vld [vmem:[%s1368] ss:$8 sm:$0x3]
        %s1370 = scalar_lea.vmem %s306, 17 [#allocation6]
        %v1371 = vld [vmem:[%s1370] ss:$8 sm:$0x3]
        %s1372 = scalar_lea.vmem %s306, 33 [#allocation6]
        %v1373 = vld [vmem:[%s1372] ss:$8 sm:$0x3]
        %s1374 = scalar_lea.vmem %s306, 49 [#allocation6]
        %v1375 = vld [vmem:[%s1374] ss:$8 sm:$0x3]
        %v1380 = vcombine.low %v1369, %v1371
        %v1381 = vcombine.low %v1373, %v1375
        %v1383 = vunpack.c.l.s4 1966171168
        %v1384 = vunpack.c.0.s8 %v1383
        %v1385 = vlaneseq
        %v1386 = vshrl.u32 %v1385, 7
        %v1387 = vsub.s32 %v1384, %v1386
        %v1388 = vrot.slane %v1380, %v1387
        %v1390 = vunpack.c.l.s4 1966171168
        %v1391 = vunpack.c.0.s8 %v1390
        %v1392 = vlaneseq
        %v1393 = vshrl.u32 %v1392, 7
        %v1394 = vsub.s32 %v1391, %v1393
        %v1395 = vrot.slane %v1381, %v1394
        %v1396 = vcombine.low %v1388, %v1395
        %v1398 = vunpack.c.l.s4 1966171168
        %v1399 = vunpack.c.0.s8 %v1398
        %v1400 = vlaneseq
        %v1401 = vshrl.u32 %v1400, 7
        %v1402 = vsub.s32 %v1399, %v1401
        %v1403 = vrot.slane %v1396, %v1402
        %v1404 = vsel %vm410, %v1403, 0
        %1406 = vmatprep.subr.mxu0 0.0
        %1407 = vmatpush1.msra.mxu0 %v1404
        %1408 = vmatprep.subr.mxu0 0.0
        %1409 = vmatpush1.msra.mxu0 0.0
        %1410 = vmatprep.subr.mxu0 0.0
        %1411 = vmatpush1.msra.mxu0 0.0
        %1412 = vmatprep.subr.mxu0 0.0
        %1413 = vmatpush1.msra.mxu0 0.0
        %1414 = vmatprep.subr.mxu0 0.0
        %1415 = vmatpush1.msra.mxu0 0.0
        %1416 = vmatprep.subr.mxu0 0.0
        %1417 = vmatpush1.msra.mxu0 0.0
        %1418 = vmatprep.subr.mxu0 0.0
        %1419 = vmatpush1.msra.mxu0 0.0
        %1420 = vmatprep.subr.mxu0 0.0
        %1421 = vmatpush1.msra.mxu0 0.0
        %1422 = vmatprep.subr.mxu0 0.0
        %1423 = vmatpush1.msra.mxu0 0.0
        %1424 = vmatprep.subr.mxu0 0.0
        %1425 = vmatpush1.msra.mxu0 0.0
        %1426 = vmatprep.subr.mxu0 0.0
        %1427 = vmatpush1.msra.mxu0 0.0
        %1428 = vmatprep.subr.mxu0 0.0
        %1429 = vmatpush1.msra.mxu0 0.0
        %1430 = vmatprep.subr.mxu0 0.0
        %1431 = vmatpush1.msra.mxu0 0.0
        %1432 = vmatprep.subr.mxu0 0.0
        %1433 = vmatpush1.msra.mxu0 0.0
        %1434 = vmatprep.subr.mxu0 0.0
        %1435 = vmatpush1.msra.mxu0 0.0
        %1436 = vmatprep.subr.mxu0 0.0
        %1437 = vmatpush1.msra.mxu0 0.0
        %1438 = vmatprep.subr.mxu0 0.0
        %1439 = vmatpush1.msra.mxu0 0.0
        %1440 = vmatprep.subr.mxu0 0.0
        %1441 = vmatpush1.msra.mxu0 0.0
        %1442 = vmatprep.subr.mxu0 0.0
        %1443 = vmatpush1.msra.mxu0 0.0
        %1444 = vmatprep.subr.mxu0 0.0
        %1445 = vmatpush1.msra.mxu0 0.0
        %1446 = vmatprep.subr.mxu0 0.0
        %1447 = vmatpush1.msra.mxu0 0.0
        %1448 = vmatprep.subr.mxu0 0.0
        %1449 = vmatpush1.msra.mxu0 0.0
        %1450 = vmatprep.subr.mxu0 0.0
        %1451 = vmatpush1.msra.mxu0 0.0
        %1452 = vmatprep.subr.mxu0 0.0
        %1453 = vmatpush1.msra.mxu0 0.0
        %1454 = vmatprep.subr.mxu0 0.0
        %1455 = vmatpush1.msra.mxu0 0.0
        %1456 = vmatprep.subr.mxu0 0.0
        %1457 = vmatpush1.msra.mxu0 0.0
        %1458 = vmatprep.subr.mxu0 0.0
        %1459 = vmatpush1.msra.mxu0 0.0
        %1460 = vmatprep.subr.mxu0 0.0
        %1461 = vmatpush1.msra.mxu0 0.0
        %1462 = vmatprep.subr.mxu0 0.0
        %1463 = vmatpush1.msra.mxu0 0.0
        %1464 = vmatprep.subr.mxu0 0.0
        %1465 = vmatpush1.msra.mxu0 0.0
        %1466 = vmatprep.subr.mxu0 0.0
        %1467 = vmatpush1.msra.mxu0 0.0
        %1468 = vmatprep.subr.mxu0 0.0
        %1469 = vmatpush1.msra.mxu0 0.0
        %1470 = vmatprep.mubr.f32.mxu0 0.0
        %1471 = vmatmul.mubr.f32.gmra.mrb[0].mxu0 %v800
        %v1472 = vpop.f32.mrb[0].mxu0
        %v1473 = vadd.f32 0.0, %v1472
        %v1474 = vpop.f32.mrb[0].mxu0
        %1475 = vdwg.mxu0
        %v1476 = vadd.f32 %v1367, %v1473
        %v1477 = vcombine.high %v1388, %v1395
        %v1479 = vunpack.c.l.s4 1966171168
        %v1480 = vunpack.c.0.s8 %v1479
        %v1481 = vlaneseq
        %v1482 = vshrl.u32 %v1481, 7
        %v1483 = vsub.s32 %v1480, %v1482
        %v1484 = vrot.slane %v1477, %v1483
        %1485 = vrot.lane.b32.xlu0 %v1403, 127
        %v1486 = vpop.permute.xlu0 %1485
        %1487 = vrot.lane.b32.xlu0 %v1484, 127
        %v1488 = vpop.permute.xlu0 %1487
        %v1489 = vsel %vm404, %v1486, %v1488
        %v1490 = vsel %vm410, %v1489, 0
        %1492 = vmatprep.subr.mxu0 0.0
        %1493 = vmatpush1.msra.mxu0 %v1490
        %1494 = vmatprep.subr.mxu0 0.0
        %1495 = vmatpush1.msra.mxu0 0.0
        %1496 = vmatprep.subr.mxu0 0.0
        %1497 = vmatpush1.msra.mxu0 0.0
        %1498 = vmatprep.subr.mxu0 0.0
        %1499 = vmatpush1.msra.mxu0 0.0
        %1500 = vmatprep.subr.mxu0 0.0
        %1501 = vmatpush1.msra.mxu0 0.0
        %1502 = vmatprep.subr.mxu0 0.0
        %1503 = vmatpush1.msra.mxu0 0.0
        %1504 = vmatprep.subr.mxu0 0.0
        %1505 = vmatpush1.msra.mxu0 0.0
        %1506 = vmatprep.subr.mxu0 0.0
        %1507 = vmatpush1.msra.mxu0 0.0
        %1508 = vmatprep.subr.mxu0 0.0
        %1509 = vmatpush1.msra.mxu0 0.0
        %1510 = vmatprep.subr.mxu0 0.0
        %1511 = vmatpush1.msra.mxu0 0.0
        %1512 = vmatprep.subr.mxu0 0.0
        %1513 = vmatpush1.msra.mxu0 0.0
        %1514 = vmatprep.subr.mxu0 0.0
        %1515 = vmatpush1.msra.mxu0 0.0
        %1516 = vmatprep.subr.mxu0 0.0
        %1517 = vmatpush1.msra.mxu0 0.0
        %1518 = vmatprep.subr.mxu0 0.0
        %1519 = vmatpush1.msra.mxu0 0.0
        %1520 = vmatprep.subr.mxu0 0.0
        %1521 = vmatpush1.msra.mxu0 0.0
        %1522 = vmatprep.subr.mxu0 0.0
        %1523 = vmatpush1.msra.mxu0 0.0
        %1524 = vmatprep.subr.mxu0 0.0
        %1525 = vmatpush1.msra.mxu0 0.0
        %1526 = vmatprep.subr.mxu0 0.0
        %1527 = vmatpush1.msra.mxu0 0.0
        %1528 = vmatprep.subr.mxu0 0.0
        %1529 = vmatpush1.msra.mxu0 0.0
        %1530 = vmatprep.subr.mxu0 0.0
        %1531 = vmatpush1.msra.mxu0 0.0
        %1532 = vmatprep.subr.mxu0 0.0
        %1533 = vmatpush1.msra.mxu0 0.0
        %1534 = vmatprep.subr.mxu0 0.0
        %1535 = vmatpush1.msra.mxu0 0.0
        %1536 = vmatprep.subr.mxu0 0.0
        %1537 = vmatpush1.msra.mxu0 0.0
        %1538 = vmatprep.subr.mxu0 0.0
        %1539 = vmatpush1.msra.mxu0 0.0
        %1540 = vmatprep.subr.mxu0 0.0
        %1541 = vmatpush1.msra.mxu0 0.0
        %1542 = vmatprep.subr.mxu0 0.0
        %1543 = vmatpush1.msra.mxu0 0.0
        %1544 = vmatprep.subr.mxu0 0.0
        %1545 = vmatpush1.msra.mxu0 0.0
        %1546 = vmatprep.subr.mxu0 0.0
        %1547 = vmatpush1.msra.mxu0 0.0
        %1548 = vmatprep.subr.mxu0 0.0
        %1549 = vmatpush1.msra.mxu0 0.0
        %1550 = vmatprep.subr.mxu0 0.0
        %1551 = vmatpush1.msra.mxu0 0.0
        %1552 = vmatprep.subr.mxu0 0.0
        %1553 = vmatpush1.msra.mxu0 0.0
        %1554 = vmatprep.subr.mxu0 0.0
        %1555 = vmatpush1.msra.mxu0 0.0
        %1556 = vmatprep.mubr.f32.mxu0 0.0
        %1557 = vmatmul.mubr.f32.gmra.mrb[0].mxu0 %v891
        %v1558 = vpop.f32.mrb[0].mxu0
        %v1559 = vadd.f32 0.0, %v1558
        %v1560 = vpop.f32.mrb[0].mxu0
        %1561 = vdwg.mxu0
        %v1562 = vadd.f32 %v1476, %v1559
        %v1563 = vadd.f32 %v1562, %v970
        %1564 = vadd.xlane.f32.xlu0 %v1563
        %v1565 = vpop.xlane.xlu0 %1564
        %v1566 = vadd.f32 %v975, %v1565
        %v1567 = vmul.f32 %v1563, %v1563
        %1568 = vadd.xlane.f32.xlu0 %v1567
        %v1569 = vpop.xlane.xlu0 %1568
        %v1570 = vadd.f32 %v979, %v1569
        %s1571 = scalar_lea.vmem %s288, 2 [#allocation2]
        %v1572 = vld [vmem:[%s1571] ss:$8 sm:$0x3]
        %s1573 = scalar_lea.vmem %s288, 18 [#allocation2]
        %v1574 = vld [vmem:[%s1573] ss:$8 sm:$0x3]
        %s1575 = scalar_lea.vmem %s288, 34 [#allocation2]
        %v1576 = vld [vmem:[%s1575] ss:$8 sm:$0x3]
        %s1577 = scalar_lea.vmem %s288, 50 [#allocation2]
        %v1578 = vld [vmem:[%s1577] ss:$8 sm:$0x3]
        %v1583 = vcombine.low %v1572, %v1574
        %v1584 = vcombine.low %v1576, %v1578
        %v1586 = vunpack.c.l.s4 1966171168
        %v1587 = vunpack.c.0.s8 %v1586
        %v1588 = vlaneseq
        %v1589 = vshrl.u32 %v1588, 7
        %v1590 = vsub.s32 %v1587, %v1589
        %v1591 = vrot.slane %v1583, %v1590
        %v1593 = vunpack.c.l.s4 1966171168
        %v1594 = vunpack.c.0.s8 %v1593
        %v1595 = vlaneseq
        %v1596 = vshrl.u32 %v1595, 7
        %v1597 = vsub.s32 %v1594, %v1596
        %v1598 = vrot.slane %v1584, %v1597
        %v1599 = vcombine.low %v1591, %v1598
        %v1600 = vcombine.high %v1591, %v1598
        %v1602 = vunpack.c.l.s4 1966171168
        %v1603 = vunpack.c.0.s8 %v1602
        %v1604 = vlaneseq
        %v1605 = vshrl.u32 %v1604, 7
        %v1606 = vsub.s32 %v1603, %v1605
        %v1607 = vrot.slane %v1599, %v1606
        %v1609 = vunpack.c.l.s4 1966171168
        %v1610 = vunpack.c.0.s8 %v1609
        %v1611 = vlaneseq
        %v1612 = vshrl.u32 %v1611, 7
        %v1613 = vsub.s32 %v1610, %v1612
        %v1614 = vrot.slane %v1600, %v1613
        %1615 = vrot.lane.b32.xlu0 %v1607, 127
        %v1616 = vpop.permute.xlu0 %1615
        %1617 = vrot.lane.b32.xlu0 %v1614, 127
        %v1618 = vpop.permute.xlu0 %1617
        %v1619 = vsel %vm404, %v1616, %v1618
        %v1620 = vsel %vm410, %v1619, 0
        %1622 = vmatprep.subr.mxu0 0.0
        %1623 = vmatpush1.msra.mxu0 %v1620
        %1624 = vmatprep.subr.mxu0 0.0
        %1625 = vmatpush1.msra.mxu0 0.0
        %1626 = vmatprep.subr.mxu0 0.0
        %1627 = vmatpush1.msra.mxu0 0.0
        %1628 = vmatprep.subr.mxu0 0.0
        %1629 = vmatpush1.msra.mxu0 0.0
        %1630 = vmatprep.subr.mxu0 0.0
        %1631 = vmatpush1.msra.mxu0 0.0
        %1632 = vmatprep.subr.mxu0 0.0
        %1633 = vmatpush1.msra.mxu0 0.0
        %1634 = vmatprep.subr.mxu0 0.0
        %1635 = vmatpush1.msra.mxu0 0.0
        %1636 = vmatprep.subr.mxu0 0.0
        %1637 = vmatpush1.msra.mxu0 0.0
        %1638 = vmatprep.subr.mxu0 0.0
        %1639 = vmatpush1.msra.mxu0 0.0
        %1640 = vmatprep.subr.mxu0 0.0
        %1641 = vmatpush1.msra.mxu0 0.0
        %1642 = vmatprep.subr.mxu0 0.0
        %1643 = vmatpush1.msra.mxu0 0.0
        %1644 = vmatprep.subr.mxu0 0.0
        %1645 = vmatpush1.msra.mxu0 0.0
        %1646 = vmatprep.subr.mxu0 0.0
        %1647 = vmatpush1.msra.mxu0 0.0
        %1648 = vmatprep.subr.mxu0 0.0
        %1649 = vmatpush1.msra.mxu0 0.0
        %1650 = vmatprep.subr.mxu0 0.0
        %1651 = vmatpush1.msra.mxu0 0.0
        %1652 = vmatprep.subr.mxu0 0.0
        %1653 = vmatpush1.msra.mxu0 0.0
        %1654 = vmatprep.subr.mxu0 0.0
        %1655 = vmatpush1.msra.mxu0 0.0
        %1656 = vmatprep.subr.mxu0 0.0
        %1657 = vmatpush1.msra.mxu0 0.0
        %1658 = vmatprep.subr.mxu0 0.0
        %1659 = vmatpush1.msra.mxu0 0.0
        %1660 = vmatprep.subr.mxu0 0.0
        %1661 = vmatpush1.msra.mxu0 0.0
        %1662 = vmatprep.subr.mxu0 0.0
        %1663 = vmatpush1.msra.mxu0 0.0
        %1664 = vmatprep.subr.mxu0 0.0
        %1665 = vmatpush1.msra.mxu0 0.0
        %1666 = vmatprep.subr.mxu0 0.0
        %1667 = vmatpush1.msra.mxu0 0.0
        %1668 = vmatprep.subr.mxu0 0.0
        %1669 = vmatpush1.msra.mxu0 0.0
        %1670 = vmatprep.subr.mxu0 0.0
        %1671 = vmatpush1.msra.mxu0 0.0
        %1672 = vmatprep.subr.mxu0 0.0
        %1673 = vmatpush1.msra.mxu0 0.0
        %1674 = vmatprep.subr.mxu0 0.0
        %1675 = vmatpush1.msra.mxu0 0.0
        %1676 = vmatprep.subr.mxu0 0.0
        %1677 = vmatpush1.msra.mxu0 0.0
        %1678 = vmatprep.subr.mxu0 0.0
        %1679 = vmatpush1.msra.mxu0 0.0
        %1680 = vmatprep.subr.mxu0 0.0
        %1681 = vmatpush1.msra.mxu0 0.0
        %1682 = vmatprep.subr.mxu0 0.0
        %1683 = vmatpush1.msra.mxu0 0.0
        %1684 = vmatprep.subr.mxu0 0.0
        %1685 = vmatpush1.msra.mxu0 0.0
        %1686 = vmatprep.mubr.f32.mxu0 0.0
        %1687 = vmatmul.mubr.f32.gmra.mrb[0].mxu0 %v408
        %v1688 = vpop.f32.mrb[0].mxu0
        %v1689 = vadd.f32 0.0, %v1688
        %v1690 = vpop.f32.mrb[0].mxu0
        %1691 = vdwg.mxu0
        %v1692 = vsel %vm410, %v1607, 0
        %1694 = vmatprep.subr.mxu0 0.0
        %1695 = vmatpush1.msra.mxu0 %v1692
        %1696 = vmatprep.subr.mxu0 0.0
        %1697 = vmatpush1.msra.mxu0 0.0
        %1698 = vmatprep.subr.mxu0 0.0
        %1699 = vmatpush1.msra.mxu0 0.0
        %1700 = vmatprep.subr.mxu0 0.0
        %1701 = vmatpush1.msra.mxu0 0.0
        %1702 = vmatprep.subr.mxu0 0.0
        %1703 = vmatpush1.msra.mxu0 0.0
        %1704 = vmatprep.subr.mxu0 0.0
        %1705 = vmatpush1.msra.mxu0 0.0
        %1706 = vmatprep.subr.mxu0 0.0
        %1707 = vmatpush1.msra.mxu0 0.0
        %1708 = vmatprep.subr.mxu0 0.0
        %1709 = vmatpush1.msra.mxu0 0.0
        %1710 = vmatprep.subr.mxu0 0.0
        %1711 = vmatpush1.msra.mxu0 0.0
        %1712 = vmatprep.subr.mxu0 0.0
        %1713 = vmatpush1.msra.mxu0 0.0
        %1714 = vmatprep.subr.mxu0 0.0
        %1715 = vmatpush1.msra.mxu0 0.0
        %1716 = vmatprep.subr.mxu0 0.0
        %1717 = vmatpush1.msra.mxu0 0.0
        %1718 = vmatprep.subr.mxu0 0.0
        %1719 = vmatpush1.msra.mxu0 0.0
        %1720 = vmatprep.subr.mxu0 0.0
        %1721 = vmatpush1.msra.mxu0 0.0
        %1722 = vmatprep.subr.mxu0 0.0
        %1723 = vmatpush1.msra.mxu0 0.0
        %1724 = vmatprep.subr.mxu0 0.0
        %1725 = vmatpush1.msra.mxu0 0.0
        %1726 = vmatprep.subr.mxu0 0.0
        %1727 = vmatpush1.msra.mxu0 0.0
        %1728 = vmatprep.subr.mxu0 0.0
        %1729 = vmatpush1.msra.mxu0 0.0
        %1730 = vmatprep.subr.mxu0 0.0
        %1731 = vmatpush1.msra.mxu0 0.0
        %1732 = vmatprep.subr.mxu0 0.0
        %1733 = vmatpush1.msra.mxu0 0.0
        %1734 = vmatprep.subr.mxu0 0.0
        %1735 = vmatpush1.msra.mxu0 0.0
        %1736 = vmatprep.subr.mxu0 0.0
        %1737 = vmatpush1.msra.mxu0 0.0
        %1738 = vmatprep.subr.mxu0 0.0
        %1739 = vmatpush1.msra.mxu0 0.0
        %1740 = vmatprep.subr.mxu0 0.0
        %1741 = vmatpush1.msra.mxu0 0.0
        %1742 = vmatprep.subr.mxu0 0.0
        %1743 = vmatpush1.msra.mxu0 0.0
        %1744 = vmatprep.subr.mxu0 0.0
        %1745 = vmatpush1.msra.mxu0 0.0
        %1746 = vmatprep.subr.mxu0 0.0
        %1747 = vmatpush1.msra.mxu0 0.0
        %1748 = vmatprep.subr.mxu0 0.0
        %1749 = vmatpush1.msra.mxu0 0.0
        %1750 = vmatprep.subr.mxu0 0.0
        %1751 = vmatpush1.msra.mxu0 0.0
        %1752 = vmatprep.subr.mxu0 0.0
        %1753 = vmatpush1.msra.mxu0 0.0
        %1754 = vmatprep.subr.mxu0 0.0
        %1755 = vmatpush1.msra.mxu0 0.0
        %1756 = vmatprep.subr.mxu0 0.0
        %1757 = vmatpush1.msra.mxu0 0.0
        %1758 = vmatprep.mubr.f32.mxu0 0.0
        %1759 = vmatmul.mubr.f32.gmra.mrb[0].mxu0 %v484
        %v1760 = vpop.f32.mrb[0].mxu0
        %v1761 = vadd.f32 %v1689, %v1760
        %v1762 = vpop.f32.mrb[0].mxu0
        %1763 = vdwg.mxu0
        %s1764 = scalar_lea.vmem %s297, 2 [#allocation4]
        %v1765 = vld [vmem:[%s1764] ss:$8 sm:$0x3]
        %s1766 = scalar_lea.vmem %s297, 18 [#allocation4]
        %v1767 = vld [vmem:[%s1766] ss:$8 sm:$0x3]
        %s1768 = scalar_lea.vmem %s297, 34 [#allocation4]
        %v1769 = vld [vmem:[%s1768] ss:$8 sm:$0x3]
        %s1770 = scalar_lea.vmem %s297, 50 [#allocation4]
        %v1771 = vld [vmem:[%s1770] ss:$8 sm:$0x3]
        %v1776 = vcombine.low %v1765, %v1767
        %v1777 = vcombine.low %v1769, %v1771
        %v1779 = vunpack.c.l.s4 1966171168
        %v1780 = vunpack.c.0.s8 %v1779
        %v1781 = vlaneseq
        %v1782 = vshrl.u32 %v1781, 7
        %v1783 = vsub.s32 %v1780, %v1782
        %v1784 = vrot.slane %v1776, %v1783
        %v1786 = vunpack.c.l.s4 1966171168
        %v1787 = vunpack.c.0.s8 %v1786
        %v1788 = vlaneseq
        %v1789 = vshrl.u32 %v1788, 7
        %v1790 = vsub.s32 %v1787, %v1789
        %v1791 = vrot.slane %v1777, %v1790
        %v1792 = vcombine.low %v1784, %v1791
        %v1794 = vunpack.c.l.s4 1966171168
        %v1795 = vunpack.c.0.s8 %v1794
        %v1796 = vlaneseq
        %v1797 = vshrl.u32 %v1796, 7
        %v1798 = vsub.s32 %v1795, %v1797
        %v1799 = vrot.slane %v1792, %v1798
        %v1800 = vsel %vm410, %v1799, 0
        %1802 = vmatprep.subr.mxu0 0.0
        %1803 = vmatpush1.msra.mxu0 %v1800
        %1804 = vmatprep.subr.mxu0 0.0
        %1805 = vmatpush1.msra.mxu0 0.0
        %1806 = vmatprep.subr.mxu0 0.0
        %1807 = vmatpush1.msra.mxu0 0.0
        %1808 = vmatprep.subr.mxu0 0.0
        %1809 = vmatpush1.msra.mxu0 0.0
        %1810 = vmatprep.subr.mxu0 0.0
        %1811 = vmatpush1.msra.mxu0 0.0
        %1812 = vmatprep.subr.mxu0 0.0
        %1813 = vmatpush1.msra.mxu0 0.0
        %1814 = vmatprep.subr.mxu0 0.0
        %1815 = vmatpush1.msra.mxu0 0.0
        %1816 = vmatprep.subr.mxu0 0.0
        %1817 = vmatpush1.msra.mxu0 0.0
        %1818 = vmatprep.subr.mxu0 0.0
        %1819 = vmatpush1.msra.mxu0 0.0
        %1820 = vmatprep.subr.mxu0 0.0
        %1821 = vmatpush1.msra.mxu0 0.0
        %1822 = vmatprep.subr.mxu0 0.0
        %1823 = vmatpush1.msra.mxu0 0.0
        %1824 = vmatprep.subr.mxu0 0.0
        %1825 = vmatpush1.msra.mxu0 0.0
        %1826 = vmatprep.subr.mxu0 0.0
        %1827 = vmatpush1.msra.mxu0 0.0
        %1828 = vmatprep.subr.mxu0 0.0
        %1829 = vmatpush1.msra.mxu0 0.0
        %1830 = vmatprep.subr.mxu0 0.0
        %1831 = vmatpush1.msra.mxu0 0.0
        %1832 = vmatprep.subr.mxu0 0.0
        %1833 = vmatpush1.msra.mxu0 0.0
        %1834 = vmatprep.subr.mxu0 0.0
        %1835 = vmatpush1.msra.mxu0 0.0
        %1836 = vmatprep.subr.mxu0 0.0
        %1837 = vmatpush1.msra.mxu0 0.0
        %1838 = vmatprep.subr.mxu0 0.0
        %1839 = vmatpush1.msra.mxu0 0.0
        %1840 = vmatprep.subr.mxu0 0.0
        %1841 = vmatpush1.msra.mxu0 0.0
        %1842 = vmatprep.subr.mxu0 0.0
        %1843 = vmatpush1.msra.mxu0 0.0
        %1844 = vmatprep.subr.mxu0 0.0
        %1845 = vmatpush1.msra.mxu0 0.0
        %1846 = vmatprep.subr.mxu0 0.0
        %1847 = vmatpush1.msra.mxu0 0.0
        %1848 = vmatprep.subr.mxu0 0.0
        %1849 = vmatpush1.msra.mxu0 0.0
        %1850 = vmatprep.subr.mxu0 0.0
        %1851 = vmatpush1.msra.mxu0 0.0
        %1852 = vmatprep.subr.mxu0 0.0
        %1853 = vmatpush1.msra.mxu0 0.0
        %1854 = vmatprep.subr.mxu0 0.0
        %1855 = vmatpush1.msra.mxu0 0.0
        %1856 = vmatprep.subr.mxu0 0.0
        %1857 = vmatpush1.msra.mxu0 0.0
        %1858 = vmatprep.subr.mxu0 0.0
        %1859 = vmatpush1.msra.mxu0 0.0
        %1860 = vmatprep.subr.mxu0 0.0
        %1861 = vmatpush1.msra.mxu0 0.0
        %1862 = vmatprep.subr.mxu0 0.0
        %1863 = vmatpush1.msra.mxu0 0.0
        %1864 = vmatprep.subr.mxu0 0.0
        %1865 = vmatpush1.msra.mxu0 0.0
        %1866 = vmatprep.mubr.f32.mxu0 0.0
        %1867 = vmatmul.mubr.f32.gmra.mrb[0].mxu0 %v596
        %v1868 = vpop.f32.mrb[0].mxu0
        %v1869 = vadd.f32 0.0, %v1868
        %v1870 = vpop.f32.mrb[0].mxu0
        %1871 = vdwg.mxu0
        %v1872 = vadd.f32 %v1761, %v1869
        %v1873 = vcombine.high %v1784, %v1791
        %v1875 = vunpack.c.l.s4 1966171168
        %v1876 = vunpack.c.0.s8 %v1875
        %v1877 = vlaneseq
        %v1878 = vshrl.u32 %v1877, 7
        %v1879 = vsub.s32 %v1876, %v1878
        %v1880 = vrot.slane %v1873, %v1879
        %1881 = vrot.lane.b32.xlu0 %v1799, 127
        %v1882 = vpop.permute.xlu0 %1881
        %1883 = vrot.lane.b32.xlu0 %v1880, 127
        %v1884 = vpop.permute.xlu0 %1883
        %v1885 = vsel %vm404, %v1882, %v1884
        %v1886 = vsel %vm410, %v1885, 0
        %1888 = vmatprep.subr.mxu0 0.0
        %1889 = vmatpush1.msra.mxu0 %v1886
        %1890 = vmatprep.subr.mxu0 0.0
        %1891 = vmatpush1.msra.mxu0 0.0
        %1892 = vmatprep.subr.mxu0 0.0
        %1893 = vmatpush1.msra.mxu0 0.0
        %1894 = vmatprep.subr.mxu0 0.0
        %1895 = vmatpush1.msra.mxu0 0.0
        %1896 = vmatprep.subr.mxu0 0.0
        %1897 = vmatpush1.msra.mxu0 0.0
        %1898 = vmatprep.subr.mxu0 0.0
        %1899 = vmatpush1.msra.mxu0 0.0
        %1900 = vmatprep.subr.mxu0 0.0
        %1901 = vmatpush1.msra.mxu0 0.0
        %1902 = vmatprep.subr.mxu0 0.0
        %1903 = vmatpush1.msra.mxu0 0.0
        %1904 = vmatprep.subr.mxu0 0.0
        %1905 = vmatpush1.msra.mxu0 0.0
        %1906 = vmatprep.subr.mxu0 0.0
        %1907 = vmatpush1.msra.mxu0 0.0
        %1908 = vmatprep.subr.mxu0 0.0
        %1909 = vmatpush1.msra.mxu0 0.0
        %1910 = vmatprep.subr.mxu0 0.0
        %1911 = vmatpush1.msra.mxu0 0.0
        %1912 = vmatprep.subr.mxu0 0.0
        %1913 = vmatpush1.msra.mxu0 0.0
        %1914 = vmatprep.subr.mxu0 0.0
        %1915 = vmatpush1.msra.mxu0 0.0
        %1916 = vmatprep.subr.mxu0 0.0
        %1917 = vmatpush1.msra.mxu0 0.0
        %1918 = vmatprep.subr.mxu0 0.0
        %1919 = vmatpush1.msra.mxu0 0.0
        %1920 = vmatprep.subr.mxu0 0.0
        %1921 = vmatpush1.msra.mxu0 0.0
        %1922 = vmatprep.subr.mxu0 0.0
        %1923 = vmatpush1.msra.mxu0 0.0
        %1924 = vmatprep.subr.mxu0 0.0
        %1925 = vmatpush1.msra.mxu0 0.0
        %1926 = vmatprep.subr.mxu0 0.0
        %1927 = vmatpush1.msra.mxu0 0.0
        %1928 = vmatprep.subr.mxu0 0.0
        %1929 = vmatpush1.msra.mxu0 0.0
        %1930 = vmatprep.subr.mxu0 0.0
        %1931 = vmatpush1.msra.mxu0 0.0
        %1932 = vmatprep.subr.mxu0 0.0
        %1933 = vmatpush1.msra.mxu0 0.0
        %1934 = vmatprep.subr.mxu0 0.0
        %1935 = vmatpush1.msra.mxu0 0.0
        %1936 = vmatprep.subr.mxu0 0.0
        %1937 = vmatpush1.msra.mxu0 0.0
        %1938 = vmatprep.subr.mxu0 0.0
        %1939 = vmatpush1.msra.mxu0 0.0
        %1940 = vmatprep.subr.mxu0 0.0
        %1941 = vmatpush1.msra.mxu0 0.0
        %1942 = vmatprep.subr.mxu0 0.0
        %1943 = vmatpush1.msra.mxu0 0.0
        %1944 = vmatprep.subr.mxu0 0.0
        %1945 = vmatpush1.msra.mxu0 0.0
        %1946 = vmatprep.subr.mxu0 0.0
        %1947 = vmatpush1.msra.mxu0 0.0
        %1948 = vmatprep.subr.mxu0 0.0
        %1949 = vmatpush1.msra.mxu0 0.0
        %1950 = vmatprep.subr.mxu0 0.0
        %1951 = vmatpush1.msra.mxu0 0.0
        %1952 = vmatprep.mubr.f32.mxu0 0.0
        %1953 = vmatmul.mubr.f32.gmra.mrb[0].mxu0 %v687
        %v1954 = vpop.f32.mrb[0].mxu0
        %v1955 = vadd.f32 0.0, %v1954
        %v1956 = vpop.f32.mrb[0].mxu0
        %1957 = vdwg.mxu0
        %v1958 = vadd.f32 %v1872, %v1955
        %s1959 = scalar_lea.vmem %s306, 2 [#allocation6]
        %v1960 = vld [vmem:[%s1959] ss:$8 sm:$0x3]
        %s1961 = scalar_lea.vmem %s306, 18 [#allocation6]
        %v1962 = vld [vmem:[%s1961] ss:$8 sm:$0x3]
        %s1963 = scalar_lea.vmem %s306, 34 [#allocation6]
        %v1964 = vld [vmem:[%s1963] ss:$8 sm:$0x3]
        %s1965 = scalar_lea.vmem %s306, 50 [#allocation6]
        %v1966 = vld [vmem:[%s1965] ss:$8 sm:$0x3]
        %v1971 = vcombine.low %v1960, %v1962
        %v1972 = vcombine.low %v1964, %v1966
        %v1974 = vunpack.c.l.s4 1966171168
        %v1975 = vunpack.c.0.s8 %v1974
        %v1976 = vlaneseq
        %v1977 = vshrl.u32 %v1976, 7
        %v1978 = vsub.s32 %v1975, %v1977
        %v1979 = vrot.slane %v1971, %v1978
        %v1981 = vunpack.c.l.s4 1966171168
        %v1982 = vunpack.c.0.s8 %v1981
        %v1983 = vlaneseq
        %v1984 = vshrl.u32 %v1983, 7
        %v1985 = vsub.s32 %v1982, %v1984
        %v1986 = vrot.slane %v1972, %v1985
        %v1987 = vcombine.low %v1979, %v1986
        %v1989 = vunpack.c.l.s4 1966171168
        %v1990 = vunpack.c.0.s8 %v1989
        %v1991 = vlaneseq
        %v1992 = vshrl.u32 %v1991, 7
        %v1993 = vsub.s32 %v1990, %v1992
        %v1994 = vrot.slane %v1987, %v1993
        %v1995 = vsel %vm410, %v1994, 0
        %1997 = vmatprep.subr.mxu0 0.0
        %1998 = vmatpush1.msra.mxu0 %v1995
        %1999 = vmatprep.subr.mxu0 0.0
        %2000 = vmatpush1.msra.mxu0 0.0
        %2001 = vmatprep.subr.mxu0 0.0
        %2002 = vmatpush1.msra.mxu0 0.0
        %2003 = vmatprep.subr.mxu0 0.0
        %2004 = vmatpush1.msra.mxu0 0.0
        %2005 = vmatprep.subr.mxu0 0.0
        %2006 = vmatpush1.msra.mxu0 0.0
        %2007 = vmatprep.subr.mxu0 0.0
        %2008 = vmatpush1.msra.mxu0 0.0
        %2009 = vmatprep.subr.mxu0 0.0
        %2010 = vmatpush1.msra.mxu0 0.0
        %2011 = vmatprep.subr.mxu0 0.0
        %2012 = vmatpush1.msra.mxu0 0.0
        %2013 = vmatprep.subr.mxu0 0.0
        %2014 = vmatpush1.msra.mxu0 0.0
        %2015 = vmatprep.subr.mxu0 0.0
        %2016 = vmatpush1.msra.mxu0 0.0
        %2017 = vmatprep.subr.mxu0 0.0
        %2018 = vmatpush1.msra.mxu0 0.0
        %2019 = vmatprep.subr.mxu0 0.0
        %2020 = vmatpush1.msra.mxu0 0.0
        %2021 = vmatprep.subr.mxu0 0.0
        %2022 = vmatpush1.msra.mxu0 0.0
        %2023 = vmatprep.subr.mxu0 0.0
        %2024 = vmatpush1.msra.mxu0 0.0
        %2025 = vmatprep.subr.mxu0 0.0
        %2026 = vmatpush1.msra.mxu0 0.0
        %2027 = vmatprep.subr.mxu0 0.0
        %2028 = vmatpush1.msra.mxu0 0.0
        %2029 = vmatprep.subr.mxu0 0.0
        %2030 = vmatpush1.msra.mxu0 0.0
        %2031 = vmatprep.subr.mxu0 0.0
        %2032 = vmatpush1.msra.mxu0 0.0
        %2033 = vmatprep.subr.mxu0 0.0
        %2034 = vmatpush1.msra.mxu0 0.0
        %2035 = vmatprep.subr.mxu0 0.0
        %2036 = vmatpush1.msra.mxu0 0.0
        %2037 = vmatprep.subr.mxu0 0.0
        %2038 = vmatpush1.msra.mxu0 0.0
        %2039 = vmatprep.subr.mxu0 0.0
        %2040 = vmatpush1.msra.mxu0 0.0
        %2041 = vmatprep.subr.mxu0 0.0
        %2042 = vmatpush1.msra.mxu0 0.0
        %2043 = vmatprep.subr.mxu0 0.0
        %2044 = vmatpush1.msra.mxu0 0.0
        %2045 = vmatprep.subr.mxu0 0.0
        %2046 = vmatpush1.msra.mxu0 0.0
        %2047 = vmatprep.subr.mxu0 0.0
        %2048 = vmatpush1.msra.mxu0 0.0
        %2049 = vmatprep.subr.mxu0 0.0
        %2050 = vmatpush1.msra.mxu0 0.0
        %2051 = vmatprep.subr.mxu0 0.0
        %2052 = vmatpush1.msra.mxu0 0.0
        %2053 = vmatprep.subr.mxu0 0.0
        %2054 = vmatpush1.msra.mxu0 0.0
        %2055 = vmatprep.subr.mxu0 0.0
        %2056 = vmatpush1.msra.mxu0 0.0
        %2057 = vmatprep.subr.mxu0 0.0
        %2058 = vmatpush1.msra.mxu0 0.0
        %2059 = vmatprep.subr.mxu0 0.0
        %2060 = vmatpush1.msra.mxu0 0.0
        %2061 = vmatprep.mubr.f32.mxu0 0.0
        %2062 = vmatmul.mubr.f32.gmra.mrb[0].mxu0 %v800
        %v2063 = vpop.f32.mrb[0].mxu0
        %v2064 = vadd.f32 0.0, %v2063
        %v2065 = vpop.f32.mrb[0].mxu0
        %2066 = vdwg.mxu0
        %v2067 = vadd.f32 %v1958, %v2064
        %v2068 = vcombine.high %v1979, %v1986
        %v2070 = vunpack.c.l.s4 1966171168
        %v2071 = vunpack.c.0.s8 %v2070
        %v2072 = vlaneseq
        %v2073 = vshrl.u32 %v2072, 7
        %v2074 = vsub.s32 %v2071, %v2073
        %v2075 = vrot.slane %v2068, %v2074
        %2076 = vrot.lane.b32.xlu0 %v1994, 127
        %v2077 = vpop.permute.xlu0 %2076
        %2078 = vrot.lane.b32.xlu0 %v2075, 127
        %v2079 = vpop.permute.xlu0 %2078
        %v2080 = vsel %vm404, %v2077, %v2079
        %v2081 = vsel %vm410, %v2080, 0
        %2083 = vmatprep.subr.mxu0 0.0
        %2084 = vmatpush1.msra.mxu0 %v2081
        %2085 = vmatprep.subr.mxu0 0.0
        %2086 = vmatpush1.msra.mxu0 0.0
        %2087 = vmatprep.subr.mxu0 0.0
        %2088 = vmatpush1.msra.mxu0 0.0
        %2089 = vmatprep.subr.mxu0 0.0
        %2090 = vmatpush1.msra.mxu0 0.0
        %2091 = vmatprep.subr.mxu0 0.0
        %2092 = vmatpush1.msra.mxu0 0.0
        %2093 = vmatprep.subr.mxu0 0.0
        %2094 = vmatpush1.msra.mxu0 0.0
        %2095 = vmatprep.subr.mxu0 0.0
        %2096 = vmatpush1.msra.mxu0 0.0
        %2097 = vmatprep.subr.mxu0 0.0
        %2098 = vmatpush1.msra.mxu0 0.0
        %2099 = vmatprep.subr.mxu0 0.0
        %2100 = vmatpush1.msra.mxu0 0.0
        %2101 = vmatprep.subr.mxu0 0.0
        %2102 = vmatpush1.msra.mxu0 0.0
        %2103 = vmatprep.subr.mxu0 0.0
        %2104 = vmatpush1.msra.mxu0 0.0
        %2105 = vmatprep.subr.mxu0 0.0
        %2106 = vmatpush1.msra.mxu0 0.0
        %2107 = vmatprep.subr.mxu0 0.0
        %2108 = vmatpush1.msra.mxu0 0.0
        %2109 = vmatprep.subr.mxu0 0.0
        %2110 = vmatpush1.msra.mxu0 0.0
        %2111 = vmatprep.subr.mxu0 0.0
        %2112 = vmatpush1.msra.mxu0 0.0
        %2113 = vmatprep.subr.mxu0 0.0
        %2114 = vmatpush1.msra.mxu0 0.0
        %2115 = vmatprep.subr.mxu0 0.0
        %2116 = vmatpush1.msra.mxu0 0.0
        %2117 = vmatprep.subr.mxu0 0.0
        %2118 = vmatpush1.msra.mxu0 0.0
        %2119 = vmatprep.subr.mxu0 0.0
        %2120 = vmatpush1.msra.mxu0 0.0
        %2121 = vmatprep.subr.mxu0 0.0
        %2122 = vmatpush1.msra.mxu0 0.0
        %2123 = vmatprep.subr.mxu0 0.0
        %2124 = vmatpush1.msra.mxu0 0.0
        %2125 = vmatprep.subr.mxu0 0.0
        %2126 = vmatpush1.msra.mxu0 0.0
        %2127 = vmatprep.subr.mxu0 0.0
        %2128 = vmatpush1.msra.mxu0 0.0
        %2129 = vmatprep.subr.mxu0 0.0
        %2130 = vmatpush1.msra.mxu0 0.0
        %2131 = vmatprep.subr.mxu0 0.0
        %2132 = vmatpush1.msra.mxu0 0.0
        %2133 = vmatprep.subr.mxu0 0.0
        %2134 = vmatpush1.msra.mxu0 0.0
        %2135 = vmatprep.subr.mxu0 0.0
        %2136 = vmatpush1.msra.mxu0 0.0
        %2137 = vmatprep.subr.mxu0 0.0
        %2138 = vmatpush1.msra.mxu0 0.0
        %2139 = vmatprep.subr.mxu0 0.0
        %2140 = vmatpush1.msra.mxu0 0.0
        %2141 = vmatprep.subr.mxu0 0.0
        %2142 = vmatpush1.msra.mxu0 0.0
        %2143 = vmatprep.subr.mxu0 0.0
        %2144 = vmatpush1.msra.mxu0 0.0
        %2145 = vmatprep.subr.mxu0 0.0
        %2146 = vmatpush1.msra.mxu0 0.0
        %2147 = vmatprep.mubr.f32.mxu0 0.0
        %2148 = vmatmul.mubr.f32.gmra.mrb[0].mxu0 %v891
        %v2149 = vpop.f32.mrb[0].mxu0
        %v2150 = vadd.f32 0.0, %v2149
        %v2151 = vpop.f32.mrb[0].mxu0
        %2152 = vdwg.mxu0
        %v2153 = vadd.f32 %v2067, %v2150
        %v2154 = vadd.f32 %v2153, %v970
        %2155 = vadd.xlane.f32.xlu0 %v2154
        %v2156 = vpop.xlane.xlu0 %2155
        %v2157 = vadd.f32 %v1566, %v2156
        %v2158 = vmul.f32 %v2154, %v2154
        %2159 = vadd.xlane.f32.xlu0 %v2158
        %v2160 = vpop.xlane.xlu0 %2159
        %v2161 = vadd.f32 %v1570, %v2160
        %s2162 = scalar_lea.vmem %s288, 3 [#allocation2]
        %v2163 = vld [vmem:[%s2162] ss:$8 sm:$0x3]
        %s2164 = scalar_lea.vmem %s288, 19 [#allocation2]
        %v2165 = vld [vmem:[%s2164] ss:$8 sm:$0x3]
        %s2166 = scalar_lea.vmem %s288, 35 [#allocation2]
        %v2167 = vld [vmem:[%s2166] ss:$8 sm:$0x3]
        %s2168 = scalar_lea.vmem %s288, 51 [#allocation2]
        %v2169 = vld [vmem:[%s2168] ss:$8 sm:$0x3]
        %v2174 = vcombine.low %v2163, %v2165
        %v2175 = vcombine.low %v2167, %v2169
        %v2177 = vunpack.c.l.s4 1966171168
        %v2178 = vunpack.c.0.s8 %v2177
        %v2179 = vlaneseq
        %v2180 = vshrl.u32 %v2179, 7
        %v2181 = vsub.s32 %v2178, %v2180
        %v2182 = vrot.slane %v2174, %v2181
        %v2184 = vunpack.c.l.s4 1966171168
        %v2185 = vunpack.c.0.s8 %v2184
        %v2186 = vlaneseq
        %v2187 = vshrl.u32 %v2186, 7
        %v2188 = vsub.s32 %v2185, %v2187
        %v2189 = vrot.slane %v2175, %v2188
        %v2190 = vcombine.low %v2182, %v2189
        %v2191 = vcombine.high %v2182, %v2189
        %v2193 = vunpack.c.l.s4 1966171168
        %v2194 = vunpack.c.0.s8 %v2193
        %v2195 = vlaneseq
        %v2196 = vshrl.u32 %v2195, 7
        %v2197 = vsub.s32 %v2194, %v2196
        %v2198 = vrot.slane %v2190, %v2197
        %v2200 = vunpack.c.l.s4 1966171168
        %v2201 = vunpack.c.0.s8 %v2200
        %v2202 = vlaneseq
        %v2203 = vshrl.u32 %v2202, 7
        %v2204 = vsub.s32 %v2201, %v2203
        %v2205 = vrot.slane %v2191, %v2204
        %2206 = vrot.lane.b32.xlu0 %v2198, 127
        %v2207 = vpop.permute.xlu0 %2206
        %2208 = vrot.lane.b32.xlu0 %v2205, 127
        %v2209 = vpop.permute.xlu0 %2208
        %v2210 = vsel %vm404, %v2207, %v2209
        %v2211 = vsel %vm410, %v2210, 0
        %2213 = vmatprep.subr.mxu0 0.0
        %2214 = vmatpush1.msra.mxu0 %v2211
        %2215 = vmatprep.subr.mxu0 0.0
        %2216 = vmatpush1.msra.mxu0 0.0
        %2217 = vmatprep.subr.mxu0 0.0
        %2218 = vmatpush1.msra.mxu0 0.0
        %2219 = vmatprep.subr.mxu0 0.0
        %2220 = vmatpush1.msra.mxu0 0.0
        %2221 = vmatprep.subr.mxu0 0.0
        %2222 = vmatpush1.msra.mxu0 0.0
        %2223 = vmatprep.subr.mxu0 0.0
        %2224 = vmatpush1.msra.mxu0 0.0
        %2225 = vmatprep.subr.mxu0 0.0
        %2226 = vmatpush1.msra.mxu0 0.0
        %2227 = vmatprep.subr.mxu0 0.0
        %2228 = vmatpush1.msra.mxu0 0.0
        %2229 = vmatprep.subr.mxu0 0.0
        %2230 = vmatpush1.msra.mxu0 0.0
        %2231 = vmatprep.subr.mxu0 0.0
        %2232 = vmatpush1.msra.mxu0 0.0
        %2233 = vmatprep.subr.mxu0 0.0
        %2234 = vmatpush1.msra.mxu0 0.0
        %2235 = vmatprep.subr.mxu0 0.0
        %2236 = vmatpush1.msra.mxu0 0.0
        %2237 = vmatprep.subr.mxu0 0.0
        %2238 = vmatpush1.msra.mxu0 0.0
        %2239 = vmatprep.subr.mxu0 0.0
        %2240 = vmatpush1.msra.mxu0 0.0
        %2241 = vmatprep.subr.mxu0 0.0
        %2242 = vmatpush1.msra.mxu0 0.0
        %2243 = vmatprep.subr.mxu0 0.0
        %2244 = vmatpush1.msra.mxu0 0.0
        %2245 = vmatprep.subr.mxu0 0.0
        %2246 = vmatpush1.msra.mxu0 0.0
        %2247 = vmatprep.subr.mxu0 0.0
        %2248 = vmatpush1.msra.mxu0 0.0
        %2249 = vmatprep.subr.mxu0 0.0
        %2250 = vmatpush1.msra.mxu0 0.0
        %2251 = vmatprep.subr.mxu0 0.0
        %2252 = vmatpush1.msra.mxu0 0.0
        %2253 = vmatprep.subr.mxu0 0.0
        %2254 = vmatpush1.msra.mxu0 0.0
        %2255 = vmatprep.subr.mxu0 0.0
        %2256 = vmatpush1.msra.mxu0 0.0
        %2257 = vmatprep.subr.mxu0 0.0
        %2258 = vmatpush1.msra.mxu0 0.0
        %2259 = vmatprep.subr.mxu0 0.0
        %2260 = vmatpush1.msra.mxu0 0.0
        %2261 = vmatprep.subr.mxu0 0.0
        %2262 = vmatpush1.msra.mxu0 0.0
        %2263 = vmatprep.subr.mxu0 0.0
        %2264 = vmatpush1.msra.mxu0 0.0
        %2265 = vmatprep.subr.mxu0 0.0
        %2266 = vmatpush1.msra.mxu0 0.0
        %2267 = vmatprep.subr.mxu0 0.0
        %2268 = vmatpush1.msra.mxu0 0.0
        %2269 = vmatprep.subr.mxu0 0.0
        %2270 = vmatpush1.msra.mxu0 0.0
        %2271 = vmatprep.subr.mxu0 0.0
        %2272 = vmatpush1.msra.mxu0 0.0
        %2273 = vmatprep.subr.mxu0 0.0
        %2274 = vmatpush1.msra.mxu0 0.0
        %2275 = vmatprep.subr.mxu0 0.0
        %2276 = vmatpush1.msra.mxu0 0.0
        %2277 = vmatprep.mubr.f32.mxu0 0.0
        %2278 = vmatmul.mubr.f32.gmra.mrb[0].mxu0 %v408
        %v2279 = vpop.f32.mrb[0].mxu0
        %v2280 = vadd.f32 0.0, %v2279
        %v2281 = vpop.f32.mrb[0].mxu0
        %2282 = vdwg.mxu0
        %v2283 = vsel %vm410, %v2198, 0
        %2285 = vmatprep.subr.mxu0 0.0
        %2286 = vmatpush1.msra.mxu0 %v2283
        %2287 = vmatprep.subr.mxu0 0.0
        %2288 = vmatpush1.msra.mxu0 0.0
        %2289 = vmatprep.subr.mxu0 0.0
        %2290 = vmatpush1.msra.mxu0 0.0
        %2291 = vmatprep.subr.mxu0 0.0
        %2292 = vmatpush1.msra.mxu0 0.0
        %2293 = vmatprep.subr.mxu0 0.0
        %2294 = vmatpush1.msra.mxu0 0.0
        %2295 = vmatprep.subr.mxu0 0.0
        %2296 = vmatpush1.msra.mxu0 0.0
        %2297 = vmatprep.subr.mxu0 0.0
        %2298 = vmatpush1.msra.mxu0 0.0
        %2299 = vmatprep.subr.mxu0 0.0
        %2300 = vmatpush1.msra.mxu0 0.0
        %2301 = vmatprep.subr.mxu0 0.0
        %2302 = vmatpush1.msra.mxu0 0.0
        %2303 = vmatprep.subr.mxu0 0.0
        %2304 = vmatpush1.msra.mxu0 0.0
        %2305 = vmatprep.subr.mxu0 0.0
        %2306 = vmatpush1.msra.mxu0 0.0
        %2307 = vmatprep.subr.mxu0 0.0
        %2308 = vmatpush1.msra.mxu0 0.0
        %2309 = vmatprep.subr.mxu0 0.0
        %2310 = vmatpush1.msra.mxu0 0.0
        %2311 = vmatprep.subr.mxu0 0.0
        %2312 = vmatpush1.msra.mxu0 0.0
        %2313 = vmatprep.subr.mxu0 0.0
        %2314 = vmatpush1.msra.mxu0 0.0
        %2315 = vmatprep.subr.mxu0 0.0
        %2316 = vmatpush1.msra.mxu0 0.0
        %2317 = vmatprep.subr.mxu0 0.0
        %2318 = vmatpush1.msra.mxu0 0.0
        %2319 = vmatprep.subr.mxu0 0.0
        %2320 = vmatpush1.msra.mxu0 0.0
        %2321 = vmatprep.subr.mxu0 0.0
        %2322 = vmatpush1.msra.mxu0 0.0
        %2323 = vmatprep.subr.mxu0 0.0
        %2324 = vmatpush1.msra.mxu0 0.0
        %2325 = vmatprep.subr.mxu0 0.0
        %2326 = vmatpush1.msra.mxu0 0.0
        %2327 = vmatprep.subr.mxu0 0.0
        %2328 = vmatpush1.msra.mxu0 0.0
        %2329 = vmatprep.subr.mxu0 0.0
        %2330 = vmatpush1.msra.mxu0 0.0
        %2331 = vmatprep.subr.mxu0 0.0
        %2332 = vmatpush1.msra.mxu0 0.0
        %2333 = vmatprep.subr.mxu0 0.0
        %2334 = vmatpush1.msra.mxu0 0.0
        %2335 = vmatprep.subr.mxu0 0.0
        %2336 = vmatpush1.msra.mxu0 0.0
        %2337 = vmatprep.subr.mxu0 0.0
        %2338 = vmatpush1.msra.mxu0 0.0
        %2339 = vmatprep.subr.mxu0 0.0
        %2340 = vmatpush1.msra.mxu0 0.0
        %2341 = vmatprep.subr.mxu0 0.0
        %2342 = vmatpush1.msra.mxu0 0.0
        %2343 = vmatprep.subr.mxu0 0.0
        %2344 = vmatpush1.msra.mxu0 0.0
        %2345 = vmatprep.subr.mxu0 0.0
        %2346 = vmatpush1.msra.mxu0 0.0
        %2347 = vmatprep.subr.mxu0 0.0
        %2348 = vmatpush1.msra.mxu0 0.0
        %2349 = vmatprep.mubr.f32.mxu0 0.0
        %2350 = vmatmul.mubr.f32.gmra.mrb[0].mxu0 %v484
        %v2351 = vpop.f32.mrb[0].mxu0
        %v2352 = vadd.f32 %v2280, %v2351
        %v2353 = vpop.f32.mrb[0].mxu0
        %2354 = vdwg.mxu0
        %s2355 = scalar_lea.vmem %s297, 3 [#allocation4]
        %v2356 = vld [vmem:[%s2355] ss:$8 sm:$0x3]
        %s2357 = scalar_lea.vmem %s297, 19 [#allocation4]
        %v2358 = vld [vmem:[%s2357] ss:$8 sm:$0x3]
        %s2359 = scalar_lea.vmem %s297, 35 [#allocation4]
        %v2360 = vld [vmem:[%s2359] ss:$8 sm:$0x3]
        %s2361 = scalar_lea.vmem %s297, 51 [#allocation4]
        %v2362 = vld [vmem:[%s2361] ss:$8 sm:$0x3]
        %v2367 = vcombine.low %v2356, %v2358
        %v2368 = vcombine.low %v2360, %v2362
        %v2370 = vunpack.c.l.s4 1966171168
        %v2371 = vunpack.c.0.s8 %v2370
        %v2372 = vlaneseq
        %v2373 = vshrl.u32 %v2372, 7
        %v2374 = vsub.s32 %v2371, %v2373
        %v2375 = vrot.slane %v2367, %v2374
        %v2377 = vunpack.c.l.s4 1966171168
        %v2378 = vunpack.c.0.s8 %v2377
        %v2379 = vlaneseq
        %v2380 = vshrl.u32 %v2379, 7
        %v2381 = vsub.s32 %v2378, %v2380
        %v2382 = vrot.slane %v2368, %v2381
        %v2383 = vcombine.low %v2375, %v2382
        %v2385 = vunpack.c.l.s4 1966171168
        %v2386 = vunpack.c.0.s8 %v2385
        %v2387 = vlaneseq
        %v2388 = vshrl.u32 %v2387, 7
        %v2389 = vsub.s32 %v2386, %v2388
        %v2390 = vrot.slane %v2383, %v2389
        %v2391 = vsel %vm410, %v2390, 0
        %2393 = vmatprep.subr.mxu0 0.0
        %2394 = vmatpush1.msra.mxu0 %v2391
        %2395 = vmatprep.subr.mxu0 0.0
        %2396 = vmatpush1.msra.mxu0 0.0
        %2397 = vmatprep.subr.mxu0 0.0
        %2398 = vmatpush1.msra.mxu0 0.0
        %2399 = vmatprep.subr.mxu0 0.0
        %2400 = vmatpush1.msra.mxu0 0.0
        %2401 = vmatprep.subr.mxu0 0.0
        %2402 = vmatpush1.msra.mxu0 0.0
        %2403 = vmatprep.subr.mxu0 0.0
        %2404 = vmatpush1.msra.mxu0 0.0
        %2405 = vmatprep.subr.mxu0 0.0
        %2406 = vmatpush1.msra.mxu0 0.0
        %2407 = vmatprep.subr.mxu0 0.0
        %2408 = vmatpush1.msra.mxu0 0.0
        %2409 = vmatprep.subr.mxu0 0.0
        %2410 = vmatpush1.msra.mxu0 0.0
        %2411 = vmatprep.subr.mxu0 0.0
        %2412 = vmatpush1.msra.mxu0 0.0
        %2413 = vmatprep.subr.mxu0 0.0
        %2414 = vmatpush1.msra.mxu0 0.0
        %2415 = vmatprep.subr.mxu0 0.0
        %2416 = vmatpush1.msra.mxu0 0.0
        %2417 = vmatprep.subr.mxu0 0.0
        %2418 = vmatpush1.msra.mxu0 0.0
        %2419 = vmatprep.subr.mxu0 0.0
        %2420 = vmatpush1.msra.mxu0 0.0
        %2421 = vmatprep.subr.mxu0 0.0
        %2422 = vmatpush1.msra.mxu0 0.0
        %2423 = vmatprep.subr.mxu0 0.0
        %2424 = vmatpush1.msra.mxu0 0.0
        %2425 = vmatprep.subr.mxu0 0.0
        %2426 = vmatpush1.msra.mxu0 0.0
        %2427 = vmatprep.subr.mxu0 0.0
        %2428 = vmatpush1.msra.mxu0 0.0
        %2429 = vmatprep.subr.mxu0 0.0
        %2430 = vmatpush1.msra.mxu0 0.0
        %2431 = vmatprep.subr.mxu0 0.0
        %2432 = vmatpush1.msra.mxu0 0.0
        %2433 = vmatprep.subr.mxu0 0.0
        %2434 = vmatpush1.msra.mxu0 0.0
        %2435 = vmatprep.subr.mxu0 0.0
        %2436 = vmatpush1.msra.mxu0 0.0
        %2437 = vmatprep.subr.mxu0 0.0
        %2438 = vmatpush1.msra.mxu0 0.0
        %2439 = vmatprep.subr.mxu0 0.0
        %2440 = vmatpush1.msra.mxu0 0.0
        %2441 = vmatprep.subr.mxu0 0.0
        %2442 = vmatpush1.msra.mxu0 0.0
        %2443 = vmatprep.subr.mxu0 0.0
        %2444 = vmatpush1.msra.mxu0 0.0
        %2445 = vmatprep.subr.mxu0 0.0
        %2446 = vmatpush1.msra.mxu0 0.0
        %2447 = vmatprep.subr.mxu0 0.0
        %2448 = vmatpush1.msra.mxu0 0.0
        %2449 = vmatprep.subr.mxu0 0.0
        %2450 = vmatpush1.msra.mxu0 0.0
        %2451 = vmatprep.subr.mxu0 0.0
        %2452 = vmatpush1.msra.mxu0 0.0
        %2453 = vmatprep.subr.mxu0 0.0
        %2454 = vmatpush1.msra.mxu0 0.0
        %2455 = vmatprep.subr.mxu0 0.0
        %2456 = vmatpush1.msra.mxu0 0.0
        %2457 = vmatprep.mubr.f32.mxu0 0.0
        %2458 = vmatmul.mubr.f32.gmra.mrb[0].mxu0 %v596
        %v2459 = vpop.f32.mrb[0].mxu0
        %v2460 = vadd.f32 0.0, %v2459
        %v2461 = vpop.f32.mrb[0].mxu0
        %2462 = vdwg.mxu0
        %v2463 = vadd.f32 %v2352, %v2460
        %v2464 = vcombine.high %v2375, %v2382
        %v2466 = vunpack.c.l.s4 1966171168
        %v2467 = vunpack.c.0.s8 %v2466
        %v2468 = vlaneseq
        %v2469 = vshrl.u32 %v2468, 7
        %v2470 = vsub.s32 %v2467, %v2469
        %v2471 = vrot.slane %v2464, %v2470
        %2472 = vrot.lane.b32.xlu0 %v2390, 127
        %v2473 = vpop.permute.xlu0 %2472
        %2474 = vrot.lane.b32.xlu0 %v2471, 127
        %v2475 = vpop.permute.xlu0 %2474
        %v2476 = vsel %vm404, %v2473, %v2475
        %v2477 = vsel %vm410, %v2476, 0
        %2479 = vmatprep.subr.mxu0 0.0
        %2480 = vmatpush1.msra.mxu0 %v2477
        %2481 = vmatprep.subr.mxu0 0.0
        %2482 = vmatpush1.msra.mxu0 0.0
        %2483 = vmatprep.subr.mxu0 0.0
        %2484 = vmatpush1.msra.mxu0 0.0
        %2485 = vmatprep.subr.mxu0 0.0
        %2486 = vmatpush1.msra.mxu0 0.0
        %2487 = vmatprep.subr.mxu0 0.0
        %2488 = vmatpush1.msra.mxu0 0.0
        %2489 = vmatprep.subr.mxu0 0.0
        %2490 = vmatpush1.msra.mxu0 0.0
        %2491 = vmatprep.subr.mxu0 0.0
        %2492 = vmatpush1.msra.mxu0 0.0
        %2493 = vmatprep.subr.mxu0 0.0
        %2494 = vmatpush1.msra.mxu0 0.0
        %2495 = vmatprep.subr.mxu0 0.0
        %2496 = vmatpush1.msra.mxu0 0.0
        %2497 = vmatprep.subr.mxu0 0.0
        %2498 = vmatpush1.msra.mxu0 0.0
        %2499 = vmatprep.subr.mxu0 0.0
        %2500 = vmatpush1.msra.mxu0 0.0
        %2501 = vmatprep.subr.mxu0 0.0
        %2502 = vmatpush1.msra.mxu0 0.0
        %2503 = vmatprep.subr.mxu0 0.0
        %2504 = vmatpush1.msra.mxu0 0.0
        %2505 = vmatprep.subr.mxu0 0.0
        %2506 = vmatpush1.msra.mxu0 0.0
        %2507 = vmatprep.subr.mxu0 0.0
        %2508 = vmatpush1.msra.mxu0 0.0
        %2509 = vmatprep.subr.mxu0 0.0
        %2510 = vmatpush1.msra.mxu0 0.0
        %2511 = vmatprep.subr.mxu0 0.0
        %2512 = vmatpush1.msra.mxu0 0.0
        %2513 = vmatprep.subr.mxu0 0.0
        %2514 = vmatpush1.msra.mxu0 0.0
        %2515 = vmatprep.subr.mxu0 0.0
        %2516 = vmatpush1.msra.mxu0 0.0
        %2517 = vmatprep.subr.mxu0 0.0
        %2518 = vmatpush1.msra.mxu0 0.0
        %2519 = vmatprep.subr.mxu0 0.0
        %2520 = vmatpush1.msra.mxu0 0.0
        %2521 = vmatprep.subr.mxu0 0.0
        %2522 = vmatpush1.msra.mxu0 0.0
        %2523 = vmatprep.subr.mxu0 0.0
        %2524 = vmatpush1.msra.mxu0 0.0
        %2525 = vmatprep.subr.mxu0 0.0
        %2526 = vmatpush1.msra.mxu0 0.0
        %2527 = vmatprep.subr.mxu0 0.0
        %2528 = vmatpush1.msra.mxu0 0.0
        %2529 = vmatprep.subr.mxu0 0.0
        %2530 = vmatpush1.msra.mxu0 0.0
        %2531 = vmatprep.subr.mxu0 0.0
        %2532 = vmatpush1.msra.mxu0 0.0
        %2533 = vmatprep.subr.mxu0 0.0
        %2534 = vmatpush1.msra.mxu0 0.0
        %2535 = vmatprep.subr.mxu0 0.0
        %2536 = vmatpush1.msra.mxu0 0.0
        %2537 = vmatprep.subr.mxu0 0.0
        %2538 = vmatpush1.msra.mxu0 0.0
        %2539 = vmatprep.subr.mxu0 0.0
        %2540 = vmatpush1.msra.mxu0 0.0
        %2541 = vmatprep.subr.mxu0 0.0
        %2542 = vmatpush1.msra.mxu0 0.0
        %2543 = vmatprep.mubr.f32.mxu0 0.0
        %2544 = vmatmul.mubr.f32.gmra.mrb[0].mxu0 %v687
        %v2545 = vpop.f32.mrb[0].mxu0
        %v2546 = vadd.f32 0.0, %v2545
        %v2547 = vpop.f32.mrb[0].mxu0
        %2548 = vdwg.mxu0
        %v2549 = vadd.f32 %v2463, %v2546
        %s2550 = scalar_lea.vmem %s306, 3 [#allocation6]
        %v2551 = vld [vmem:[%s2550] ss:$8 sm:$0x3]
        %s2552 = scalar_lea.vmem %s306, 19 [#allocation6]
        %v2553 = vld [vmem:[%s2552] ss:$8 sm:$0x3]
        %s2554 = scalar_lea.vmem %s306, 35 [#allocation6]
        %v2555 = vld [vmem:[%s2554] ss:$8 sm:$0x3]
        %s2556 = scalar_lea.vmem %s306, 51 [#allocation6]
        %v2557 = vld [vmem:[%s2556] ss:$8 sm:$0x3]
        %v2562 = vcombine.low %v2551, %v2553
        %v2563 = vcombine.low %v2555, %v2557
        %v2565 = vunpack.c.l.s4 1966171168
        %v2566 = vunpack.c.0.s8 %v2565
        %v2567 = vlaneseq
        %v2568 = vshrl.u32 %v2567, 7
        %v2569 = vsub.s32 %v2566, %v2568
        %v2570 = vrot.slane %v2562, %v2569
        %v2572 = vunpack.c.l.s4 1966171168
        %v2573 = vunpack.c.0.s8 %v2572
        %v2574 = vlaneseq
        %v2575 = vshrl.u32 %v2574, 7
        %v2576 = vsub.s32 %v2573, %v2575
        %v2577 = vrot.slane %v2563, %v2576
        %v2578 = vcombine.low %v2570, %v2577
        %v2580 = vunpack.c.l.s4 1966171168
        %v2581 = vunpack.c.0.s8 %v2580
        %v2582 = vlaneseq
        %v2583 = vshrl.u32 %v2582, 7
        %v2584 = vsub.s32 %v2581, %v2583
        %v2585 = vrot.slane %v2578, %v2584
        %v2586 = vsel %vm410, %v2585, 0
        %2588 = vmatprep.subr.mxu0 0.0
        %2589 = vmatpush1.msra.mxu0 %v2586
        %2590 = vmatprep.subr.mxu0 0.0
        %2591 = vmatpush1.msra.mxu0 0.0
        %2592 = vmatprep.subr.mxu0 0.0
        %2593 = vmatpush1.msra.mxu0 0.0
        %2594 = vmatprep.subr.mxu0 0.0
        %2595 = vmatpush1.msra.mxu0 0.0
        %2596 = vmatprep.subr.mxu0 0.0
        %2597 = vmatpush1.msra.mxu0 0.0
        %2598 = vmatprep.subr.mxu0 0.0
        %2599 = vmatpush1.msra.mxu0 0.0
        %2600 = vmatprep.subr.mxu0 0.0
        %2601 = vmatpush1.msra.mxu0 0.0
        %2602 = vmatprep.subr.mxu0 0.0
        %2603 = vmatpush1.msra.mxu0 0.0
        %2604 = vmatprep.subr.mxu0 0.0
        %2605 = vmatpush1.msra.mxu0 0.0
        %2606 = vmatprep.subr.mxu0 0.0
        %2607 = vmatpush1.msra.mxu0 0.0
        %2608 = vmatprep.subr.mxu0 0.0
        %2609 = vmatpush1.msra.mxu0 0.0
        %2610 = vmatprep.subr.mxu0 0.0
        %2611 = vmatpush1.msra.mxu0 0.0
        %2612 = vmatprep.subr.mxu0 0.0
        %2613 = vmatpush1.msra.mxu0 0.0
        %2614 = vmatprep.subr.mxu0 0.0
        %2615 = vmatpush1.msra.mxu0 0.0
        %2616 = vmatprep.subr.mxu0 0.0
        %2617 = vmatpush1.msra.mxu0 0.0
        %2618 = vmatprep.subr.mxu0 0.0
        %2619 = vmatpush1.msra.mxu0 0.0
        %2620 = vmatprep.subr.mxu0 0.0
        %2621 = vmatpush1.msra.mxu0 0.0
        %2622 = vmatprep.subr.mxu0 0.0
        %2623 = vmatpush1.msra.mxu0 0.0
        %2624 = vmatprep.subr.mxu0 0.0
        %2625 = vmatpush1.msra.mxu0 0.0
        %2626 = vmatprep.subr.mxu0 0.0
        %2627 = vmatpush1.msra.mxu0 0.0
        %2628 = vmatprep.subr.mxu0 0.0
        %2629 = vmatpush1.msra.mxu0 0.0
        %2630 = vmatprep.subr.mxu0 0.0
        %2631 = vmatpush1.msra.mxu0 0.0
        %2632 = vmatprep.subr.mxu0 0.0
        %2633 = vmatpush1.msra.mxu0 0.0
        %2634 = vmatprep.subr.mxu0 0.0
        %2635 = vmatpush1.msra.mxu0 0.0
        %2636 = vmatprep.subr.mxu0 0.0
        %2637 = vmatpush1.msra.mxu0 0.0
        %2638 = vmatprep.subr.mxu0 0.0
        %2639 = vmatpush1.msra.mxu0 0.0
        %2640 = vmatprep.subr.mxu0 0.0
        %2641 = vmatpush1.msra.mxu0 0.0
        %2642 = vmatprep.subr.mxu0 0.0
        %2643 = vmatpush1.msra.mxu0 0.0
        %2644 = vmatprep.subr.mxu0 0.0
        %2645 = vmatpush1.msra.mxu0 0.0
        %2646 = vmatprep.subr.mxu0 0.0
        %2647 = vmatpush1.msra.mxu0 0.0
        %2648 = vmatprep.subr.mxu0 0.0
        %2649 = vmatpush1.msra.mxu0 0.0
        %2650 = vmatprep.subr.mxu0 0.0
        %2651 = vmatpush1.msra.mxu0 0.0
        %2652 = vmatprep.mubr.f32.mxu0 0.0
        %2653 = vmatmul.mubr.f32.gmra.mrb[0].mxu0 %v800
        %v2654 = vpop.f32.mrb[0].mxu0
        %v2655 = vadd.f32 0.0, %v2654
        %v2656 = vpop.f32.mrb[0].mxu0
        %2657 = vdwg.mxu0
        %v2658 = vadd.f32 %v2549, %v2655
        %v2659 = vcombine.high %v2570, %v2577
        %v2661 = vunpack.c.l.s4 1966171168
        %v2662 = vunpack.c.0.s8 %v2661
        %v2663 = vlaneseq
        %v2664 = vshrl.u32 %v2663, 7
        %v2665 = vsub.s32 %v2662, %v2664
        %v2666 = vrot.slane %v2659, %v2665
        %2667 = vrot.lane.b32.xlu0 %v2585, 127
        %v2668 = vpop.permute.xlu0 %2667
        %2669 = vrot.lane.b32.xlu0 %v2666, 127
        %v2670 = vpop.permute.xlu0 %2669
        %v2671 = vsel %vm404, %v2668, %v2670
        %v2672 = vsel %vm410, %v2671, 0
        %2674 = vmatprep.subr.mxu0 0.0
        %2675 = vmatpush1.msra.mxu0 %v2672
        %2676 = vmatprep.subr.mxu0 0.0
        %2677 = vmatpush1.msra.mxu0 0.0
        %2678 = vmatprep.subr.mxu0 0.0
        %2679 = vmatpush1.msra.mxu0 0.0
        %2680 = vmatprep.subr.mxu0 0.0
        %2681 = vmatpush1.msra.mxu0 0.0
        %2682 = vmatprep.subr.mxu0 0.0
        %2683 = vmatpush1.msra.mxu0 0.0
        %2684 = vmatprep.subr.mxu0 0.0
        %2685 = vmatpush1.msra.mxu0 0.0
        %2686 = vmatprep.subr.mxu0 0.0
        %2687 = vmatpush1.msra.mxu0 0.0
        %2688 = vmatprep.subr.mxu0 0.0
        %2689 = vmatpush1.msra.mxu0 0.0
        %2690 = vmatprep.subr.mxu0 0.0
        %2691 = vmatpush1.msra.mxu0 0.0
        %2692 = vmatprep.subr.mxu0 0.0
        %2693 = vmatpush1.msra.mxu0 0.0
        %2694 = vmatprep.subr.mxu0 0.0
        %2695 = vmatpush1.msra.mxu0 0.0
        %2696 = vmatprep.subr.mxu0 0.0
        %2697 = vmatpush1.msra.mxu0 0.0
        %2698 = vmatprep.subr.mxu0 0.0
        %2699 = vmatpush1.msra.mxu0 0.0
        %2700 = vmatprep.subr.mxu0 0.0
        %2701 = vmatpush1.msra.mxu0 0.0
        %2702 = vmatprep.subr.mxu0 0.0
        %2703 = vmatpush1.msra.mxu0 0.0
        %2704 = vmatprep.subr.mxu0 0.0
        %2705 = vmatpush1.msra.mxu0 0.0
        %2706 = vmatprep.subr.mxu0 0.0
        %2707 = vmatpush1.msra.mxu0 0.0
        %2708 = vmatprep.subr.mxu0 0.0
        %2709 = vmatpush1.msra.mxu0 0.0
        %2710 = vmatprep.subr.mxu0 0.0
        %2711 = vmatpush1.msra.mxu0 0.0
        %2712 = vmatprep.subr.mxu0 0.0
        %2713 = vmatpush1.msra.mxu0 0.0
        %2714 = vmatprep.subr.mxu0 0.0
        %2715 = vmatpush1.msra.mxu0 0.0
        %2716 = vmatprep.subr.mxu0 0.0
        %2717 = vmatpush1.msra.mxu0 0.0
        %2718 = vmatprep.subr.mxu0 0.0
        %2719 = vmatpush1.msra.mxu0 0.0
        %2720 = vmatprep.subr.mxu0 0.0
        %2721 = vmatpush1.msra.mxu0 0.0
        %2722 = vmatprep.subr.mxu0 0.0
        %2723 = vmatpush1.msra.mxu0 0.0
        %2724 = vmatprep.subr.mxu0 0.0
        %2725 = vmatpush1.msra.mxu0 0.0
        %2726 = vmatprep.subr.mxu0 0.0
        %2727 = vmatpush1.msra.mxu0 0.0
        %2728 = vmatprep.subr.mxu0 0.0
        %2729 = vmatpush1.msra.mxu0 0.0
        %2730 = vmatprep.subr.mxu0 0.0
        %2731 = vmatpush1.msra.mxu0 0.0
        %2732 = vmatprep.subr.mxu0 0.0
        %2733 = vmatpush1.msra.mxu0 0.0
        %2734 = vmatprep.subr.mxu0 0.0
        %2735 = vmatpush1.msra.mxu0 0.0
        %2736 = vmatprep.subr.mxu0 0.0
        %2737 = vmatpush1.msra.mxu0 0.0
        %2738 = vmatprep.mubr.f32.mxu0 0.0
        %2739 = vmatmul.mubr.f32.gmra.mrb[0].mxu0 %v891
        %v2740 = vpop.f32.mrb[0].mxu0
        %v2741 = vadd.f32 0.0, %v2740
        %v2742 = vpop.f32.mrb[0].mxu0
        %2743 = vdwg.mxu0
        %v2744 = vadd.f32 %v2658, %v2741
        %v2745 = vadd.f32 %v2744, %v970
        %2746 = vadd.xlane.f32.xlu0 %v2745
        %v2747 = vpop.xlane.xlu0 %2746
        %v2748 = vadd.f32 %v2157, %v2747
        %v2749 = vmul.f32 %v2745, %v2745
        %2750 = vadd.xlane.f32.xlu0 %v2749
        %v2751 = vpop.xlane.xlu0 %2750
        %v2752 = vadd.f32 %v2161, %v2751
        %s2753 = scalar_lea.vmem %s288, 4 [#allocation2]
        %v2754 = vld [vmem:[%s2753] ss:$8 sm:$0x3]
        %s2755 = scalar_lea.vmem %s288, 20 [#allocation2]
        %v2756 = vld [vmem:[%s2755] ss:$8 sm:$0x3]
        %s2757 = scalar_lea.vmem %s288, 36 [#allocation2]
        %v2758 = vld [vmem:[%s2757] ss:$8 sm:$0x3]
        %s2759 = scalar_lea.vmem %s288, 52 [#allocation2]
        %v2760 = vld [vmem:[%s2759] ss:$8 sm:$0x3]
        %v2765 = vcombine.low %v2754, %v2756
        %v2766 = vcombine.low %v2758, %v2760
        %v2768 = vunpack.c.l.s4 1966171168
        %v2769 = vunpack.c.0.s8 %v2768
        %v2770 = vlaneseq
        %v2771 = vshrl.u32 %v2770, 7
        %v2772 = vsub.s32 %v2769, %v2771
        %v2773 = vrot.slane %v2765, %v2772
        %v2775 = vunpack.c.l.s4 1966171168
        %v2776 = vunpack.c.0.s8 %v2775
        %v2777 = vlaneseq
        %v2778 = vshrl.u32 %v2777, 7
        %v2779 = vsub.s32 %v2776, %v2778
        %v2780 = vrot.slane %v2766, %v2779
        %v2781 = vcombine.low %v2773, %v2780
        %v2782 = vcombine.high %v2773, %v2780
        %v2784 = vunpack.c.l.s4 1966171168
        %v2785 = vunpack.c.0.s8 %v2784
        %v2786 = vlaneseq
        %v2787 = vshrl.u32 %v2786, 7
        %v2788 = vsub.s32 %v2785, %v2787
        %v2789 = vrot.slane %v2781, %v2788
        %v2791 = vunpack.c.l.s4 1966171168
        %v2792 = vunpack.c.0.s8 %v2791
        %v2793 = vlaneseq
        %v2794 = vshrl.u32 %v2793, 7
        %v2795 = vsub.s32 %v2792, %v2794
        %v2796 = vrot.slane %v2782, %v2795
        %2797 = vrot.lane.b32.xlu0 %v2789, 127
        %v2798 = vpop.permute.xlu0 %2797
        %2799 = vrot.lane.b32.xlu0 %v2796, 127
        %v2800 = vpop.permute.xlu0 %2799
        %v2801 = vsel %vm404, %v2798, %v2800
        %v2802 = vsel %vm410, %v2801, 0
        %2804 = vmatprep.subr.mxu0 0.0
        %2805 = vmatpush1.msra.mxu0 %v2802
        %2806 = vmatprep.subr.mxu0 0.0
        %2807 = vmatpush1.msra.mxu0 0.0
        %2808 = vmatprep.subr.mxu0 0.0
        %2809 = vmatpush1.msra.mxu0 0.0
        %2810 = vmatprep.subr.mxu0 0.0
        %2811 = vmatpush1.msra.mxu0 0.0
        %2812 = vmatprep.subr.mxu0 0.0
        %2813 = vmatpush1.msra.mxu0 0.0
        %2814 = vmatprep.subr.mxu0 0.0
        %2815 = vmatpush1.msra.mxu0 0.0
        %2816 = vmatprep.subr.mxu0 0.0
        %2817 = vmatpush1.msra.mxu0 0.0
        %2818 = vmatprep.subr.mxu0 0.0
        %2819 = vmatpush1.msra.mxu0 0.0
        %2820 = vmatprep.subr.mxu0 0.0
        %2821 = vmatpush1.msra.mxu0 0.0
        %2822 = vmatprep.subr.mxu0 0.0
        %2823 = vmatpush1.msra.mxu0 0.0
        %2824 = vmatprep.subr.mxu0 0.0
        %2825 = vmatpush1.msra.mxu0 0.0
        %2826 = vmatprep.subr.mxu0 0.0
        %2827 = vmatpush1.msra.mxu0 0.0
        %2828 = vmatprep.subr.mxu0 0.0
        %2829 = vmatpush1.msra.mxu0 0.0
        %2830 = vmatprep.subr.mxu0 0.0
        %2831 = vmatpush1.msra.mxu0 0.0
        %2832 = vmatprep.subr.mxu0 0.0
        %2833 = vmatpush1.msra.mxu0 0.0
        %2834 = vmatprep.subr.mxu0 0.0
        %2835 = vmatpush1.msra.mxu0 0.0
        %2836 = vmatprep.subr.mxu0 0.0
        %2837 = vmatpush1.msra.mxu0 0.0
        %2838 = vmatprep.subr.mxu0 0.0
        %2839 = vmatpush1.msra.mxu0 0.0
        %2840 = vmatprep.subr.mxu0 0.0
        %2841 = vmatpush1.msra.mxu0 0.0
        %2842 = vmatprep.subr.mxu0 0.0
        %2843 = vmatpush1.msra.mxu0 0.0
        %2844 = vmatprep.subr.mxu0 0.0
        %2845 = vmatpush1.msra.mxu0 0.0
        %2846 = vmatprep.subr.mxu0 0.0
        %2847 = vmatpush1.msra.mxu0 0.0
        %2848 = vmatprep.subr.mxu0 0.0
        %2849 = vmatpush1.msra.mxu0 0.0
        %2850 = vmatprep.subr.mxu0 0.0
        %2851 = vmatpush1.msra.mxu0 0.0
        %2852 = vmatprep.subr.mxu0 0.0
        %2853 = vmatpush1.msra.mxu0 0.0
        %2854 = vmatprep.subr.mxu0 0.0
        %2855 = vmatpush1.msra.mxu0 0.0
        %2856 = vmatprep.subr.mxu0 0.0
        %2857 = vmatpush1.msra.mxu0 0.0
        %2858 = vmatprep.subr.mxu0 0.0
        %2859 = vmatpush1.msra.mxu0 0.0
        %2860 = vmatprep.subr.mxu0 0.0
        %2861 = vmatpush1.msra.mxu0 0.0
        %2862 = vmatprep.subr.mxu0 0.0
        %2863 = vmatpush1.msra.mxu0 0.0
        %2864 = vmatprep.subr.mxu0 0.0
        %2865 = vmatpush1.msra.mxu0 0.0
        %2866 = vmatprep.subr.mxu0 0.0
        %2867 = vmatpush1.msra.mxu0 0.0
        %2868 = vmatprep.mubr.f32.mxu0 0.0
        %2869 = vmatmul.mubr.f32.gmra.mrb[0].mxu0 %v408
        %v2870 = vpop.f32.mrb[0].mxu0
        %v2871 = vadd.f32 0.0, %v2870
        %v2872 = vpop.f32.mrb[0].mxu0
        %2873 = vdwg.mxu0
        %v2874 = vsel %vm410, %v2789, 0
        %2876 = vmatprep.subr.mxu0 0.0
        %2877 = vmatpush1.msra.mxu0 %v2874
        %2878 = vmatprep.subr.mxu0 0.0
        %2879 = vmatpush1.msra.mxu0 0.0
        %2880 = vmatprep.subr.mxu0 0.0
        %2881 = vmatpush1.msra.mxu0 0.0
        %2882 = vmatprep.subr.mxu0 0.0
        %2883 = vmatpush1.msra.mxu0 0.0
        %2884 = vmatprep.subr.mxu0 0.0
        %2885 = vmatpush1.msra.mxu0 0.0
        %2886 = vmatprep.subr.mxu0 0.0
        %2887 = vmatpush1.msra.mxu0 0.0
        %2888 = vmatprep.subr.mxu0 0.0
        %2889 = vmatpush1.msra.mxu0 0.0
        %2890 = vmatprep.subr.mxu0 0.0
        %2891 = vmatpush1.msra.mxu0 0.0
        %2892 = vmatprep.subr.mxu0 0.0
        %2893 = vmatpush1.msra.mxu0 0.0
        %2894 = vmatprep.subr.mxu0 0.0
        %2895 = vmatpush1.msra.mxu0 0.0
        %2896 = vmatprep.subr.mxu0 0.0
        %2897 = vmatpush1.msra.mxu0 0.0
        %2898 = vmatprep.subr.mxu0 0.0
        %2899 = vmatpush1.msra.mxu0 0.0
        %2900 = vmatprep.subr.mxu0 0.0
        %2901 = vmatpush1.msra.mxu0 0.0
        %2902 = vmatprep.subr.mxu0 0.0
        %2903 = vmatpush1.msra.mxu0 0.0
        %2904 = vmatprep.subr.mxu0 0.0
        %2905 = vmatpush1.msra.mxu0 0.0
        %2906 = vmatprep.subr.mxu0 0.0
        %2907 = vmatpush1.msra.mxu0 0.0
        %2908 = vmatprep.subr.mxu0 0.0
        %2909 = vmatpush1.msra.mxu0 0.0
        %2910 = vmatprep.subr.mxu0 0.0
        %2911 = vmatpush1.msra.mxu0 0.0
        %2912 = vmatprep.subr.mxu0 0.0
        %2913 = vmatpush1.msra.mxu0 0.0
        %2914 = vmatprep.subr.mxu0 0.0
        %2915 = vmatpush1.msra.mxu0 0.0
        %2916 = vmatprep.subr.mxu0 0.0
        %2917 = vmatpush1.msra.mxu0 0.0
        %2918 = vmatprep.subr.mxu0 0.0
        %2919 = vmatpush1.msra.mxu0 0.0
        %2920 = vmatprep.subr.mxu0 0.0
        %2921 = vmatpush1.msra.mxu0 0.0
        %2922 = vmatprep.subr.mxu0 0.0
        %2923 = vmatpush1.msra.mxu0 0.0
        %2924 = vmatprep.subr.mxu0 0.0
        %2925 = vmatpush1.msra.mxu0 0.0
        %2926 = vmatprep.subr.mxu0 0.0
        %2927 = vmatpush1.msra.mxu0 0.0
        %2928 = vmatprep.subr.mxu0 0.0
        %2929 = vmatpush1.msra.mxu0 0.0
        %2930 = vmatprep.subr.mxu0 0.0
        %2931 = vmatpush1.msra.mxu0 0.0
        %2932 = vmatprep.subr.mxu0 0.0
        %2933 = vmatpush1.msra.mxu0 0.0
        %2934 = vmatprep.subr.mxu0 0.0
        %2935 = vmatpush1.msra.mxu0 0.0
        %2936 = vmatprep.subr.mxu0 0.0
        %2937 = vmatpush1.msra.mxu0 0.0
        %2938 = vmatprep.subr.mxu0 0.0
        %2939 = vmatpush1.msra.mxu0 0.0
        %2940 = vmatprep.mubr.f32.mxu0 0.0
        %2941 = vmatmul.mubr.f32.gmra.mrb[0].mxu0 %v484
        %v2942 = vpop.f32.mrb[0].mxu0
        %v2943 = vadd.f32 %v2871, %v2942
        %v2944 = vpop.f32.mrb[0].mxu0
        %2945 = vdwg.mxu0
        %s2946 = scalar_lea.vmem %s297, 4 [#allocation4]
        %v2947 = vld [vmem:[%s2946] ss:$8 sm:$0x3]
        %s2948 = scalar_lea.vmem %s297, 20 [#allocation4]
        %v2949 = vld [vmem:[%s2948] ss:$8 sm:$0x3]
        %s2950 = scalar_lea.vmem %s297, 36 [#allocation4]
        %v2951 = vld [vmem:[%s2950] ss:$8 sm:$0x3]
        %s2952 = scalar_lea.vmem %s297, 52 [#allocation4]
        %v2953 = vld [vmem:[%s2952] ss:$8 sm:$0x3]
        %v2958 = vcombine.low %v2947, %v2949
        %v2959 = vcombine.low %v2951, %v2953
        %v2961 = vunpack.c.l.s4 1966171168
        %v2962 = vunpack.c.0.s8 %v2961
        %v2963 = vlaneseq
        %v2964 = vshrl.u32 %v2963, 7
        %v2965 = vsub.s32 %v2962, %v2964
        %v2966 = vrot.slane %v2958, %v2965
        %v2968 = vunpack.c.l.s4 1966171168
        %v2969 = vunpack.c.0.s8 %v2968
        %v2970 = vlaneseq
        %v2971 = vshrl.u32 %v2970, 7
        %v2972 = vsub.s32 %v2969, %v2971
        %v2973 = vrot.slane %v2959, %v2972
        %v2974 = vcombine.low %v2966, %v2973
        %v2976 = vunpack.c.l.s4 1966171168
        %v2977 = vunpack.c.0.s8 %v2976
        %v2978 = vlaneseq
        %v2979 = vshrl.u32 %v2978, 7
        %v2980 = vsub.s32 %v2977, %v2979
        %v2981 = vrot.slane %v2974, %v2980
        %v2982 = vsel %vm410, %v2981, 0
        %2984 = vmatprep.subr.mxu0 0.0
        %2985 = vmatpush1.msra.mxu0 %v2982
        %2986 = vmatprep.subr.mxu0 0.0
        %2987 = vmatpush1.msra.mxu0 0.0
        %2988 = vmatprep.subr.mxu0 0.0
        %2989 = vmatpush1.msra.mxu0 0.0
        %2990 = vmatprep.subr.mxu0 0.0
        %2991 = vmatpush1.msra.mxu0 0.0
        %2992 = vmatprep.subr.mxu0 0.0
        %2993 = vmatpush1.msra.mxu0 0.0
        %2994 = vmatprep.subr.mxu0 0.0
        %2995 = vmatpush1.msra.mxu0 0.0
        %2996 = vmatprep.subr.mxu0 0.0
        %2997 = vmatpush1.msra.mxu0 0.0
        %2998 = vmatprep.subr.mxu0 0.0
        %2999 = vmatpush1.msra.mxu0 0.0
        %3000 = vmatprep.subr.mxu0 0.0
        %3001 = vmatpush1.msra.mxu0 0.0
        %3002 = vmatprep.subr.mxu0 0.0
        %3003 = vmatpush1.msra.mxu0 0.0
        %3004 = vmatprep.subr.mxu0 0.0
        %3005 = vmatpush1.msra.mxu0 0.0
        %3006 = vmatprep.subr.mxu0 0.0
        %3007 = vmatpush1.msra.mxu0 0.0
        %3008 = vmatprep.subr.mxu0 0.0
        %3009 = vmatpush1.msra.mxu0 0.0
        %3010 = vmatprep.subr.mxu0 0.0
        %3011 = vmatpush1.msra.mxu0 0.0
        %3012 = vmatprep.subr.mxu0 0.0
        %3013 = vmatpush1.msra.mxu0 0.0
        %3014 = vmatprep.subr.mxu0 0.0
        %3015 = vmatpush1.msra.mxu0 0.0
        %3016 = vmatprep.subr.mxu0 0.0
        %3017 = vmatpush1.msra.mxu0 0.0
        %3018 = vmatprep.subr.mxu0 0.0
        %3019 = vmatpush1.msra.mxu0 0.0
        %3020 = vmatprep.subr.mxu0 0.0
        %3021 = vmatpush1.msra.mxu0 0.0
        %3022 = vmatprep.subr.mxu0 0.0
        %3023 = vmatpush1.msra.mxu0 0.0
        %3024 = vmatprep.subr.mxu0 0.0
        %3025 = vmatpush1.msra.mxu0 0.0
        %3026 = vmatprep.subr.mxu0 0.0
        %3027 = vmatpush1.msra.mxu0 0.0
        %3028 = vmatprep.subr.mxu0 0.0
        %3029 = vmatpush1.msra.mxu0 0.0
        %3030 = vmatprep.subr.mxu0 0.0
        %3031 = vmatpush1.msra.mxu0 0.0
        %3032 = vmatprep.subr.mxu0 0.0
        %3033 = vmatpush1.msra.mxu0 0.0
        %3034 = vmatprep.subr.mxu0 0.0
        %3035 = vmatpush1.msra.mxu0 0.0
        %3036 = vmatprep.subr.mxu0 0.0
        %3037 = vmatpush1.msra.mxu0 0.0
        %3038 = vmatprep.subr.mxu0 0.0
        %3039 = vmatpush1.msra.mxu0 0.0
        %3040 = vmatprep.subr.mxu0 0.0
        %3041 = vmatpush1.msra.mxu0 0.0
        %3042 = vmatprep.subr.mxu0 0.0
        %3043 = vmatpush1.msra.mxu0 0.0
        %3044 = vmatprep.subr.mxu0 0.0
        %3045 = vmatpush1.msra.mxu0 0.0
        %3046 = vmatprep.subr.mxu0 0.0
        %3047 = vmatpush1.msra.mxu0 0.0
        %3048 = vmatprep.mubr.f32.mxu0 0.0
        %3049 = vmatmul.mubr.f32.gmra.mrb[0].mxu0 %v596
        %v3050 = vpop.f32.mrb[0].mxu0
        %v3051 = vadd.f32 0.0, %v3050
        %v3052 = vpop.f32.mrb[0].mxu0
        %3053 = vdwg.mxu0
        %v3054 = vadd.f32 %v2943, %v3051
        %v3055 = vcombine.high %v2966, %v2973
        %v3057 = vunpack.c.l.s4 1966171168
        %v3058 = vunpack.c.0.s8 %v3057
        %v3059 = vlaneseq
        %v3060 = vshrl.u32 %v3059, 7
        %v3061 = vsub.s32 %v3058, %v3060
        %v3062 = vrot.slane %v3055, %v3061
        %3063 = vrot.lane.b32.xlu0 %v2981, 127
        %v3064 = vpop.permute.xlu0 %3063
        %3065 = vrot.lane.b32.xlu0 %v3062, 127
        %v3066 = vpop.permute.xlu0 %3065
        %v3067 = vsel %vm404, %v3064, %v3066
        %v3068 = vsel %vm410, %v3067, 0
        %3070 = vmatprep.subr.mxu0 0.0
        %3071 = vmatpush1.msra.mxu0 %v3068
        %3072 = vmatprep.subr.mxu0 0.0
        %3073 = vmatpush1.msra.mxu0 0.0
        %3074 = vmatprep.subr.mxu0 0.0
        %3075 = vmatpush1.msra.mxu0 0.0
        %3076 = vmatprep.subr.mxu0 0.0
        %3077 = vmatpush1.msra.mxu0 0.0
        %3078 = vmatprep.subr.mxu0 0.0
        %3079 = vmatpush1.msra.mxu0 0.0
        %3080 = vmatprep.subr.mxu0 0.0
        %3081 = vmatpush1.msra.mxu0 0.0
        %3082 = vmatprep.subr.mxu0 0.0
        %3083 = vmatpush1.msra.mxu0 0.0
        %3084 = vmatprep.subr.mxu0 0.0
        %3085 = vmatpush1.msra.mxu0 0.0
        %3086 = vmatprep.subr.mxu0 0.0
        %3087 = vmatpush1.msra.mxu0 0.0
        %3088 = vmatprep.subr.mxu0 0.0
        %3089 = vmatpush1.msra.mxu0 0.0
        %3090 = vmatprep.subr.mxu0 0.0
        %3091 = vmatpush1.msra.mxu0 0.0
        %3092 = vmatprep.subr.mxu0 0.0
        %3093 = vmatpush1.msra.mxu0 0.0
        %3094 = vmatprep.subr.mxu0 0.0
        %3095 = vmatpush1.msra.mxu0 0.0
        %3096 = vmatprep.subr.mxu0 0.0
        %3097 = vmatpush1.msra.mxu0 0.0
        %3098 = vmatprep.subr.mxu0 0.0
        %3099 = vmatpush1.msra.mxu0 0.0
        %3100 = vmatprep.subr.mxu0 0.0
        %3101 = vmatpush1.msra.mxu0 0.0
        %3102 = vmatprep.subr.mxu0 0.0
        %3103 = vmatpush1.msra.mxu0 0.0
        %3104 = vmatprep.subr.mxu0 0.0
        %3105 = vmatpush1.msra.mxu0 0.0
        %3106 = vmatprep.subr.mxu0 0.0
        %3107 = vmatpush1.msra.mxu0 0.0
        %3108 = vmatprep.subr.mxu0 0.0
        %3109 = vmatpush1.msra.mxu0 0.0
        %3110 = vmatprep.subr.mxu0 0.0
        %3111 = vmatpush1.msra.mxu0 0.0
        %3112 = vmatprep.subr.mxu0 0.0
        %3113 = vmatpush1.msra.mxu0 0.0
        %3114 = vmatprep.subr.mxu0 0.0
        %3115 = vmatpush1.msra.mxu0 0.0
        %3116 = vmatprep.subr.mxu0 0.0
        %3117 = vmatpush1.msra.mxu0 0.0
        %3118 = vmatprep.subr.mxu0 0.0
        %3119 = vmatpush1.msra.mxu0 0.0
        %3120 = vmatprep.subr.mxu0 0.0
        %3121 = vmatpush1.msra.mxu0 0.0
        %3122 = vmatprep.subr.mxu0 0.0
        %3123 = vmatpush1.msra.mxu0 0.0
        %3124 = vmatprep.subr.mxu0 0.0
        %3125 = vmatpush1.msra.mxu0 0.0
        %3126 = vmatprep.subr.mxu0 0.0
        %3127 = vmatpush1.msra.mxu0 0.0
        %3128 = vmatprep.subr.mxu0 0.0
        %3129 = vmatpush1.msra.mxu0 0.0
        %3130 = vmatprep.subr.mxu0 0.0
        %3131 = vmatpush1.msra.mxu0 0.0
        %3132 = vmatprep.subr.mxu0 0.0
        %3133 = vmatpush1.msra.mxu0 0.0
        %3134 = vmatprep.mubr.f32.mxu0 0.0
        %3135 = vmatmul.mubr.f32.gmra.mrb[0].mxu0 %v687
        %v3136 = vpop.f32.mrb[0].mxu0
        %v3137 = vadd.f32 0.0, %v3136
        %v3138 = vpop.f32.mrb[0].mxu0
        %3139 = vdwg.mxu0
        %v3140 = vadd.f32 %v3054, %v3137
        %s3141 = scalar_lea.vmem %s306, 4 [#allocation6]
        %v3142 = vld [vmem:[%s3141] ss:$8 sm:$0x3]
        %s3143 = scalar_lea.vmem %s306, 20 [#allocation6]
        %v3144 = vld [vmem:[%s3143] ss:$8 sm:$0x3]
        %s3145 = scalar_lea.vmem %s306, 36 [#allocation6]
        %v3146 = vld [vmem:[%s3145] ss:$8 sm:$0x3]
        %s3147 = scalar_lea.vmem %s306, 52 [#allocation6]
        %v3148 = vld [vmem:[%s3147] ss:$8 sm:$0x3]
        %v3153 = vcombine.low %v3142, %v3144
        %v3154 = vcombine.low %v3146, %v3148
        %v3156 = vunpack.c.l.s4 1966171168
        %v3157 = vunpack.c.0.s8 %v3156
        %v3158 = vlaneseq
        %v3159 = vshrl.u32 %v3158, 7
        %v3160 = vsub.s32 %v3157, %v3159
        %v3161 = vrot.slane %v3153, %v3160
        %v3163 = vunpack.c.l.s4 1966171168
        %v3164 = vunpack.c.0.s8 %v3163
        %v3165 = vlaneseq
        %v3166 = vshrl.u32 %v3165, 7
        %v3167 = vsub.s32 %v3164, %v3166
        %v3168 = vrot.slane %v3154, %v3167
        %v3169 = vcombine.low %v3161, %v3168
        %v3171 = vunpack.c.l.s4 1966171168
        %v3172 = vunpack.c.0.s8 %v3171
        %v3173 = vlaneseq
        %v3174 = vshrl.u32 %v3173, 7
        %v3175 = vsub.s32 %v3172, %v3174
        %v3176 = vrot.slane %v3169, %v3175
        %v3177 = vsel %vm410, %v3176, 0
        %3179 = vmatprep.subr.mxu0 0.0
        %3180 = vmatpush1.msra.mxu0 %v3177
        %3181 = vmatprep.subr.mxu0 0.0
        %3182 = vmatpush1.msra.mxu0 0.0
        %3183 = vmatprep.subr.mxu0 0.0
        %3184 = vmatpush1.msra.mxu0 0.0
        %3185 = vmatprep.subr.mxu0 0.0
        %3186 = vmatpush1.msra.mxu0 0.0
        %3187 = vmatprep.subr.mxu0 0.0
        %3188 = vmatpush1.msra.mxu0 0.0
        %3189 = vmatprep.subr.mxu0 0.0
        %3190 = vmatpush1.msra.mxu0 0.0
        %3191 = vmatprep.subr.mxu0 0.0
        %3192 = vmatpush1.msra.mxu0 0.0
        %3193 = vmatprep.subr.mxu0 0.0
        %3194 = vmatpush1.msra.mxu0 0.0
        %3195 = vmatprep.subr.mxu0 0.0
        %3196 = vmatpush1.msra.mxu0 0.0
        %3197 = vmatprep.subr.mxu0 0.0
        %3198 = vmatpush1.msra.mxu0 0.0
        %3199 = vmatprep.subr.mxu0 0.0
        %3200 = vmatpush1.msra.mxu0 0.0
        %3201 = vmatprep.subr.mxu0 0.0
        %3202 = vmatpush1.msra.mxu0 0.0
        %3203 = vmatprep.subr.mxu0 0.0
        %3204 = vmatpush1.msra.mxu0 0.0
        %3205 = vmatprep.subr.mxu0 0.0
        %3206 = vmatpush1.msra.mxu0 0.0
        %3207 = vmatprep.subr.mxu0 0.0
        %3208 = vmatpush1.msra.mxu0 0.0
        %3209 = vmatprep.subr.mxu0 0.0
        %3210 = vmatpush1.msra.mxu0 0.0
        %3211 = vmatprep.subr.mxu0 0.0
        %3212 = vmatpush1.msra.mxu0 0.0
        %3213 = vmatprep.subr.mxu0 0.0
        %3214 = vmatpush1.msra.mxu0 0.0
        %3215 = vmatprep.subr.mxu0 0.0
        %3216 = vmatpush1.msra.mxu0 0.0
        %3217 = vmatprep.subr.mxu0 0.0
        %3218 = vmatpush1.msra.mxu0 0.0
        %3219 = vmatprep.subr.mxu0 0.0
        %3220 = vmatpush1.msra.mxu0 0.0
        %3221 = vmatprep.subr.mxu0 0.0
        %3222 = vmatpush1.msra.mxu0 0.0
        %3223 = vmatprep.subr.mxu0 0.0
        %3224 = vmatpush1.msra.mxu0 0.0
        %3225 = vmatprep.subr.mxu0 0.0
        %3226 = vmatpush1.msra.mxu0 0.0
        %3227 = vmatprep.subr.mxu0 0.0
        %3228 = vmatpush1.msra.mxu0 0.0
        %3229 = vmatprep.subr.mxu0 0.0
        %3230 = vmatpush1.msra.mxu0 0.0
        %3231 = vmatprep.subr.mxu0 0.0
        %3232 = vmatpush1.msra.mxu0 0.0
        %3233 = vmatprep.subr.mxu0 0.0
        %3234 = vmatpush1.msra.mxu0 0.0
        %3235 = vmatprep.subr.mxu0 0.0
        %3236 = vmatpush1.msra.mxu0 0.0
        %3237 = vmatprep.subr.mxu0 0.0
        %3238 = vmatpush1.msra.mxu0 0.0
        %3239 = vmatprep.subr.mxu0 0.0
        %3240 = vmatpush1.msra.mxu0 0.0
        %3241 = vmatprep.subr.mxu0 0.0
        %3242 = vmatpush1.msra.mxu0 0.0
        %3243 = vmatprep.mubr.f32.mxu0 0.0
        %3244 = vmatmul.mubr.f32.gmra.mrb[0].mxu0 %v800
        %v3245 = vpop.f32.mrb[0].mxu0
        %v3246 = vadd.f32 0.0, %v3245
        %v3247 = vpop.f32.mrb[0].mxu0
        %3248 = vdwg.mxu0
        %v3249 = vadd.f32 %v3140, %v3246
        %v3250 = vcombine.high %v3161, %v3168
        %v3252 = vunpack.c.l.s4 1966171168
        %v3253 = vunpack.c.0.s8 %v3252
        %v3254 = vlaneseq
        %v3255 = vshrl.u32 %v3254, 7
        %v3256 = vsub.s32 %v3253, %v3255
        %v3257 = vrot.slane %v3250, %v3256
        %3258 = vrot.lane.b32.xlu0 %v3176, 127
        %v3259 = vpop.permute.xlu0 %3258
        %3260 = vrot.lane.b32.xlu0 %v3257, 127
        %v3261 = vpop.permute.xlu0 %3260
        %v3262 = vsel %vm404, %v3259, %v3261
        %v3263 = vsel %vm410, %v3262, 0
        %3265 = vmatprep.subr.mxu0 0.0
        %3266 = vmatpush1.msra.mxu0 %v3263
        %3267 = vmatprep.subr.mxu0 0.0
        %3268 = vmatpush1.msra.mxu0 0.0
        %3269 = vmatprep.subr.mxu0 0.0
        %3270 = vmatpush1.msra.mxu0 0.0
        %3271 = vmatprep.subr.mxu0 0.0
        %3272 = vmatpush1.msra.mxu0 0.0
        %3273 = vmatprep.subr.mxu0 0.0
        %3274 = vmatpush1.msra.mxu0 0.0
        %3275 = vmatprep.subr.mxu0 0.0
        %3276 = vmatpush1.msra.mxu0 0.0
        %3277 = vmatprep.subr.mxu0 0.0
        %3278 = vmatpush1.msra.mxu0 0.0
        %3279 = vmatprep.subr.mxu0 0.0
        %3280 = vmatpush1.msra.mxu0 0.0
        %3281 = vmatprep.subr.mxu0 0.0
        %3282 = vmatpush1.msra.mxu0 0.0
        %3283 = vmatprep.subr.mxu0 0.0
        %3284 = vmatpush1.msra.mxu0 0.0
        %3285 = vmatprep.subr.mxu0 0.0
        %3286 = vmatpush1.msra.mxu0 0.0
        %3287 = vmatprep.subr.mxu0 0.0
        %3288 = vmatpush1.msra.mxu0 0.0
        %3289 = vmatprep.subr.mxu0 0.0
        %3290 = vmatpush1.msra.mxu0 0.0
        %3291 = vmatprep.subr.mxu0 0.0
        %3292 = vmatpush1.msra.mxu0 0.0
        %3293 = vmatprep.subr.mxu0 0.0
        %3294 = vmatpush1.msra.mxu0 0.0
        %3295 = vmatprep.subr.mxu0 0.0
        %3296 = vmatpush1.msra.mxu0 0.0
        %3297 = vmatprep.subr.mxu0 0.0
        %3298 = vmatpush1.msra.mxu0 0.0
        %3299 = vmatprep.subr.mxu0 0.0
        %3300 = vmatpush1.msra.mxu0 0.0
        %3301 = vmatprep.subr.mxu0 0.0
        %3302 = vmatpush1.msra.mxu0 0.0
        %3303 = vmatprep.subr.mxu0 0.0
        %3304 = vmatpush1.msra.mxu0 0.0
        %3305 = vmatprep.subr.mxu0 0.0
        %3306 = vmatpush1.msra.mxu0 0.0
        %3307 = vmatprep.subr.mxu0 0.0
        %3308 = vmatpush1.msra.mxu0 0.0
        %3309 = vmatprep.subr.mxu0 0.0
        %3310 = vmatpush1.msra.mxu0 0.0
        %3311 = vmatprep.subr.mxu0 0.0
        %3312 = vmatpush1.msra.mxu0 0.0
        %3313 = vmatprep.subr.mxu0 0.0
        %3314 = vmatpush1.msra.mxu0 0.0
        %3315 = vmatprep.subr.mxu0 0.0
        %3316 = vmatpush1.msra.mxu0 0.0
        %3317 = vmatprep.subr.mxu0 0.0
        %3318 = vmatpush1.msra.mxu0 0.0
        %3319 = vmatprep.subr.mxu0 0.0
        %3320 = vmatpush1.msra.mxu0 0.0
        %3321 = vmatprep.subr.mxu0 0.0
        %3322 = vmatpush1.msra.mxu0 0.0
        %3323 = vmatprep.subr.mxu0 0.0
        %3324 = vmatpush1.msra.mxu0 0.0
        %3325 = vmatprep.subr.mxu0 0.0
        %3326 = vmatpush1.msra.mxu0 0.0
        %3327 = vmatprep.subr.mxu0 0.0
        %3328 = vmatpush1.msra.mxu0 0.0
        %3329 = vmatprep.mubr.f32.mxu0 0.0
        %3330 = vmatmul.mubr.f32.gmra.mrb[0].mxu0 %v891
        %v3331 = vpop.f32.mrb[0].mxu0
        %v3332 = vadd.f32 0.0, %v3331
        %v3333 = vpop.f32.mrb[0].mxu0
        %3334 = vdwg.mxu0
        %v3335 = vadd.f32 %v3249, %v3332
        %v3336 = vadd.f32 %v3335, %v970
        %3337 = vadd.xlane.f32.xlu0 %v3336
        %v3338 = vpop.xlane.xlu0 %3337
        %v3339 = vadd.f32 %v2748, %v3338
        %v3340 = vmul.f32 %v3336, %v3336
        %3341 = vadd.xlane.f32.xlu0 %v3340
        %v3342 = vpop.xlane.xlu0 %3341
        %v3343 = vadd.f32 %v2752, %v3342
        %s3344 = scalar_lea.vmem %s288, 5 [#allocation2]
        %v3345 = vld [vmem:[%s3344] ss:$8 sm:$0x3]
        %s3346 = scalar_lea.vmem %s288, 21 [#allocation2]
        %v3347 = vld [vmem:[%s3346] ss:$8 sm:$0x3]
        %s3348 = scalar_lea.vmem %s288, 37 [#allocation2]
        %v3349 = vld [vmem:[%s3348] ss:$8 sm:$0x3]
        %s3350 = scalar_lea.vmem %s288, 53 [#allocation2]
        %v3351 = vld [vmem:[%s3350] ss:$8 sm:$0x3]
        %v3356 = vcombine.low %v3345, %v3347
        %v3357 = vcombine.low %v3349, %v3351
        %v3359 = vunpack.c.l.s4 1966171168
        %v3360 = vunpack.c.0.s8 %v3359
        %v3361 = vlaneseq
        %v3362 = vshrl.u32 %v3361, 7
        %v3363 = vsub.s32 %v3360, %v3362
        %v3364 = vrot.slane %v3356, %v3363
        %v3366 = vunpack.c.l.s4 1966171168
        %v3367 = vunpack.c.0.s8 %v3366
        %v3368 = vlaneseq
        %v3369 = vshrl.u32 %v3368, 7
        %v3370 = vsub.s32 %v3367, %v3369
        %v3371 = vrot.slane %v3357, %v3370
        %v3372 = vcombine.low %v3364, %v3371
        %v3373 = vcombine.high %v3364, %v3371
        %v3375 = vunpack.c.l.s4 1966171168
        %v3376 = vunpack.c.0.s8 %v3375
        %v3377 = vlaneseq
        %v3378 = vshrl.u32 %v3377, 7
        %v3379 = vsub.s32 %v3376, %v3378
        %v3380 = vrot.slane %v3372, %v3379
        %v3382 = vunpack.c.l.s4 1966171168
        %v3383 = vunpack.c.0.s8 %v3382
        %v3384 = vlaneseq
        %v3385 = vshrl.u32 %v3384, 7
        %v3386 = vsub.s32 %v3383, %v3385
        %v3387 = vrot.slane %v3373, %v3386
        %3388 = vrot.lane.b32.xlu0 %v3380, 127
        %v3389 = vpop.permute.xlu0 %3388
        %3390 = vrot.lane.b32.xlu0 %v3387, 127
        %v3391 = vpop.permute.xlu0 %3390
        %v3392 = vsel %vm404, %v3389, %v3391
        %v3393 = vsel %vm410, %v3392, 0
        %3395 = vmatprep.subr.mxu0 0.0
        %3396 = vmatpush1.msra.mxu0 %v3393
        %3397 = vmatprep.subr.mxu0 0.0
        %3398 = vmatpush1.msra.mxu0 0.0
        %3399 = vmatprep.subr.mxu0 0.0
        %3400 = vmatpush1.msra.mxu0 0.0
        %3401 = vmatprep.subr.mxu0 0.0
        %3402 = vmatpush1.msra.mxu0 0.0
        %3403 = vmatprep.subr.mxu0 0.0
        %3404 = vmatpush1.msra.mxu0 0.0
        %3405 = vmatprep.subr.mxu0 0.0
        %3406 = vmatpush1.msra.mxu0 0.0
        %3407 = vmatprep.subr.mxu0 0.0
        %3408 = vmatpush1.msra.mxu0 0.0
        %3409 = vmatprep.subr.mxu0 0.0
        %3410 = vmatpush1.msra.mxu0 0.0
        %3411 = vmatprep.subr.mxu0 0.0
        %3412 = vmatpush1.msra.mxu0 0.0
        %3413 = vmatprep.subr.mxu0 0.0
        %3414 = vmatpush1.msra.mxu0 0.0
        %3415 = vmatprep.subr.mxu0 0.0
        %3416 = vmatpush1.msra.mxu0 0.0
        %3417 = vmatprep.subr.mxu0 0.0
        %3418 = vmatpush1.msra.mxu0 0.0
        %3419 = vmatprep.subr.mxu0 0.0
        %3420 = vmatpush1.msra.mxu0 0.0
        %3421 = vmatprep.subr.mxu0 0.0
        %3422 = vmatpush1.msra.mxu0 0.0
        %3423 = vmatprep.subr.mxu0 0.0
        %3424 = vmatpush1.msra.mxu0 0.0
        %3425 = vmatprep.subr.mxu0 0.0
        %3426 = vmatpush1.msra.mxu0 0.0
        %3427 = vmatprep.subr.mxu0 0.0
        %3428 = vmatpush1.msra.mxu0 0.0
        %3429 = vmatprep.subr.mxu0 0.0
        %3430 = vmatpush1.msra.mxu0 0.0
        %3431 = vmatprep.subr.mxu0 0.0
        %3432 = vmatpush1.msra.mxu0 0.0
        %3433 = vmatprep.subr.mxu0 0.0
        %3434 = vmatpush1.msra.mxu0 0.0
        %3435 = vmatprep.subr.mxu0 0.0
        %3436 = vmatpush1.msra.mxu0 0.0
        %3437 = vmatprep.subr.mxu0 0.0
        %3438 = vmatpush1.msra.mxu0 0.0
        %3439 = vmatprep.subr.mxu0 0.0
        %3440 = vmatpush1.msra.mxu0 0.0
        %3441 = vmatprep.subr.mxu0 0.0
        %3442 = vmatpush1.msra.mxu0 0.0
        %3443 = vmatprep.subr.mxu0 0.0
        %3444 = vmatpush1.msra.mxu0 0.0
        %3445 = vmatprep.subr.mxu0 0.0
        %3446 = vmatpush1.msra.mxu0 0.0
        %3447 = vmatprep.subr.mxu0 0.0
        %3448 = vmatpush1.msra.mxu0 0.0
        %3449 = vmatprep.subr.mxu0 0.0
        %3450 = vmatpush1.msra.mxu0 0.0
        %3451 = vmatprep.subr.mxu0 0.0
        %3452 = vmatpush1.msra.mxu0 0.0
        %3453 = vmatprep.subr.mxu0 0.0
        %3454 = vmatpush1.msra.mxu0 0.0
        %3455 = vmatprep.subr.mxu0 0.0
        %3456 = vmatpush1.msra.mxu0 0.0
        %3457 = vmatprep.subr.mxu0 0.0
        %3458 = vmatpush1.msra.mxu0 0.0
        %3459 = vmatprep.mubr.f32.mxu0 0.0
        %3460 = vmatmul.mubr.f32.gmra.mrb[0].mxu0 %v408
        %v3461 = vpop.f32.mrb[0].mxu0
        %v3462 = vadd.f32 0.0, %v3461
        %v3463 = vpop.f32.mrb[0].mxu0
        %3464 = vdwg.mxu0
        %v3465 = vsel %vm410, %v3380, 0
        %3467 = vmatprep.subr.mxu0 0.0
        %3468 = vmatpush1.msra.mxu0 %v3465
        %3469 = vmatprep.subr.mxu0 0.0
        %3470 = vmatpush1.msra.mxu0 0.0
        %3471 = vmatprep.subr.mxu0 0.0
        %3472 = vmatpush1.msra.mxu0 0.0
        %3473 = vmatprep.subr.mxu0 0.0
        %3474 = vmatpush1.msra.mxu0 0.0
        %3475 = vmatprep.subr.mxu0 0.0
        %3476 = vmatpush1.msra.mxu0 0.0
        %3477 = vmatprep.subr.mxu0 0.0
        %3478 = vmatpush1.msra.mxu0 0.0
        %3479 = vmatprep.subr.mxu0 0.0
        %3480 = vmatpush1.msra.mxu0 0.0
        %3481 = vmatprep.subr.mxu0 0.0
        %3482 = vmatpush1.msra.mxu0 0.0
        %3483 = vmatprep.subr.mxu0 0.0
        %3484 = vmatpush1.msra.mxu0 0.0
        %3485 = vmatprep.subr.mxu0 0.0
        %3486 = vmatpush1.msra.mxu0 0.0
        %3487 = vmatprep.subr.mxu0 0.0
        %3488 = vmatpush1.msra.mxu0 0.0
        %3489 = vmatprep.subr.mxu0 0.0
        %3490 = vmatpush1.msra.mxu0 0.0
        %3491 = vmatprep.subr.mxu0 0.0
        %3492 = vmatpush1.msra.mxu0 0.0
        %3493 = vmatprep.subr.mxu0 0.0
        %3494 = vmatpush1.msra.mxu0 0.0
        %3495 = vmatprep.subr.mxu0 0.0
        %3496 = vmatpush1.msra.mxu0 0.0
        %3497 = vmatprep.subr.mxu0 0.0
        %3498 = vmatpush1.msra.mxu0 0.0
        %3499 = vmatprep.subr.mxu0 0.0
        %3500 = vmatpush1.msra.mxu0 0.0
        %3501 = vmatprep.subr.mxu0 0.0
        %3502 = vmatpush1.msra.mxu0 0.0
        %3503 = vmatprep.subr.mxu0 0.0
        %3504 = vmatpush1.msra.mxu0 0.0
        %3505 = vmatprep.subr.mxu0 0.0
        %3506 = vmatpush1.msra.mxu0 0.0
        %3507 = vmatprep.subr.mxu0 0.0
        %3508 = vmatpush1.msra.mxu0 0.0
        %3509 = vmatprep.subr.mxu0 0.0
        %3510 = vmatpush1.msra.mxu0 0.0
        %3511 = vmatprep.subr.mxu0 0.0
        %3512 = vmatpush1.msra.mxu0 0.0
        %3513 = vmatprep.subr.mxu0 0.0
        %3514 = vmatpush1.msra.mxu0 0.0
        %3515 = vmatprep.subr.mxu0 0.0
        %3516 = vmatpush1.msra.mxu0 0.0
        %3517 = vmatprep.subr.mxu0 0.0
        %3518 = vmatpush1.msra.mxu0 0.0
        %3519 = vmatprep.subr.mxu0 0.0
        %3520 = vmatpush1.msra.mxu0 0.0
        %3521 = vmatprep.subr.mxu0 0.0
        %3522 = vmatpush1.msra.mxu0 0.0
        %3523 = vmatprep.subr.mxu0 0.0
        %3524 = vmatpush1.msra.mxu0 0.0
        %3525 = vmatprep.subr.mxu0 0.0
        %3526 = vmatpush1.msra.mxu0 0.0
        %3527 = vmatprep.subr.mxu0 0.0
        %3528 = vmatpush1.msra.mxu0 0.0
        %3529 = vmatprep.subr.mxu0 0.0
        %3530 = vmatpush1.msra.mxu0 0.0
        %3531 = vmatprep.mubr.f32.mxu0 0.0
        %3532 = vmatmul.mubr.f32.gmra.mrb[0].mxu0 %v484
        %v3533 = vpop.f32.mrb[0].mxu0
        %v3534 = vadd.f32 %v3462, %v3533
        %v3535 = vpop.f32.mrb[0].mxu0
        %3536 = vdwg.mxu0
        %s3537 = scalar_lea.vmem %s297, 5 [#allocation4]
        %v3538 = vld [vmem:[%s3537] ss:$8 sm:$0x3]
        %s3539 = scalar_lea.vmem %s297, 21 [#allocation4]
        %v3540 = vld [vmem:[%s3539] ss:$8 sm:$0x3]
        %s3541 = scalar_lea.vmem %s297, 37 [#allocation4]
        %v3542 = vld [vmem:[%s3541] ss:$8 sm:$0x3]
        %s3543 = scalar_lea.vmem %s297, 53 [#allocation4]
        %v3544 = vld [vmem:[%s3543] ss:$8 sm:$0x3]
        %v3549 = vcombine.low %v3538, %v3540
        %v3550 = vcombine.low %v3542, %v3544
        %v3552 = vunpack.c.l.s4 1966171168
        %v3553 = vunpack.c.0.s8 %v3552
        %v3554 = vlaneseq
        %v3555 = vshrl.u32 %v3554, 7
        %v3556 = vsub.s32 %v3553, %v3555
        %v3557 = vrot.slane %v3549, %v3556
        %v3559 = vunpack.c.l.s4 1966171168
        %v3560 = vunpack.c.0.s8 %v3559
        %v3561 = vlaneseq
        %v3562 = vshrl.u32 %v3561, 7
        %v3563 = vsub.s32 %v3560, %v3562
        %v3564 = vrot.slane %v3550, %v3563
        %v3565 = vcombine.low %v3557, %v3564
        %v3567 = vunpack.c.l.s4 1966171168
        %v3568 = vunpack.c.0.s8 %v3567
        %v3569 = vlaneseq
        %v3570 = vshrl.u32 %v3569, 7
        %v3571 = vsub.s32 %v3568, %v3570
        %v3572 = vrot.slane %v3565, %v3571
        %v3573 = vsel %vm410, %v3572, 0
        %3575 = vmatprep.subr.mxu0 0.0
        %3576 = vmatpush1.msra.mxu0 %v3573
        %3577 = vmatprep.subr.mxu0 0.0
        %3578 = vmatpush1.msra.mxu0 0.0
        %3579 = vmatprep.subr.mxu0 0.0
        %3580 = vmatpush1.msra.mxu0 0.0
        %3581 = vmatprep.subr.mxu0 0.0
        %3582 = vmatpush1.msra.mxu0 0.0
        %3583 = vmatprep.subr.mxu0 0.0
        %3584 = vmatpush1.msra.mxu0 0.0
        %3585 = vmatprep.subr.mxu0 0.0
        %3586 = vmatpush1.msra.mxu0 0.0
        %3587 = vmatprep.subr.mxu0 0.0
        %3588 = vmatpush1.msra.mxu0 0.0
        %3589 = vmatprep.subr.mxu0 0.0
        %3590 = vmatpush1.msra.mxu0 0.0
        %3591 = vmatprep.subr.mxu0 0.0
        %3592 = vmatpush1.msra.mxu0 0.0
        %3593 = vmatprep.subr.mxu0 0.0
        %3594 = vmatpush1.msra.mxu0 0.0
        %3595 = vmatprep.subr.mxu0 0.0
        %3596 = vmatpush1.msra.mxu0 0.0
        %3597 = vmatprep.subr.mxu0 0.0
        %3598 = vmatpush1.msra.mxu0 0.0
        %3599 = vmatprep.subr.mxu0 0.0
        %3600 = vmatpush1.msra.mxu0 0.0
        %3601 = vmatprep.subr.mxu0 0.0
        %3602 = vmatpush1.msra.mxu0 0.0
        %3603 = vmatprep.subr.mxu0 0.0
        %3604 = vmatpush1.msra.mxu0 0.0
        %3605 = vmatprep.subr.mxu0 0.0
        %3606 = vmatpush1.msra.mxu0 0.0
        %3607 = vmatprep.subr.mxu0 0.0
        %3608 = vmatpush1.msra.mxu0 0.0
        %3609 = vmatprep.subr.mxu0 0.0
        %3610 = vmatpush1.msra.mxu0 0.0
        %3611 = vmatprep.subr.mxu0 0.0
        %3612 = vmatpush1.msra.mxu0 0.0
        %3613 = vmatprep.subr.mxu0 0.0
        %3614 = vmatpush1.msra.mxu0 0.0
        %3615 = vmatprep.subr.mxu0 0.0
        %3616 = vmatpush1.msra.mxu0 0.0
        %3617 = vmatprep.subr.mxu0 0.0
        %3618 = vmatpush1.msra.mxu0 0.0
        %3619 = vmatprep.subr.mxu0 0.0
        %3620 = vmatpush1.msra.mxu0 0.0
        %3621 = vmatprep.subr.mxu0 0.0
        %3622 = vmatpush1.msra.mxu0 0.0
        %3623 = vmatprep.subr.mxu0 0.0
        %3624 = vmatpush1.msra.mxu0 0.0
        %3625 = vmatprep.subr.mxu0 0.0
        %3626 = vmatpush1.msra.mxu0 0.0
        %3627 = vmatprep.subr.mxu0 0.0
        %3628 = vmatpush1.msra.mxu0 0.0
        %3629 = vmatprep.subr.mxu0 0.0
        %3630 = vmatpush1.msra.mxu0 0.0
        %3631 = vmatprep.subr.mxu0 0.0
        %3632 = vmatpush1.msra.mxu0 0.0
        %3633 = vmatprep.subr.mxu0 0.0
        %3634 = vmatpush1.msra.mxu0 0.0
        %3635 = vmatprep.subr.mxu0 0.0
        %3636 = vmatpush1.msra.mxu0 0.0
        %3637 = vmatprep.subr.mxu0 0.0
        %3638 = vmatpush1.msra.mxu0 0.0
        %3639 = vmatprep.mubr.f32.mxu0 0.0
        %3640 = vmatmul.mubr.f32.gmra.mrb[0].mxu0 %v596
        %v3641 = vpop.f32.mrb[0].mxu0
        %v3642 = vadd.f32 0.0, %v3641
        %v3643 = vpop.f32.mrb[0].mxu0
        %3644 = vdwg.mxu0
        %v3645 = vadd.f32 %v3534, %v3642
        %v3646 = vcombine.high %v3557, %v3564
        %v3648 = vunpack.c.l.s4 1966171168
        %v3649 = vunpack.c.0.s8 %v3648
        %v3650 = vlaneseq
        %v3651 = vshrl.u32 %v3650, 7
        %v3652 = vsub.s32 %v3649, %v3651
        %v3653 = vrot.slane %v3646, %v3652
        %3654 = vrot.lane.b32.xlu0 %v3572, 127
        %v3655 = vpop.permute.xlu0 %3654
        %3656 = vrot.lane.b32.xlu0 %v3653, 127
        %v3657 = vpop.permute.xlu0 %3656
        %v3658 = vsel %vm404, %v3655, %v3657
        %v3659 = vsel %vm410, %v3658, 0
        %3661 = vmatprep.subr.mxu0 0.0
        %3662 = vmatpush1.msra.mxu0 %v3659
        %3663 = vmatprep.subr.mxu0 0.0
        %3664 = vmatpush1.msra.mxu0 0.0
        %3665 = vmatprep.subr.mxu0 0.0
        %3666 = vmatpush1.msra.mxu0 0.0
        %3667 = vmatprep.subr.mxu0 0.0
        %3668 = vmatpush1.msra.mxu0 0.0
        %3669 = vmatprep.subr.mxu0 0.0
        %3670 = vmatpush1.msra.mxu0 0.0
        %3671 = vmatprep.subr.mxu0 0.0
        %3672 = vmatpush1.msra.mxu0 0.0
        %3673 = vmatprep.subr.mxu0 0.0
        %3674 = vmatpush1.msra.mxu0 0.0
        %3675 = vmatprep.subr.mxu0 0.0
        %3676 = vmatpush1.msra.mxu0 0.0
        %3677 = vmatprep.subr.mxu0 0.0
        %3678 = vmatpush1.msra.mxu0 0.0
        %3679 = vmatprep.subr.mxu0 0.0
        %3680 = vmatpush1.msra.mxu0 0.0
        %3681 = vmatprep.subr.mxu0 0.0
        %3682 = vmatpush1.msra.mxu0 0.0
        %3683 = vmatprep.subr.mxu0 0.0
        %3684 = vmatpush1.msra.mxu0 0.0
        %3685 = vmatprep.subr.mxu0 0.0
        %3686 = vmatpush1.msra.mxu0 0.0
        %3687 = vmatprep.subr.mxu0 0.0
        %3688 = vmatpush1.msra.mxu0 0.0
        %3689 = vmatprep.subr.mxu0 0.0
        %3690 = vmatpush1.msra.mxu0 0.0
        %3691 = vmatprep.subr.mxu0 0.0
        %3692 = vmatpush1.msra.mxu0 0.0
        %3693 = vmatprep.subr.mxu0 0.0
        %3694 = vmatpush1.msra.mxu0 0.0
        %3695 = vmatprep.subr.mxu0 0.0
        %3696 = vmatpush1.msra.mxu0 0.0
        %3697 = vmatprep.subr.mxu0 0.0
        %3698 = vmatpush1.msra.mxu0 0.0
        %3699 = vmatprep.subr.mxu0 0.0
        %3700 = vmatpush1.msra.mxu0 0.0
        %3701 = vmatprep.subr.mxu0 0.0
        %3702 = vmatpush1.msra.mxu0 0.0
        %3703 = vmatprep.subr.mxu0 0.0
        %3704 = vmatpush1.msra.mxu0 0.0
        %3705 = vmatprep.subr.mxu0 0.0
        %3706 = vmatpush1.msra.mxu0 0.0
        %3707 = vmatprep.subr.mxu0 0.0
        %3708 = vmatpush1.msra.mxu0 0.0
        %3709 = vmatprep.subr.mxu0 0.0
        %3710 = vmatpush1.msra.mxu0 0.0
        %3711 = vmatprep.subr.mxu0 0.0
        %3712 = vmatpush1.msra.mxu0 0.0
        %3713 = vmatprep.subr.mxu0 0.0
        %3714 = vmatpush1.msra.mxu0 0.0
        %3715 = vmatprep.subr.mxu0 0.0
        %3716 = vmatpush1.msra.mxu0 0.0
        %3717 = vmatprep.subr.mxu0 0.0
        %3718 = vmatpush1.msra.mxu0 0.0
        %3719 = vmatprep.subr.mxu0 0.0
        %3720 = vmatpush1.msra.mxu0 0.0
        %3721 = vmatprep.subr.mxu0 0.0
        %3722 = vmatpush1.msra.mxu0 0.0
        %3723 = vmatprep.subr.mxu0 0.0
        %3724 = vmatpush1.msra.mxu0 0.0
        %3725 = vmatprep.mubr.f32.mxu0 0.0
        %3726 = vmatmul.mubr.f32.gmra.mrb[0].mxu0 %v687
        %v3727 = vpop.f32.mrb[0].mxu0
        %v3728 = vadd.f32 0.0, %v3727
        %v3729 = vpop.f32.mrb[0].mxu0
        %3730 = vdwg.mxu0
        %v3731 = vadd.f32 %v3645, %v3728
        %s3732 = scalar_lea.vmem %s306, 5 [#allocation6]
        %v3733 = vld [vmem:[%s3732] ss:$8 sm:$0x3]
        %s3734 = scalar_lea.vmem %s306, 21 [#allocation6]
        %v3735 = vld [vmem:[%s3734] ss:$8 sm:$0x3]
        %s3736 = scalar_lea.vmem %s306, 37 [#allocation6]
        %v3737 = vld [vmem:[%s3736] ss:$8 sm:$0x3]
        %s3738 = scalar_lea.vmem %s306, 53 [#allocation6]
        %v3739 = vld [vmem:[%s3738] ss:$8 sm:$0x3]
        %v3744 = vcombine.low %v3733, %v3735
        %v3745 = vcombine.low %v3737, %v3739
        %v3747 = vunpack.c.l.s4 1966171168
        %v3748 = vunpack.c.0.s8 %v3747
        %v3749 = vlaneseq
        %v3750 = vshrl.u32 %v3749, 7
        %v3751 = vsub.s32 %v3748, %v3750
        %v3752 = vrot.slane %v3744, %v3751
        %v3754 = vunpack.c.l.s4 1966171168
        %v3755 = vunpack.c.0.s8 %v3754
        %v3756 = vlaneseq
        %v3757 = vshrl.u32 %v3756, 7
        %v3758 = vsub.s32 %v3755, %v3757
        %v3759 = vrot.slane %v3745, %v3758
        %v3760 = vcombine.low %v3752, %v3759
        %v3762 = vunpack.c.l.s4 1966171168
        %v3763 = vunpack.c.0.s8 %v3762
        %v3764 = vlaneseq
        %v3765 = vshrl.u32 %v3764, 7
        %v3766 = vsub.s32 %v3763, %v3765
        %v3767 = vrot.slane %v3760, %v3766
        %v3768 = vsel %vm410, %v3767, 0
        %3770 = vmatprep.subr.mxu0 0.0
        %3771 = vmatpush1.msra.mxu0 %v3768
        %3772 = vmatprep.subr.mxu0 0.0
        %3773 = vmatpush1.msra.mxu0 0.0
        %3774 = vmatprep.subr.mxu0 0.0
        %3775 = vmatpush1.msra.mxu0 0.0
        %3776 = vmatprep.subr.mxu0 0.0
        %3777 = vmatpush1.msra.mxu0 0.0
        %3778 = vmatprep.subr.mxu0 0.0
        %3779 = vmatpush1.msra.mxu0 0.0
        %3780 = vmatprep.subr.mxu0 0.0
        %3781 = vmatpush1.msra.mxu0 0.0
        %3782 = vmatprep.subr.mxu0 0.0
        %3783 = vmatpush1.msra.mxu0 0.0
        %3784 = vmatprep.subr.mxu0 0.0
        %3785 = vmatpush1.msra.mxu0 0.0
        %3786 = vmatprep.subr.mxu0 0.0
        %3787 = vmatpush1.msra.mxu0 0.0
        %3788 = vmatprep.subr.mxu0 0.0
        %3789 = vmatpush1.msra.mxu0 0.0
        %3790 = vmatprep.subr.mxu0 0.0
        %3791 = vmatpush1.msra.mxu0 0.0
        %3792 = vmatprep.subr.mxu0 0.0
        %3793 = vmatpush1.msra.mxu0 0.0
        %3794 = vmatprep.subr.mxu0 0.0
        %3795 = vmatpush1.msra.mxu0 0.0
        %3796 = vmatprep.subr.mxu0 0.0
        %3797 = vmatpush1.msra.mxu0 0.0
        %3798 = vmatprep.subr.mxu0 0.0
        %3799 = vmatpush1.msra.mxu0 0.0
        %3800 = vmatprep.subr.mxu0 0.0
        %3801 = vmatpush1.msra.mxu0 0.0
        %3802 = vmatprep.subr.mxu0 0.0
        %3803 = vmatpush1.msra.mxu0 0.0
        %3804 = vmatprep.subr.mxu0 0.0
        %3805 = vmatpush1.msra.mxu0 0.0
        %3806 = vmatprep.subr.mxu0 0.0
        %3807 = vmatpush1.msra.mxu0 0.0
        %3808 = vmatprep.subr.mxu0 0.0
        %3809 = vmatpush1.msra.mxu0 0.0
        %3810 = vmatprep.subr.mxu0 0.0
        %3811 = vmatpush1.msra.mxu0 0.0
        %3812 = vmatprep.subr.mxu0 0.0
        %3813 = vmatpush1.msra.mxu0 0.0
        %3814 = vmatprep.subr.mxu0 0.0
        %3815 = vmatpush1.msra.mxu0 0.0
        %3816 = vmatprep.subr.mxu0 0.0
        %3817 = vmatpush1.msra.mxu0 0.0
        %3818 = vmatprep.subr.mxu0 0.0
        %3819 = vmatpush1.msra.mxu0 0.0
        %3820 = vmatprep.subr.mxu0 0.0
        %3821 = vmatpush1.msra.mxu0 0.0
        %3822 = vmatprep.subr.mxu0 0.0
        %3823 = vmatpush1.msra.mxu0 0.0
        %3824 = vmatprep.subr.mxu0 0.0
        %3825 = vmatpush1.msra.mxu0 0.0
        %3826 = vmatprep.subr.mxu0 0.0
        %3827 = vmatpush1.msra.mxu0 0.0
        %3828 = vmatprep.subr.mxu0 0.0
        %3829 = vmatpush1.msra.mxu0 0.0
        %3830 = vmatprep.subr.mxu0 0.0
        %3831 = vmatpush1.msra.mxu0 0.0
        %3832 = vmatprep.subr.mxu0 0.0
        %3833 = vmatpush1.msra.mxu0 0.0
        %3834 = vmatprep.mubr.f32.mxu0 0.0
        %3835 = vmatmul.mubr.f32.gmra.mrb[0].mxu0 %v800
        %v3836 = vpop.f32.mrb[0].mxu0
        %v3837 = vadd.f32 0.0, %v3836
        %v3838 = vpop.f32.mrb[0].mxu0
        %3839 = vdwg.mxu0
        %v3840 = vadd.f32 %v3731, %v3837
        %v3841 = vcombine.high %v3752, %v3759
        %v3843 = vunpack.c.l.s4 1966171168
        %v3844 = vunpack.c.0.s8 %v3843
        %v3845 = vlaneseq
        %v3846 = vshrl.u32 %v3845, 7
        %v3847 = vsub.s32 %v3844, %v3846
        %v3848 = vrot.slane %v3841, %v3847
        %3849 = vrot.lane.b32.xlu0 %v3767, 127
        %v3850 = vpop.permute.xlu0 %3849
        %3851 = vrot.lane.b32.xlu0 %v3848, 127
        %v3852 = vpop.permute.xlu0 %3851
        %v3853 = vsel %vm404, %v3850, %v3852
        %v3854 = vsel %vm410, %v3853, 0
        %3856 = vmatprep.subr.mxu0 0.0
        %3857 = vmatpush1.msra.mxu0 %v3854
        %3858 = vmatprep.subr.mxu0 0.0
        %3859 = vmatpush1.msra.mxu0 0.0
        %3860 = vmatprep.subr.mxu0 0.0
        %3861 = vmatpush1.msra.mxu0 0.0
        %3862 = vmatprep.subr.mxu0 0.0
        %3863 = vmatpush1.msra.mxu0 0.0
        %3864 = vmatprep.subr.mxu0 0.0
        %3865 = vmatpush1.msra.mxu0 0.0
        %3866 = vmatprep.subr.mxu0 0.0
        %3867 = vmatpush1.msra.mxu0 0.0
        %3868 = vmatprep.subr.mxu0 0.0
        %3869 = vmatpush1.msra.mxu0 0.0
        %3870 = vmatprep.subr.mxu0 0.0
        %3871 = vmatpush1.msra.mxu0 0.0
        %3872 = vmatprep.subr.mxu0 0.0
        %3873 = vmatpush1.msra.mxu0 0.0
        %3874 = vmatprep.subr.mxu0 0.0
        %3875 = vmatpush1.msra.mxu0 0.0
        %3876 = vmatprep.subr.mxu0 0.0
        %3877 = vmatpush1.msra.mxu0 0.0
        %3878 = vmatprep.subr.mxu0 0.0
        %3879 = vmatpush1.msra.mxu0 0.0
        %3880 = vmatprep.subr.mxu0 0.0
        %3881 = vmatpush1.msra.mxu0 0.0
        %3882 = vmatprep.subr.mxu0 0.0
        %3883 = vmatpush1.msra.mxu0 0.0
        %3884 = vmatprep.subr.mxu0 0.0
        %3885 = vmatpush1.msra.mxu0 0.0
        %3886 = vmatprep.subr.mxu0 0.0
        %3887 = vmatpush1.msra.mxu0 0.0
        %3888 = vmatprep.subr.mxu0 0.0
        %3889 = vmatpush1.msra.mxu0 0.0
        %3890 = vmatprep.subr.mxu0 0.0
        %3891 = vmatpush1.msra.mxu0 0.0
        %3892 = vmatprep.subr.mxu0 0.0
        %3893 = vmatpush1.msra.mxu0 0.0
        %3894 = vmatprep.subr.mxu0 0.0
        %3895 = vmatpush1.msra.mxu0 0.0
        %3896 = vmatprep.subr.mxu0 0.0
        %3897 = vmatpush1.msra.mxu0 0.0
        %3898 = vmatprep.subr.mxu0 0.0
        %3899 = vmatpush1.msra.mxu0 0.0
        %3900 = vmatprep.subr.mxu0 0.0
        %3901 = vmatpush1.msra.mxu0 0.0
        %3902 = vmatprep.subr.mxu0 0.0
        %3903 = vmatpush1.msra.mxu0 0.0
        %3904 = vmatprep.subr.mxu0 0.0
        %3905 = vmatpush1.msra.mxu0 0.0
        %3906 = vmatprep.subr.mxu0 0.0
        %3907 = vmatpush1.msra.mxu0 0.0
        %3908 = vmatprep.subr.mxu0 0.0
        %3909 = vmatpush1.msra.mxu0 0.0
        %3910 = vmatprep.subr.mxu0 0.0
        %3911 = vmatpush1.msra.mxu0 0.0
        %3912 = vmatprep.subr.mxu0 0.0
        %3913 = vmatpush1.msra.mxu0 0.0
        %3914 = vmatprep.subr.mxu0 0.0
        %3915 = vmatpush1.msra.mxu0 0.0
        %3916 = vmatprep.subr.mxu0 0.0
        %3917 = vmatpush1.msra.mxu0 0.0
        %3918 = vmatprep.subr.mxu0 0.0
        %3919 = vmatpush1.msra.mxu0 0.0
        %3920 = vmatprep.mubr.f32.mxu0 0.0
        %3921 = vmatmul.mubr.f32.gmra.mrb[0].mxu0 %v891
        %v3922 = vpop.f32.mrb[0].mxu0
        %v3923 = vadd.f32 0.0, %v3922
        %v3924 = vpop.f32.mrb[0].mxu0
        %3925 = vdwg.mxu0
        %v3926 = vadd.f32 %v3840, %v3923
        %v3927 = vadd.f32 %v3926, %v970
        %3928 = vadd.xlane.f32.xlu0 %v3927
        %v3929 = vpop.xlane.xlu0 %3928
        %v3930 = vadd.f32 %v3339, %v3929
        %v3931 = vmul.f32 %v3927, %v3927
        %3932 = vadd.xlane.f32.xlu0 %v3931
        %v3933 = vpop.xlane.xlu0 %3932
        %v3934 = vadd.f32 %v3343, %v3933
        %s3935 = scalar_lea.vmem %s288, 6 [#allocation2]
        %v3936 = vld [vmem:[%s3935] ss:$8 sm:$0x3]
        %s3937 = scalar_lea.vmem %s288, 22 [#allocation2]
        %v3938 = vld [vmem:[%s3937] ss:$8 sm:$0x3]
        %s3939 = scalar_lea.vmem %s288, 38 [#allocation2]
        %v3940 = vld [vmem:[%s3939] ss:$8 sm:$0x3]
        %s3941 = scalar_lea.vmem %s288, 54 [#allocation2]
        %v3942 = vld [vmem:[%s3941] ss:$8 sm:$0x3]
        %v3947 = vcombine.low %v3936, %v3938
        %v3948 = vcombine.low %v3940, %v3942
        %v3950 = vunpack.c.l.s4 1966171168
        %v3951 = vunpack.c.0.s8 %v3950
        %v3952 = vlaneseq
        %v3953 = vshrl.u32 %v3952, 7
        %v3954 = vsub.s32 %v3951, %v3953
        %v3955 = vrot.slane %v3947, %v3954
        %v3957 = vunpack.c.l.s4 1966171168
        %v3958 = vunpack.c.0.s8 %v3957
        %v3959 = vlaneseq
        %v3960 = vshrl.u32 %v3959, 7
        %v3961 = vsub.s32 %v3958, %v3960
        %v3962 = vrot.slane %v3948, %v3961
        %v3963 = vcombine.low %v3955, %v3962
        %v3964 = vcombine.high %v3955, %v3962
        %v3966 = vunpack.c.l.s4 1966171168
        %v3967 = vunpack.c.0.s8 %v3966
        %v3968 = vlaneseq
        %v3969 = vshrl.u32 %v3968, 7
        %v3970 = vsub.s32 %v3967, %v3969
        %v3971 = vrot.slane %v3963, %v3970
        %v3973 = vunpack.c.l.s4 1966171168
        %v3974 = vunpack.c.0.s8 %v3973
        %v3975 = vlaneseq
        %v3976 = vshrl.u32 %v3975, 7
        %v3977 = vsub.s32 %v3974, %v3976
        %v3978 = vrot.slane %v3964, %v3977
        %3979 = vrot.lane.b32.xlu0 %v3971, 127
        %v3980 = vpop.permute.xlu0 %3979
        %3981 = vrot.lane.b32.xlu0 %v3978, 127
        %v3982 = vpop.permute.xlu0 %3981
        %v3983 = vsel %vm404, %v3980, %v3982
        %v3984 = vsel %vm410, %v3983, 0
        %3986 = vmatprep.subr.mxu0 0.0
        %3987 = vmatpush1.msra.mxu0 %v3984
        %3988 = vmatprep.subr.mxu0 0.0
        %3989 = vmatpush1.msra.mxu0 0.0
        %3990 = vmatprep.subr.mxu0 0.0
        %3991 = vmatpush1.msra.mxu0 0.0
        %3992 = vmatprep.subr.mxu0 0.0
        %3993 = vmatpush1.msra.mxu0 0.0
        %3994 = vmatprep.subr.mxu0 0.0
        %3995 = vmatpush1.msra.mxu0 0.0
        %3996 = vmatprep.subr.mxu0 0.0
        %3997 = vmatpush1.msra.mxu0 0.0
        %3998 = vmatprep.subr.mxu0 0.0
        %3999 = vmatpush1.msra.mxu0 0.0
        %4000 = vmatprep.subr.mxu0 0.0
        %4001 = vmatpush1.msra.mxu0 0.0
        %4002 = vmatprep.subr.mxu0 0.0
        %4003 = vmatpush1.msra.mxu0 0.0
        %4004 = vmatprep.subr.mxu0 0.0
        %4005 = vmatpush1.msra.mxu0 0.0
        %4006 = vmatprep.subr.mxu0 0.0
        %4007 = vmatpush1.msra.mxu0 0.0
        %4008 = vmatprep.subr.mxu0 0.0
        %4009 = vmatpush1.msra.mxu0 0.0
        %4010 = vmatprep.subr.mxu0 0.0
        %4011 = vmatpush1.msra.mxu0 0.0
        %4012 = vmatprep.subr.mxu0 0.0
        %4013 = vmatpush1.msra.mxu0 0.0
        %4014 = vmatprep.subr.mxu0 0.0
        %4015 = vmatpush1.msra.mxu0 0.0
        %4016 = vmatprep.subr.mxu0 0.0
        %4017 = vmatpush1.msra.mxu0 0.0
        %4018 = vmatprep.subr.mxu0 0.0
        %4019 = vmatpush1.msra.mxu0 0.0
        %4020 = vmatprep.subr.mxu0 0.0
        %4021 = vmatpush1.msra.mxu0 0.0
        %4022 = vmatprep.subr.mxu0 0.0
        %4023 = vmatpush1.msra.mxu0 0.0
        %4024 = vmatprep.subr.mxu0 0.0
        %4025 = vmatpush1.msra.mxu0 0.0
        %4026 = vmatprep.subr.mxu0 0.0
        %4027 = vmatpush1.msra.mxu0 0.0
        %4028 = vmatprep.subr.mxu0 0.0
        %4029 = vmatpush1.msra.mxu0 0.0
        %4030 = vmatprep.subr.mxu0 0.0
        %4031 = vmatpush1.msra.mxu0 0.0
        %4032 = vmatprep.subr.mxu0 0.0
        %4033 = vmatpush1.msra.mxu0 0.0
        %4034 = vmatprep.subr.mxu0 0.0
        %4035 = vmatpush1.msra.mxu0 0.0
        %4036 = vmatprep.subr.mxu0 0.0
        %4037 = vmatpush1.msra.mxu0 0.0
        %4038 = vmatprep.subr.mxu0 0.0
        %4039 = vmatpush1.msra.mxu0 0.0
        %4040 = vmatprep.subr.mxu0 0.0
        %4041 = vmatpush1.msra.mxu0 0.0
        %4042 = vmatprep.subr.mxu0 0.0
        %4043 = vmatpush1.msra.mxu0 0.0
        %4044 = vmatprep.subr.mxu0 0.0
        %4045 = vmatpush1.msra.mxu0 0.0
        %4046 = vmatprep.subr.mxu0 0.0
        %4047 = vmatpush1.msra.mxu0 0.0
        %4048 = vmatprep.subr.mxu0 0.0
        %4049 = vmatpush1.msra.mxu0 0.0
        %4050 = vmatprep.mubr.f32.mxu0 0.0
        %4051 = vmatmul.mubr.f32.gmra.mrb[0].mxu0 %v408
        %v4052 = vpop.f32.mrb[0].mxu0
        %v4053 = vadd.f32 0.0, %v4052
        %v4054 = vpop.f32.mrb[0].mxu0
        %4055 = vdwg.mxu0
        %v4056 = vsel %vm410, %v3971, 0
        %4058 = vmatprep.subr.mxu0 0.0
        %4059 = vmatpush1.msra.mxu0 %v4056
        %4060 = vmatprep.subr.mxu0 0.0
        %4061 = vmatpush1.msra.mxu0 0.0
        %4062 = vmatprep.subr.mxu0 0.0
        %4063 = vmatpush1.msra.mxu0 0.0
        %4064 = vmatprep.subr.mxu0 0.0
        %4065 = vmatpush1.msra.mxu0 0.0
        %4066 = vmatprep.subr.mxu0 0.0
        %4067 = vmatpush1.msra.mxu0 0.0
        %4068 = vmatprep.subr.mxu0 0.0
        %4069 = vmatpush1.msra.mxu0 0.0
        %4070 = vmatprep.subr.mxu0 0.0
        %4071 = vmatpush1.msra.mxu0 0.0
        %4072 = vmatprep.subr.mxu0 0.0
        %4073 = vmatpush1.msra.mxu0 0.0
        %4074 = vmatprep.subr.mxu0 0.0
        %4075 = vmatpush1.msra.mxu0 0.0
        %4076 = vmatprep.subr.mxu0 0.0
        %4077 = vmatpush1.msra.mxu0 0.0
        %4078 = vmatprep.subr.mxu0 0.0
        %4079 = vmatpush1.msra.mxu0 0.0
        %4080 = vmatprep.subr.mxu0 0.0
        %4081 = vmatpush1.msra.mxu0 0.0
        %4082 = vmatprep.subr.mxu0 0.0
        %4083 = vmatpush1.msra.mxu0 0.0
        %4084 = vmatprep.subr.mxu0 0.0
        %4085 = vmatpush1.msra.mxu0 0.0
        %4086 = vmatprep.subr.mxu0 0.0
        %4087 = vmatpush1.msra.mxu0 0.0
        %4088 = vmatprep.subr.mxu0 0.0
        %4089 = vmatpush1.msra.mxu0 0.0
        %4090 = vmatprep.subr.mxu0 0.0
        %4091 = vmatpush1.msra.mxu0 0.0
        %4092 = vmatprep.subr.mxu0 0.0
        %4093 = vmatpush1.msra.mxu0 0.0
        %4094 = vmatprep.subr.mxu0 0.0
        %4095 = vmatpush1.msra.mxu0 0.0
        %4096 = vmatprep.subr.mxu0 0.0
        %4097 = vmatpush1.msra.mxu0 0.0
        %4098 = vmatprep.subr.mxu0 0.0
        %4099 = vmatpush1.msra.mxu0 0.0
        %4100 = vmatprep.subr.mxu0 0.0
        %4101 = vmatpush1.msra.mxu0 0.0
        %4102 = vmatprep.subr.mxu0 0.0
        %4103 = vmatpush1.msra.mxu0 0.0
        %4104 = vmatprep.subr.mxu0 0.0
        %4105 = vmatpush1.msra.mxu0 0.0
        %4106 = vmatprep.subr.mxu0 0.0
        %4107 = vmatpush1.msra.mxu0 0.0
        %4108 = vmatprep.subr.mxu0 0.0
        %4109 = vmatpush1.msra.mxu0 0.0
        %4110 = vmatprep.subr.mxu0 0.0
        %4111 = vmatpush1.msra.mxu0 0.0
        %4112 = vmatprep.subr.mxu0 0.0
        %4113 = vmatpush1.msra.mxu0 0.0
        %4114 = vmatprep.subr.mxu0 0.0
        %4115 = vmatpush1.msra.mxu0 0.0
        %4116 = vmatprep.subr.mxu0 0.0
        %4117 = vmatpush1.msra.mxu0 0.0
        %4118 = vmatprep.subr.mxu0 0.0
        %4119 = vmatpush1.msra.mxu0 0.0
        %4120 = vmatprep.subr.mxu0 0.0
        %4121 = vmatpush1.msra.mxu0 0.0
        %4122 = vmatprep.mubr.f32.mxu0 0.0
        %4123 = vmatmul.mubr.f32.gmra.mrb[0].mxu0 %v484
        %v4124 = vpop.f32.mrb[0].mxu0
        %v4125 = vadd.f32 %v4053, %v4124
        %v4126 = vpop.f32.mrb[0].mxu0
        %4127 = vdwg.mxu0
        %s4128 = scalar_lea.vmem %s297, 6 [#allocation4]
        %v4129 = vld [vmem:[%s4128] ss:$8 sm:$0x3]
        %s4130 = scalar_lea.vmem %s297, 22 [#allocation4]
        %v4131 = vld [vmem:[%s4130] ss:$8 sm:$0x3]
        %s4132 = scalar_lea.vmem %s297, 38 [#allocation4]
        %v4133 = vld [vmem:[%s4132] ss:$8 sm:$0x3]
        %s4134 = scalar_lea.vmem %s297, 54 [#allocation4]
        %v4135 = vld [vmem:[%s4134] ss:$8 sm:$0x3]
        %v4140 = vcombine.low %v4129, %v4131
        %v4141 = vcombine.low %v4133, %v4135
        %v4143 = vunpack.c.l.s4 1966171168
        %v4144 = vunpack.c.0.s8 %v4143
        %v4145 = vlaneseq
        %v4146 = vshrl.u32 %v4145, 7
        %v4147 = vsub.s32 %v4144, %v4146
        %v4148 = vrot.slane %v4140, %v4147
        %v4150 = vunpack.c.l.s4 1966171168
        %v4151 = vunpack.c.0.s8 %v4150
        %v4152 = vlaneseq
        %v4153 = vshrl.u32 %v4152, 7
        %v4154 = vsub.s32 %v4151, %v4153
        %v4155 = vrot.slane %v4141, %v4154
        %v4156 = vcombine.low %v4148, %v4155
        %v4158 = vunpack.c.l.s4 1966171168
        %v4159 = vunpack.c.0.s8 %v4158
        %v4160 = vlaneseq
        %v4161 = vshrl.u32 %v4160, 7
        %v4162 = vsub.s32 %v4159, %v4161
        %v4163 = vrot.slane %v4156, %v4162
        %v4164 = vsel %vm410, %v4163, 0
        %4166 = vmatprep.subr.mxu0 0.0
        %4167 = vmatpush1.msra.mxu0 %v4164
        %4168 = vmatprep.subr.mxu0 0.0
        %4169 = vmatpush1.msra.mxu0 0.0
        %4170 = vmatprep.subr.mxu0 0.0
        %4171 = vmatpush1.msra.mxu0 0.0
        %4172 = vmatprep.subr.mxu0 0.0
        %4173 = vmatpush1.msra.mxu0 0.0
        %4174 = vmatprep.subr.mxu0 0.0
        %4175 = vmatpush1.msra.mxu0 0.0
        %4176 = vmatprep.subr.mxu0 0.0
        %4177 = vmatpush1.msra.mxu0 0.0
        %4178 = vmatprep.subr.mxu0 0.0
        %4179 = vmatpush1.msra.mxu0 0.0
        %4180 = vmatprep.subr.mxu0 0.0
        %4181 = vmatpush1.msra.mxu0 0.0
        %4182 = vmatprep.subr.mxu0 0.0
        %4183 = vmatpush1.msra.mxu0 0.0
        %4184 = vmatprep.subr.mxu0 0.0
        %4185 = vmatpush1.msra.mxu0 0.0
        %4186 = vmatprep.subr.mxu0 0.0
        %4187 = vmatpush1.msra.mxu0 0.0
        %4188 = vmatprep.subr.mxu0 0.0
        %4189 = vmatpush1.msra.mxu0 0.0
        %4190 = vmatprep.subr.mxu0 0.0
        %4191 = vmatpush1.msra.mxu0 0.0
        %4192 = vmatprep.subr.mxu0 0.0
        %4193 = vmatpush1.msra.mxu0 0.0
        %4194 = vmatprep.subr.mxu0 0.0
        %4195 = vmatpush1.msra.mxu0 0.0
        %4196 = vmatprep.subr.mxu0 0.0
        %4197 = vmatpush1.msra.mxu0 0.0
        %4198 = vmatprep.subr.mxu0 0.0
        %4199 = vmatpush1.msra.mxu0 0.0
        %4200 = vmatprep.subr.mxu0 0.0
        %4201 = vmatpush1.msra.mxu0 0.0
        %4202 = vmatprep.subr.mxu0 0.0
        %4203 = vmatpush1.msra.mxu0 0.0
        %4204 = vmatprep.subr.mxu0 0.0
        %4205 = vmatpush1.msra.mxu0 0.0
        %4206 = vmatprep.subr.mxu0 0.0
        %4207 = vmatpush1.msra.mxu0 0.0
        %4208 = vmatprep.subr.mxu0 0.0
        %4209 = vmatpush1.msra.mxu0 0.0
        %4210 = vmatprep.subr.mxu0 0.0
        %4211 = vmatpush1.msra.mxu0 0.0
        %4212 = vmatprep.subr.mxu0 0.0
        %4213 = vmatpush1.msra.mxu0 0.0
        %4214 = vmatprep.subr.mxu0 0.0
        %4215 = vmatpush1.msra.mxu0 0.0
        %4216 = vmatprep.subr.mxu0 0.0
        %4217 = vmatpush1.msra.mxu0 0.0
        %4218 = vmatprep.subr.mxu0 0.0
        %4219 = vmatpush1.msra.mxu0 0.0
        %4220 = vmatprep.subr.mxu0 0.0
        %4221 = vmatpush1.msra.mxu0 0.0
        %4222 = vmatprep.subr.mxu0 0.0
        %4223 = vmatpush1.msra.mxu0 0.0
        %4224 = vmatprep.subr.mxu0 0.0
        %4225 = vmatpush1.msra.mxu0 0.0
        %4226 = vmatprep.subr.mxu0 0.0
        %4227 = vmatpush1.msra.mxu0 0.0
        %4228 = vmatprep.subr.mxu0 0.0
        %4229 = vmatpush1.msra.mxu0 0.0
        %4230 = vmatprep.mubr.f32.mxu0 0.0
        %4231 = vmatmul.mubr.f32.gmra.mrb[0].mxu0 %v596
        %v4232 = vpop.f32.mrb[0].mxu0
        %v4233 = vadd.f32 0.0, %v4232
        %v4234 = vpop.f32.mrb[0].mxu0
        %4235 = vdwg.mxu0
        %v4236 = vadd.f32 %v4125, %v4233
        %v4237 = vcombine.high %v4148, %v4155
        %v4239 = vunpack.c.l.s4 1966171168
        %v4240 = vunpack.c.0.s8 %v4239
        %v4241 = vlaneseq
        %v4242 = vshrl.u32 %v4241, 7
        %v4243 = vsub.s32 %v4240, %v4242
        %v4244 = vrot.slane %v4237, %v4243
        %4245 = vrot.lane.b32.xlu0 %v4163, 127
        %v4246 = vpop.permute.xlu0 %4245
        %4247 = vrot.lane.b32.xlu0 %v4244, 127
        %v4248 = vpop.permute.xlu0 %4247
        %v4249 = vsel %vm404, %v4246, %v4248
        %v4250 = vsel %vm410, %v4249, 0
        %4252 = vmatprep.subr.mxu0 0.0
        %4253 = vmatpush1.msra.mxu0 %v4250
        %4254 = vmatprep.subr.mxu0 0.0
        %4255 = vmatpush1.msra.mxu0 0.0
        %4256 = vmatprep.subr.mxu0 0.0
        %4257 = vmatpush1.msra.mxu0 0.0
        %4258 = vmatprep.subr.mxu0 0.0
        %4259 = vmatpush1.msra.mxu0 0.0
        %4260 = vmatprep.subr.mxu0 0.0
        %4261 = vmatpush1.msra.mxu0 0.0
        %4262 = vmatprep.subr.mxu0 0.0
        %4263 = vmatpush1.msra.mxu0 0.0
        %4264 = vmatprep.subr.mxu0 0.0
        %4265 = vmatpush1.msra.mxu0 0.0
        %4266 = vmatprep.subr.mxu0 0.0
        %4267 = vmatpush1.msra.mxu0 0.0
        %4268 = vmatprep.subr.mxu0 0.0
        %4269 = vmatpush1.msra.mxu0 0.0
        %4270 = vmatprep.subr.mxu0 0.0
        %4271 = vmatpush1.msra.mxu0 0.0
        %4272 = vmatprep.subr.mxu0 0.0
        %4273 = vmatpush1.msra.mxu0 0.0
        %4274 = vmatprep.subr.mxu0 0.0
        %4275 = vmatpush1.msra.mxu0 0.0
        %4276 = vmatprep.subr.mxu0 0.0
        %4277 = vmatpush1.msra.mxu0 0.0
        %4278 = vmatprep.subr.mxu0 0.0
        %4279 = vmatpush1.msra.mxu0 0.0
        %4280 = vmatprep.subr.mxu0 0.0
        %4281 = vmatpush1.msra.mxu0 0.0
        %4282 = vmatprep.subr.mxu0 0.0
        %4283 = vmatpush1.msra.mxu0 0.0
        %4284 = vmatprep.subr.mxu0 0.0
        %4285 = vmatpush1.msra.mxu0 0.0
        %4286 = vmatprep.subr.mxu0 0.0
        %4287 = vmatpush1.msra.mxu0 0.0
        %4288 = vmatprep.subr.mxu0 0.0
        %4289 = vmatpush1.msra.mxu0 0.0
        %4290 = vmatprep.subr.mxu0 0.0
        %4291 = vmatpush1.msra.mxu0 0.0
        %4292 = vmatprep.subr.mxu0 0.0
        %4293 = vmatpush1.msra.mxu0 0.0
        %4294 = vmatprep.subr.mxu0 0.0
        %4295 = vmatpush1.msra.mxu0 0.0
        %4296 = vmatprep.subr.mxu0 0.0
        %4297 = vmatpush1.msra.mxu0 0.0
        %4298 = vmatprep.subr.mxu0 0.0
        %4299 = vmatpush1.msra.mxu0 0.0
        %4300 = vmatprep.subr.mxu0 0.0
        %4301 = vmatpush1.msra.mxu0 0.0
        %4302 = vmatprep.subr.mxu0 0.0
        %4303 = vmatpush1.msra.mxu0 0.0
        %4304 = vmatprep.subr.mxu0 0.0
        %4305 = vmatpush1.msra.mxu0 0.0
        %4306 = vmatprep.subr.mxu0 0.0
        %4307 = vmatpush1.msra.mxu0 0.0
        %4308 = vmatprep.subr.mxu0 0.0
        %4309 = vmatpush1.msra.mxu0 0.0
        %4310 = vmatprep.subr.mxu0 0.0
        %4311 = vmatpush1.msra.mxu0 0.0
        %4312 = vmatprep.subr.mxu0 0.0
        %4313 = vmatpush1.msra.mxu0 0.0
        %4314 = vmatprep.subr.mxu0 0.0
        %4315 = vmatpush1.msra.mxu0 0.0
        %4316 = vmatprep.mubr.f32.mxu0 0.0
        %4317 = vmatmul.mubr.f32.gmra.mrb[0].mxu0 %v687
        %v4318 = vpop.f32.mrb[0].mxu0
        %v4319 = vadd.f32 0.0, %v4318
        %v4320 = vpop.f32.mrb[0].mxu0
        %4321 = vdwg.mxu0
        %v4322 = vadd.f32 %v4236, %v4319
        %s4323 = scalar_lea.vmem %s306, 6 [#allocation6]
        %v4324 = vld [vmem:[%s4323] ss:$8 sm:$0x3]
        %s4325 = scalar_lea.vmem %s306, 22 [#allocation6]
        %v4326 = vld [vmem:[%s4325] ss:$8 sm:$0x3]
        %s4327 = scalar_lea.vmem %s306, 38 [#allocation6]
        %v4328 = vld [vmem:[%s4327] ss:$8 sm:$0x3]
        %s4329 = scalar_lea.vmem %s306, 54 [#allocation6]
        %v4330 = vld [vmem:[%s4329] ss:$8 sm:$0x3]
        %v4335 = vcombine.low %v4324, %v4326
        %v4336 = vcombine.low %v4328, %v4330
        %v4338 = vunpack.c.l.s4 1966171168
        %v4339 = vunpack.c.0.s8 %v4338
        %v4340 = vlaneseq
        %v4341 = vshrl.u32 %v4340, 7
        %v4342 = vsub.s32 %v4339, %v4341
        %v4343 = vrot.slane %v4335, %v4342
        %v4345 = vunpack.c.l.s4 1966171168
        %v4346 = vunpack.c.0.s8 %v4345
        %v4347 = vlaneseq
        %v4348 = vshrl.u32 %v4347, 7
        %v4349 = vsub.s32 %v4346, %v4348
        %v4350 = vrot.slane %v4336, %v4349
        %v4351 = vcombine.low %v4343, %v4350
        %v4353 = vunpack.c.l.s4 1966171168
        %v4354 = vunpack.c.0.s8 %v4353
        %v4355 = vlaneseq
        %v4356 = vshrl.u32 %v4355, 7
        %v4357 = vsub.s32 %v4354, %v4356
        %v4358 = vrot.slane %v4351, %v4357
        %v4359 = vsel %vm410, %v4358, 0
        %4361 = vmatprep.subr.mxu0 0.0
        %4362 = vmatpush1.msra.mxu0 %v4359
        %4363 = vmatprep.subr.mxu0 0.0
        %4364 = vmatpush1.msra.mxu0 0.0
        %4365 = vmatprep.subr.mxu0 0.0
        %4366 = vmatpush1.msra.mxu0 0.0
        %4367 = vmatprep.subr.mxu0 0.0
        %4368 = vmatpush1.msra.mxu0 0.0
        %4369 = vmatprep.subr.mxu0 0.0
        %4370 = vmatpush1.msra.mxu0 0.0
        %4371 = vmatprep.subr.mxu0 0.0
        %4372 = vmatpush1.msra.mxu0 0.0
        %4373 = vmatprep.subr.mxu0 0.0
        %4374 = vmatpush1.msra.mxu0 0.0
        %4375 = vmatprep.subr.mxu0 0.0
        %4376 = vmatpush1.msra.mxu0 0.0
        %4377 = vmatprep.subr.mxu0 0.0
        %4378 = vmatpush1.msra.mxu0 0.0
        %4379 = vmatprep.subr.mxu0 0.0
        %4380 = vmatpush1.msra.mxu0 0.0
        %4381 = vmatprep.subr.mxu0 0.0
        %4382 = vmatpush1.msra.mxu0 0.0
        %4383 = vmatprep.subr.mxu0 0.0
        %4384 = vmatpush1.msra.mxu0 0.0
        %4385 = vmatprep.subr.mxu0 0.0
        %4386 = vmatpush1.msra.mxu0 0.0
        %4387 = vmatprep.subr.mxu0 0.0
        %4388 = vmatpush1.msra.mxu0 0.0
        %4389 = vmatprep.subr.mxu0 0.0
        %4390 = vmatpush1.msra.mxu0 0.0
        %4391 = vmatprep.subr.mxu0 0.0
        %4392 = vmatpush1.msra.mxu0 0.0
        %4393 = vmatprep.subr.mxu0 0.0
        %4394 = vmatpush1.msra.mxu0 0.0
        %4395 = vmatprep.subr.mxu0 0.0
        %4396 = vmatpush1.msra.mxu0 0.0
        %4397 = vmatprep.subr.mxu0 0.0
        %4398 = vmatpush1.msra.mxu0 0.0
        %4399 = vmatprep.subr.mxu0 0.0
        %4400 = vmatpush1.msra.mxu0 0.0
        %4401 = vmatprep.subr.mxu0 0.0
        %4402 = vmatpush1.msra.mxu0 0.0
        %4403 = vmatprep.subr.mxu0 0.0
        %4404 = vmatpush1.msra.mxu0 0.0
        %4405 = vmatprep.subr.mxu0 0.0
        %4406 = vmatpush1.msra.mxu0 0.0
        %4407 = vmatprep.subr.mxu0 0.0
        %4408 = vmatpush1.msra.mxu0 0.0
        %4409 = vmatprep.subr.mxu0 0.0
        %4410 = vmatpush1.msra.mxu0 0.0
        %4411 = vmatprep.subr.mxu0 0.0
        %4412 = vmatpush1.msra.mxu0 0.0
        %4413 = vmatprep.subr.mxu0 0.0
        %4414 = vmatpush1.msra.mxu0 0.0
        %4415 = vmatprep.subr.mxu0 0.0
        %4416 = vmatpush1.msra.mxu0 0.0
        %4417 = vmatprep.subr.mxu0 0.0
        %4418 = vmatpush1.msra.mxu0 0.0
        %4419 = vmatprep.subr.mxu0 0.0
        %4420 = vmatpush1.msra.mxu0 0.0
        %4421 = vmatprep.subr.mxu0 0.0
        %4422 = vmatpush1.msra.mxu0 0.0
        %4423 = vmatprep.subr.mxu0 0.0
        %4424 = vmatpush1.msra.mxu0 0.0
        %4425 = vmatprep.mubr.f32.mxu0 0.0
        %4426 = vmatmul.mubr.f32.gmra.mrb[0].mxu0 %v800
        %v4427 = vpop.f32.mrb[0].mxu0
        %v4428 = vadd.f32 0.0, %v4427
        %v4429 = vpop.f32.mrb[0].mxu0
        %4430 = vdwg.mxu0
        %v4431 = vadd.f32 %v4322, %v4428
        %v4432 = vcombine.high %v4343, %v4350
        %v4434 = vunpack.c.l.s4 1966171168
        %v4435 = vunpack.c.0.s8 %v4434
        %v4436 = vlaneseq
        %v4437 = vshrl.u32 %v4436, 7
        %v4438 = vsub.s32 %v4435, %v4437
        %v4439 = vrot.slane %v4432, %v4438
        %4440 = vrot.lane.b32.xlu0 %v4358, 127
        %v4441 = vpop.permute.xlu0 %4440
        %4442 = vrot.lane.b32.xlu0 %v4439, 127
        %v4443 = vpop.permute.xlu0 %4442
        %v4444 = vsel %vm404, %v4441, %v4443
        %v4445 = vsel %vm410, %v4444, 0
        %4447 = vmatprep.subr.mxu0 0.0
        %4448 = vmatpush1.msra.mxu0 %v4445
        %4449 = vmatprep.subr.mxu0 0.0
        %4450 = vmatpush1.msra.mxu0 0.0
        %4451 = vmatprep.subr.mxu0 0.0
        %4452 = vmatpush1.msra.mxu0 0.0
        %4453 = vmatprep.subr.mxu0 0.0
        %4454 = vmatpush1.msra.mxu0 0.0
        %4455 = vmatprep.subr.mxu0 0.0
        %4456 = vmatpush1.msra.mxu0 0.0
        %4457 = vmatprep.subr.mxu0 0.0
        %4458 = vmatpush1.msra.mxu0 0.0
        %4459 = vmatprep.subr.mxu0 0.0
        %4460 = vmatpush1.msra.mxu0 0.0
        %4461 = vmatprep.subr.mxu0 0.0
        %4462 = vmatpush1.msra.mxu0 0.0
        %4463 = vmatprep.subr.mxu0 0.0
        %4464 = vmatpush1.msra.mxu0 0.0
        %4465 = vmatprep.subr.mxu0 0.0
        %4466 = vmatpush1.msra.mxu0 0.0
        %4467 = vmatprep.subr.mxu0 0.0
        %4468 = vmatpush1.msra.mxu0 0.0
        %4469 = vmatprep.subr.mxu0 0.0
        %4470 = vmatpush1.msra.mxu0 0.0
        %4471 = vmatprep.subr.mxu0 0.0
        %4472 = vmatpush1.msra.mxu0 0.0
        %4473 = vmatprep.subr.mxu0 0.0
        %4474 = vmatpush1.msra.mxu0 0.0
        %4475 = vmatprep.subr.mxu0 0.0
        %4476 = vmatpush1.msra.mxu0 0.0
        %4477 = vmatprep.subr.mxu0 0.0
        %4478 = vmatpush1.msra.mxu0 0.0
        %4479 = vmatprep.subr.mxu0 0.0
        %4480 = vmatpush1.msra.mxu0 0.0
        %4481 = vmatprep.subr.mxu0 0.0
        %4482 = vmatpush1.msra.mxu0 0.0
        %4483 = vmatprep.subr.mxu0 0.0
        %4484 = vmatpush1.msra.mxu0 0.0
        %4485 = vmatprep.subr.mxu0 0.0
        %4486 = vmatpush1.msra.mxu0 0.0
        %4487 = vmatprep.subr.mxu0 0.0
        %4488 = vmatpush1.msra.mxu0 0.0
        %4489 = vmatprep.subr.mxu0 0.0
        %4490 = vmatpush1.msra.mxu0 0.0
        %4491 = vmatprep.subr.mxu0 0.0
        %4492 = vmatpush1.msra.mxu0 0.0
        %4493 = vmatprep.subr.mxu0 0.0
        %4494 = vmatpush1.msra.mxu0 0.0
        %4495 = vmatprep.subr.mxu0 0.0
        %4496 = vmatpush1.msra.mxu0 0.0
        %4497 = vmatprep.subr.mxu0 0.0
        %4498 = vmatpush1.msra.mxu0 0.0
        %4499 = vmatprep.subr.mxu0 0.0
        %4500 = vmatpush1.msra.mxu0 0.0
        %4501 = vmatprep.subr.mxu0 0.0
        %4502 = vmatpush1.msra.mxu0 0.0
        %4503 = vmatprep.subr.mxu0 0.0
        %4504 = vmatpush1.msra.mxu0 0.0
        %4505 = vmatprep.subr.mxu0 0.0
        %4506 = vmatpush1.msra.mxu0 0.0
        %4507 = vmatprep.subr.mxu0 0.0
        %4508 = vmatpush1.msra.mxu0 0.0
        %4509 = vmatprep.subr.mxu0 0.0
        %4510 = vmatpush1.msra.mxu0 0.0
        %4511 = vmatprep.mubr.f32.mxu0 0.0
        %4512 = vmatmul.mubr.f32.gmra.mrb[0].mxu0 %v891
        %v4513 = vpop.f32.mrb[0].mxu0
        %v4514 = vadd.f32 0.0, %v4513
        %v4515 = vpop.f32.mrb[0].mxu0
        %4516 = vdwg.mxu0
        %v4517 = vadd.f32 %v4431, %v4514
        %v4518 = vadd.f32 %v4517, %v970
        %4519 = vadd.xlane.f32.xlu0 %v4518
        %v4520 = vpop.xlane.xlu0 %4519
        %v4521 = vadd.f32 %v3930, %v4520
        %v4522 = vmul.f32 %v4518, %v4518
        %4523 = vadd.xlane.f32.xlu0 %v4522
        %v4524 = vpop.xlane.xlu0 %4523
        %v4525 = vadd.f32 %v3934, %v4524
        %s4526 = scalar_lea.vmem %s288, 7 [#allocation2]
        %v4527 = vld [vmem:[%s4526] ss:$8 sm:$0x3]
        %s4528 = scalar_lea.vmem %s288, 23 [#allocation2]
        %v4529 = vld [vmem:[%s4528] ss:$8 sm:$0x3]
        %s4530 = scalar_lea.vmem %s288, 39 [#allocation2]
        %v4531 = vld [vmem:[%s4530] ss:$8 sm:$0x3]
        %s4532 = scalar_lea.vmem %s288, 55 [#allocation2]
        %v4533 = vld [vmem:[%s4532] ss:$8 sm:$0x3]
        %v4538 = vcombine.low %v4527, %v4529
        %v4539 = vcombine.low %v4531, %v4533
        %v4541 = vunpack.c.l.s4 1966171168
        %v4542 = vunpack.c.0.s8 %v4541
        %v4543 = vlaneseq
        %v4544 = vshrl.u32 %v4543, 7
        %v4545 = vsub.s32 %v4542, %v4544
        %v4546 = vrot.slane %v4538, %v4545
        %v4548 = vunpack.c.l.s4 1966171168
        %v4549 = vunpack.c.0.s8 %v4548
        %v4550 = vlaneseq
        %v4551 = vshrl.u32 %v4550, 7
        %v4552 = vsub.s32 %v4549, %v4551
        %v4553 = vrot.slane %v4539, %v4552
        %v4554 = vcombine.low %v4546, %v4553
        %v4555 = vcombine.high %v4546, %v4553
        %v4557 = vunpack.c.l.s4 1966171168
        %v4558 = vunpack.c.0.s8 %v4557
        %v4559 = vlaneseq
        %v4560 = vshrl.u32 %v4559, 7
        %v4561 = vsub.s32 %v4558, %v4560
        %v4562 = vrot.slane %v4554, %v4561
        %v4564 = vunpack.c.l.s4 1966171168
        %v4565 = vunpack.c.0.s8 %v4564
        %v4566 = vlaneseq
        %v4567 = vshrl.u32 %v4566, 7
        %v4568 = vsub.s32 %v4565, %v4567
        %v4569 = vrot.slane %v4555, %v4568
        %4570 = vrot.lane.b32.xlu0 %v4562, 127
        %v4571 = vpop.permute.xlu0 %4570
        %4572 = vrot.lane.b32.xlu0 %v4569, 127
        %v4573 = vpop.permute.xlu0 %4572
        %v4574 = vsel %vm404, %v4571, %v4573
        %v4575 = vsel %vm410, %v4574, 0
        %4577 = vmatprep.subr.mxu0 0.0
        %4578 = vmatpush1.msra.mxu0 %v4575
        %4579 = vmatprep.subr.mxu0 0.0
        %4580 = vmatpush1.msra.mxu0 0.0
        %4581 = vmatprep.subr.mxu0 0.0
        %4582 = vmatpush1.msra.mxu0 0.0
        %4583 = vmatprep.subr.mxu0 0.0
        %4584 = vmatpush1.msra.mxu0 0.0
        %4585 = vmatprep.subr.mxu0 0.0
        %4586 = vmatpush1.msra.mxu0 0.0
        %4587 = vmatprep.subr.mxu0 0.0
        %4588 = vmatpush1.msra.mxu0 0.0
        %4589 = vmatprep.subr.mxu0 0.0
        %4590 = vmatpush1.msra.mxu0 0.0
        %4591 = vmatprep.subr.mxu0 0.0
        %4592 = vmatpush1.msra.mxu0 0.0
        %4593 = vmatprep.subr.mxu0 0.0
        %4594 = vmatpush1.msra.mxu0 0.0
        %4595 = vmatprep.subr.mxu0 0.0
        %4596 = vmatpush1.msra.mxu0 0.0
        %4597 = vmatprep.subr.mxu0 0.0
        %4598 = vmatpush1.msra.mxu0 0.0
        %4599 = vmatprep.subr.mxu0 0.0
        %4600 = vmatpush1.msra.mxu0 0.0
        %4601 = vmatprep.subr.mxu0 0.0
        %4602 = vmatpush1.msra.mxu0 0.0
        %4603 = vmatprep.subr.mxu0 0.0
        %4604 = vmatpush1.msra.mxu0 0.0
        %4605 = vmatprep.subr.mxu0 0.0
        %4606 = vmatpush1.msra.mxu0 0.0
        %4607 = vmatprep.subr.mxu0 0.0
        %4608 = vmatpush1.msra.mxu0 0.0
        %4609 = vmatprep.subr.mxu0 0.0
        %4610 = vmatpush1.msra.mxu0 0.0
        %4611 = vmatprep.subr.mxu0 0.0
        %4612 = vmatpush1.msra.mxu0 0.0
        %4613 = vmatprep.subr.mxu0 0.0
        %4614 = vmatpush1.msra.mxu0 0.0
        %4615 = vmatprep.subr.mxu0 0.0
        %4616 = vmatpush1.msra.mxu0 0.0
        %4617 = vmatprep.subr.mxu0 0.0
        %4618 = vmatpush1.msra.mxu0 0.0
        %4619 = vmatprep.subr.mxu0 0.0
        %4620 = vmatpush1.msra.mxu0 0.0
        %4621 = vmatprep.subr.mxu0 0.0
        %4622 = vmatpush1.msra.mxu0 0.0
        %4623 = vmatprep.subr.mxu0 0.0
        %4624 = vmatpush1.msra.mxu0 0.0
        %4625 = vmatprep.subr.mxu0 0.0
        %4626 = vmatpush1.msra.mxu0 0.0
        %4627 = vmatprep.subr.mxu0 0.0
        %4628 = vmatpush1.msra.mxu0 0.0
        %4629 = vmatprep.subr.mxu0 0.0
        %4630 = vmatpush1.msra.mxu0 0.0
        %4631 = vmatprep.subr.mxu0 0.0
        %4632 = vmatpush1.msra.mxu0 0.0
        %4633 = vmatprep.subr.mxu0 0.0
        %4634 = vmatpush1.msra.mxu0 0.0
        %4635 = vmatprep.subr.mxu0 0.0
        %4636 = vmatpush1.msra.mxu0 0.0
        %4637 = vmatprep.subr.mxu0 0.0
        %4638 = vmatpush1.msra.mxu0 0.0
        %4639 = vmatprep.subr.mxu0 0.0
        %4640 = vmatpush1.msra.mxu0 0.0
        %4641 = vmatprep.mubr.f32.mxu0 0.0
        %4642 = vmatmul.mubr.f32.gmra.mrb[0].mxu0 %v408
        %v4643 = vpop.f32.mrb[0].mxu0
        %v4644 = vadd.f32 0.0, %v4643
        %v4645 = vpop.f32.mrb[0].mxu0
        %4646 = vdwg.mxu0
        %v4647 = vsel %vm410, %v4562, 0
        %4649 = vmatprep.subr.mxu0 0.0
        %4650 = vmatpush1.msra.mxu0 %v4647
        %4651 = vmatprep.subr.mxu0 0.0
        %4652 = vmatpush1.msra.mxu0 0.0
        %4653 = vmatprep.subr.mxu0 0.0
        %4654 = vmatpush1.msra.mxu0 0.0
        %4655 = vmatprep.subr.mxu0 0.0
        %4656 = vmatpush1.msra.mxu0 0.0
        %4657 = vmatprep.subr.mxu0 0.0
        %4658 = vmatpush1.msra.mxu0 0.0
        %4659 = vmatprep.subr.mxu0 0.0
        %4660 = vmatpush1.msra.mxu0 0.0
        %4661 = vmatprep.subr.mxu0 0.0
        %4662 = vmatpush1.msra.mxu0 0.0
        %4663 = vmatprep.subr.mxu0 0.0
        %4664 = vmatpush1.msra.mxu0 0.0
        %4665 = vmatprep.subr.mxu0 0.0
        %4666 = vmatpush1.msra.mxu0 0.0
        %4667 = vmatprep.subr.mxu0 0.0
        %4668 = vmatpush1.msra.mxu0 0.0
        %4669 = vmatprep.subr.mxu0 0.0
        %4670 = vmatpush1.msra.mxu0 0.0
        %4671 = vmatprep.subr.mxu0 0.0
        %4672 = vmatpush1.msra.mxu0 0.0
        %4673 = vmatprep.subr.mxu0 0.0
        %4674 = vmatpush1.msra.mxu0 0.0
        %4675 = vmatprep.subr.mxu0 0.0
        %4676 = vmatpush1.msra.mxu0 0.0
        %4677 = vmatprep.subr.mxu0 0.0
        %4678 = vmatpush1.msra.mxu0 0.0
        %4679 = vmatprep.subr.mxu0 0.0
        %4680 = vmatpush1.msra.mxu0 0.0
        %4681 = vmatprep.subr.mxu0 0.0
        %4682 = vmatpush1.msra.mxu0 0.0
        %4683 = vmatprep.subr.mxu0 0.0
        %4684 = vmatpush1.msra.mxu0 0.0
        %4685 = vmatprep.subr.mxu0 0.0
        %4686 = vmatpush1.msra.mxu0 0.0
        %4687 = vmatprep.subr.mxu0 0.0
        %4688 = vmatpush1.msra.mxu0 0.0
        %4689 = vmatprep.subr.mxu0 0.0
        %4690 = vmatpush1.msra.mxu0 0.0
        %4691 = vmatprep.subr.mxu0 0.0
        %4692 = vmatpush1.msra.mxu0 0.0
        %4693 = vmatprep.subr.mxu0 0.0
        %4694 = vmatpush1.msra.mxu0 0.0
        %4695 = vmatprep.subr.mxu0 0.0
        %4696 = vmatpush1.msra.mxu0 0.0
        %4697 = vmatprep.subr.mxu0 0.0
        %4698 = vmatpush1.msra.mxu0 0.0
        %4699 = vmatprep.subr.mxu0 0.0
        %4700 = vmatpush1.msra.mxu0 0.0
        %4701 = vmatprep.subr.mxu0 0.0
        %4702 = vmatpush1.msra.mxu0 0.0
        %4703 = vmatprep.subr.mxu0 0.0
        %4704 = vmatpush1.msra.mxu0 0.0
        %4705 = vmatprep.subr.mxu0 0.0
        %4706 = vmatpush1.msra.mxu0 0.0
        %4707 = vmatprep.subr.mxu0 0.0
        %4708 = vmatpush1.msra.mxu0 0.0
        %4709 = vmatprep.subr.mxu0 0.0
        %4710 = vmatpush1.msra.mxu0 0.0
        %4711 = vmatprep.subr.mxu0 0.0
        %4712 = vmatpush1.msra.mxu0 0.0
        %4713 = vmatprep.mubr.f32.mxu0 0.0
        %4714 = vmatmul.mubr.f32.gmra.mrb[0].mxu0 %v484
        %v4715 = vpop.f32.mrb[0].mxu0
        %v4716 = vadd.f32 %v4644, %v4715
        %v4717 = vpop.f32.mrb[0].mxu0
        %4718 = vdwg.mxu0
        %s4719 = scalar_lea.vmem %s297, 7 [#allocation4]
        %v4720 = vld [vmem:[%s4719] ss:$8 sm:$0x3]
        %s4721 = scalar_lea.vmem %s297, 23 [#allocation4]
        %v4722 = vld [vmem:[%s4721] ss:$8 sm:$0x3]
        %s4723 = scalar_lea.vmem %s297, 39 [#allocation4]
        %v4724 = vld [vmem:[%s4723] ss:$8 sm:$0x3]
        %s4725 = scalar_lea.vmem %s297, 55 [#allocation4]
        %v4726 = vld [vmem:[%s4725] ss:$8 sm:$0x3]
        %v4731 = vcombine.low %v4720, %v4722
        %v4732 = vcombine.low %v4724, %v4726
        %v4734 = vunpack.c.l.s4 1966171168
        %v4735 = vunpack.c.0.s8 %v4734
        %v4736 = vlaneseq
        %v4737 = vshrl.u32 %v4736, 7
        %v4738 = vsub.s32 %v4735, %v4737
        %v4739 = vrot.slane %v4731, %v4738
        %v4741 = vunpack.c.l.s4 1966171168
        %v4742 = vunpack.c.0.s8 %v4741
        %v4743 = vlaneseq
        %v4744 = vshrl.u32 %v4743, 7
        %v4745 = vsub.s32 %v4742, %v4744
        %v4746 = vrot.slane %v4732, %v4745
        %v4747 = vcombine.low %v4739, %v4746
        %v4749 = vunpack.c.l.s4 1966171168
        %v4750 = vunpack.c.0.s8 %v4749
        %v4751 = vlaneseq
        %v4752 = vshrl.u32 %v4751, 7
        %v4753 = vsub.s32 %v4750, %v4752
        %v4754 = vrot.slane %v4747, %v4753
        %v4755 = vsel %vm410, %v4754, 0
        %4757 = vmatprep.subr.mxu0 0.0
        %4758 = vmatpush1.msra.mxu0 %v4755
        %4759 = vmatprep.subr.mxu0 0.0
        %4760 = vmatpush1.msra.mxu0 0.0
        %4761 = vmatprep.subr.mxu0 0.0
        %4762 = vmatpush1.msra.mxu0 0.0
        %4763 = vmatprep.subr.mxu0 0.0
        %4764 = vmatpush1.msra.mxu0 0.0
        %4765 = vmatprep.subr.mxu0 0.0
        %4766 = vmatpush1.msra.mxu0 0.0
        %4767 = vmatprep.subr.mxu0 0.0
        %4768 = vmatpush1.msra.mxu0 0.0
        %4769 = vmatprep.subr.mxu0 0.0
        %4770 = vmatpush1.msra.mxu0 0.0
        %4771 = vmatprep.subr.mxu0 0.0
        %4772 = vmatpush1.msra.mxu0 0.0
        %4773 = vmatprep.subr.mxu0 0.0
        %4774 = vmatpush1.msra.mxu0 0.0
        %4775 = vmatprep.subr.mxu0 0.0
        %4776 = vmatpush1.msra.mxu0 0.0
        %4777 = vmatprep.subr.mxu0 0.0
        %4778 = vmatpush1.msra.mxu0 0.0
        %4779 = vmatprep.subr.mxu0 0.0
        %4780 = vmatpush1.msra.mxu0 0.0
        %4781 = vmatprep.subr.mxu0 0.0
        %4782 = vmatpush1.msra.mxu0 0.0
        %4783 = vmatprep.subr.mxu0 0.0
        %4784 = vmatpush1.msra.mxu0 0.0
        %4785 = vmatprep.subr.mxu0 0.0
        %4786 = vmatpush1.msra.mxu0 0.0
        %4787 = vmatprep.subr.mxu0 0.0
        %4788 = vmatpush1.msra.mxu0 0.0
        %4789 = vmatprep.subr.mxu0 0.0
        %4790 = vmatpush1.msra.mxu0 0.0
        %4791 = vmatprep.subr.mxu0 0.0
        %4792 = vmatpush1.msra.mxu0 0.0
        %4793 = vmatprep.subr.mxu0 0.0
        %4794 = vmatpush1.msra.mxu0 0.0
        %4795 = vmatprep.subr.mxu0 0.0
        %4796 = vmatpush1.msra.mxu0 0.0
        %4797 = vmatprep.subr.mxu0 0.0
        %4798 = vmatpush1.msra.mxu0 0.0
        %4799 = vmatprep.subr.mxu0 0.0
        %4800 = vmatpush1.msra.mxu0 0.0
        %4801 = vmatprep.subr.mxu0 0.0
        %4802 = vmatpush1.msra.mxu0 0.0
        %4803 = vmatprep.subr.mxu0 0.0
        %4804 = vmatpush1.msra.mxu0 0.0
        %4805 = vmatprep.subr.mxu0 0.0
        %4806 = vmatpush1.msra.mxu0 0.0
        %4807 = vmatprep.subr.mxu0 0.0
        %4808 = vmatpush1.msra.mxu0 0.0
        %4809 = vmatprep.subr.mxu0 0.0
        %4810 = vmatpush1.msra.mxu0 0.0
        %4811 = vmatprep.subr.mxu0 0.0
        %4812 = vmatpush1.msra.mxu0 0.0
        %4813 = vmatprep.subr.mxu0 0.0
        %4814 = vmatpush1.msra.mxu0 0.0
        %4815 = vmatprep.subr.mxu0 0.0
        %4816 = vmatpush1.msra.mxu0 0.0
        %4817 = vmatprep.subr.mxu0 0.0
        %4818 = vmatpush1.msra.mxu0 0.0
        %4819 = vmatprep.subr.mxu0 0.0
        %4820 = vmatpush1.msra.mxu0 0.0
        %4821 = vmatprep.mubr.f32.mxu0 0.0
        %4822 = vmatmul.mubr.f32.gmra.mrb[0].mxu0 %v596
        %v4823 = vpop.f32.mrb[0].mxu0
        %v4824 = vadd.f32 0.0, %v4823
        %v4825 = vpop.f32.mrb[0].mxu0
        %4826 = vdwg.mxu0
        %v4827 = vadd.f32 %v4716, %v4824
        %v4828 = vcombine.high %v4739, %v4746
        %v4830 = vunpack.c.l.s4 1966171168
        %v4831 = vunpack.c.0.s8 %v4830
        %v4832 = vlaneseq
        %v4833 = vshrl.u32 %v4832, 7
        %v4834 = vsub.s32 %v4831, %v4833
        %v4835 = vrot.slane %v4828, %v4834
        %4836 = vrot.lane.b32.xlu0 %v4754, 127
        %v4837 = vpop.permute.xlu0 %4836
        %4838 = vrot.lane.b32.xlu0 %v4835, 127
        %v4839 = vpop.permute.xlu0 %4838
        %v4840 = vsel %vm404, %v4837, %v4839
        %v4841 = vsel %vm410, %v4840, 0
        %4843 = vmatprep.subr.mxu0 0.0
        %4844 = vmatpush1.msra.mxu0 %v4841
        %4845 = vmatprep.subr.mxu0 0.0
        %4846 = vmatpush1.msra.mxu0 0.0
        %4847 = vmatprep.subr.mxu0 0.0
        %4848 = vmatpush1.msra.mxu0 0.0
        %4849 = vmatprep.subr.mxu0 0.0
        %4850 = vmatpush1.msra.mxu0 0.0
        %4851 = vmatprep.subr.mxu0 0.0
        %4852 = vmatpush1.msra.mxu0 0.0
        %4853 = vmatprep.subr.mxu0 0.0
        %4854 = vmatpush1.msra.mxu0 0.0
        %4855 = vmatprep.subr.mxu0 0.0
        %4856 = vmatpush1.msra.mxu0 0.0
        %4857 = vmatprep.subr.mxu0 0.0
        %4858 = vmatpush1.msra.mxu0 0.0
        %4859 = vmatprep.subr.mxu0 0.0
        %4860 = vmatpush1.msra.mxu0 0.0
        %4861 = vmatprep.subr.mxu0 0.0
        %4862 = vmatpush1.msra.mxu0 0.0
        %4863 = vmatprep.subr.mxu0 0.0
        %4864 = vmatpush1.msra.mxu0 0.0
        %4865 = vmatprep.subr.mxu0 0.0
        %4866 = vmatpush1.msra.mxu0 0.0
        %4867 = vmatprep.subr.mxu0 0.0
        %4868 = vmatpush1.msra.mxu0 0.0
        %4869 = vmatprep.subr.mxu0 0.0
        %4870 = vmatpush1.msra.mxu0 0.0
        %4871 = vmatprep.subr.mxu0 0.0
        %4872 = vmatpush1.msra.mxu0 0.0
        %4873 = vmatprep.subr.mxu0 0.0
        %4874 = vmatpush1.msra.mxu0 0.0
        %4875 = vmatprep.subr.mxu0 0.0
        %4876 = vmatpush1.msra.mxu0 0.0
        %4877 = vmatprep.subr.mxu0 0.0
        %4878 = vmatpush1.msra.mxu0 0.0
        %4879 = vmatprep.subr.mxu0 0.0
        %4880 = vmatpush1.msra.mxu0 0.0
        %4881 = vmatprep.subr.mxu0 0.0
        %4882 = vmatpush1.msra.mxu0 0.0
        %4883 = vmatprep.subr.mxu0 0.0
        %4884 = vmatpush1.msra.mxu0 0.0
        %4885 = vmatprep.subr.mxu0 0.0
        %4886 = vmatpush1.msra.mxu0 0.0
        %4887 = vmatprep.subr.mxu0 0.0
        %4888 = vmatpush1.msra.mxu0 0.0
        %4889 = vmatprep.subr.mxu0 0.0
        %4890 = vmatpush1.msra.mxu0 0.0
        %4891 = vmatprep.subr.mxu0 0.0
        %4892 = vmatpush1.msra.mxu0 0.0
        %4893 = vmatprep.subr.mxu0 0.0
        %4894 = vmatpush1.msra.mxu0 0.0
        %4895 = vmatprep.subr.mxu0 0.0
        %4896 = vmatpush1.msra.mxu0 0.0
        %4897 = vmatprep.subr.mxu0 0.0
        %4898 = vmatpush1.msra.mxu0 0.0
        %4899 = vmatprep.subr.mxu0 0.0
        %4900 = vmatpush1.msra.mxu0 0.0
        %4901 = vmatprep.subr.mxu0 0.0
        %4902 = vmatpush1.msra.mxu0 0.0
        %4903 = vmatprep.subr.mxu0 0.0
        %4904 = vmatpush1.msra.mxu0 0.0
        %4905 = vmatprep.subr.mxu0 0.0
        %4906 = vmatpush1.msra.mxu0 0.0
        %4907 = vmatprep.mubr.f32.mxu0 0.0
        %4908 = vmatmul.mubr.f32.gmra.mrb[0].mxu0 %v687
        %v4909 = vpop.f32.mrb[0].mxu0
        %v4910 = vadd.f32 0.0, %v4909
        %v4911 = vpop.f32.mrb[0].mxu0
        %4912 = vdwg.mxu0
        %v4913 = vadd.f32 %v4827, %v4910
        %s4914 = scalar_lea.vmem %s306, 7 [#allocation6]
        %v4915 = vld [vmem:[%s4914] ss:$8 sm:$0x3]
        %s4916 = scalar_lea.vmem %s306, 23 [#allocation6]
        %v4917 = vld [vmem:[%s4916] ss:$8 sm:$0x3]
        %s4918 = scalar_lea.vmem %s306, 39 [#allocation6]
        %v4919 = vld [vmem:[%s4918] ss:$8 sm:$0x3]
        %s4920 = scalar_lea.vmem %s306, 55 [#allocation6]
        %v4921 = vld [vmem:[%s4920] ss:$8 sm:$0x3]
        %v4926 = vcombine.low %v4915, %v4917
        %v4927 = vcombine.low %v4919, %v4921
        %v4929 = vunpack.c.l.s4 1966171168
        %v4930 = vunpack.c.0.s8 %v4929
        %v4931 = vlaneseq
        %v4932 = vshrl.u32 %v4931, 7
        %v4933 = vsub.s32 %v4930, %v4932
        %v4934 = vrot.slane %v4926, %v4933
        %v4936 = vunpack.c.l.s4 1966171168
        %v4937 = vunpack.c.0.s8 %v4936
        %v4938 = vlaneseq
        %v4939 = vshrl.u32 %v4938, 7
        %v4940 = vsub.s32 %v4937, %v4939
        %v4941 = vrot.slane %v4927, %v4940
        %v4942 = vcombine.low %v4934, %v4941
        %v4944 = vunpack.c.l.s4 1966171168
        %v4945 = vunpack.c.0.s8 %v4944
        %v4946 = vlaneseq
        %v4947 = vshrl.u32 %v4946, 7
        %v4948 = vsub.s32 %v4945, %v4947
        %v4949 = vrot.slane %v4942, %v4948
        %v4950 = vsel %vm410, %v4949, 0
        %4952 = vmatprep.subr.mxu0 0.0
        %4953 = vmatpush1.msra.mxu0 %v4950
        %4954 = vmatprep.subr.mxu0 0.0
        %4955 = vmatpush1.msra.mxu0 0.0
        %4956 = vmatprep.subr.mxu0 0.0
        %4957 = vmatpush1.msra.mxu0 0.0
        %4958 = vmatprep.subr.mxu0 0.0
        %4959 = vmatpush1.msra.mxu0 0.0
        %4960 = vmatprep.subr.mxu0 0.0
        %4961 = vmatpush1.msra.mxu0 0.0
        %4962 = vmatprep.subr.mxu0 0.0
        %4963 = vmatpush1.msra.mxu0 0.0
        %4964 = vmatprep.subr.mxu0 0.0
        %4965 = vmatpush1.msra.mxu0 0.0
        %4966 = vmatprep.subr.mxu0 0.0
        %4967 = vmatpush1.msra.mxu0 0.0
        %4968 = vmatprep.subr.mxu0 0.0
        %4969 = vmatpush1.msra.mxu0 0.0
        %4970 = vmatprep.subr.mxu0 0.0
        %4971 = vmatpush1.msra.mxu0 0.0
        %4972 = vmatprep.subr.mxu0 0.0
        %4973 = vmatpush1.msra.mxu0 0.0
        %4974 = vmatprep.subr.mxu0 0.0
        %4975 = vmatpush1.msra.mxu0 0.0
        %4976 = vmatprep.subr.mxu0 0.0
        %4977 = vmatpush1.msra.mxu0 0.0
        %4978 = vmatprep.subr.mxu0 0.0
        %4979 = vmatpush1.msra.mxu0 0.0
        %4980 = vmatprep.subr.mxu0 0.0
        %4981 = vmatpush1.msra.mxu0 0.0
        %4982 = vmatprep.subr.mxu0 0.0
        %4983 = vmatpush1.msra.mxu0 0.0
        %4984 = vmatprep.subr.mxu0 0.0
        %4985 = vmatpush1.msra.mxu0 0.0
        %4986 = vmatprep.subr.mxu0 0.0
        %4987 = vmatpush1.msra.mxu0 0.0
        %4988 = vmatprep.subr.mxu0 0.0
        %4989 = vmatpush1.msra.mxu0 0.0
        %4990 = vmatprep.subr.mxu0 0.0
        %4991 = vmatpush1.msra.mxu0 0.0
        %4992 = vmatprep.subr.mxu0 0.0
        %4993 = vmatpush1.msra.mxu0 0.0
        %4994 = vmatprep.subr.mxu0 0.0
        %4995 = vmatpush1.msra.mxu0 0.0
        %4996 = vmatprep.subr.mxu0 0.0
        %4997 = vmatpush1.msra.mxu0 0.0
        %4998 = vmatprep.subr.mxu0 0.0
        %4999 = vmatpush1.msra.mxu0 0.0
        %5000 = vmatprep.subr.mxu0 0.0
        %5001 = vmatpush1.msra.mxu0 0.0
        %5002 = vmatprep.subr.mxu0 0.0
        %5003 = vmatpush1.msra.mxu0 0.0
        %5004 = vmatprep.subr.mxu0 0.0
        %5005 = vmatpush1.msra.mxu0 0.0
        %5006 = vmatprep.subr.mxu0 0.0
        %5007 = vmatpush1.msra.mxu0 0.0
        %5008 = vmatprep.subr.mxu0 0.0
        %5009 = vmatpush1.msra.mxu0 0.0
        %5010 = vmatprep.subr.mxu0 0.0
        %5011 = vmatpush1.msra.mxu0 0.0
        %5012 = vmatprep.subr.mxu0 0.0
        %5013 = vmatpush1.msra.mxu0 0.0
        %5014 = vmatprep.subr.mxu0 0.0
        %5015 = vmatpush1.msra.mxu0 0.0
        %5016 = vmatprep.mubr.f32.mxu0 0.0
        %5017 = vmatmul.mubr.f32.gmra.mrb[0].mxu0 %v800
        %v5018 = vpop.f32.mrb[0].mxu0
        %v5019 = vadd.f32 0.0, %v5018
        %v5020 = vpop.f32.mrb[0].mxu0
        %5021 = vdwg.mxu0
        %v5022 = vadd.f32 %v4913, %v5019
        %v5023 = vcombine.high %v4934, %v4941
        %v5025 = vunpack.c.l.s4 1966171168
        %v5026 = vunpack.c.0.s8 %v5025
        %v5027 = vlaneseq
        %v5028 = vshrl.u32 %v5027, 7
        %v5029 = vsub.s32 %v5026, %v5028
        %v5030 = vrot.slane %v5023, %v5029
        %5031 = vrot.lane.b32.xlu0 %v4949, 127
        %v5032 = vpop.permute.xlu0 %5031
        %5033 = vrot.lane.b32.xlu0 %v5030, 127
        %v5034 = vpop.permute.xlu0 %5033
        %v5035 = vsel %vm404, %v5032, %v5034
        %v5036 = vsel %vm410, %v5035, 0
        %5038 = vmatprep.subr.mxu0 0.0
        %5039 = vmatpush1.msra.mxu0 %v5036
        %5040 = vmatprep.subr.mxu0 0.0
        %5041 = vmatpush1.msra.mxu0 0.0
        %5042 = vmatprep.subr.mxu0 0.0
        %5043 = vmatpush1.msra.mxu0 0.0
        %5044 = vmatprep.subr.mxu0 0.0
        %5045 = vmatpush1.msra.mxu0 0.0
        %5046 = vmatprep.subr.mxu0 0.0
        %5047 = vmatpush1.msra.mxu0 0.0
        %5048 = vmatprep.subr.mxu0 0.0
        %5049 = vmatpush1.msra.mxu0 0.0
        %5050 = vmatprep.subr.mxu0 0.0
        %5051 = vmatpush1.msra.mxu0 0.0
        %5052 = vmatprep.subr.mxu0 0.0
        %5053 = vmatpush1.msra.mxu0 0.0
        %5054 = vmatprep.subr.mxu0 0.0
        %5055 = vmatpush1.msra.mxu0 0.0
        %5056 = vmatprep.subr.mxu0 0.0
        %5057 = vmatpush1.msra.mxu0 0.0
        %5058 = vmatprep.subr.mxu0 0.0
        %5059 = vmatpush1.msra.mxu0 0.0
        %5060 = vmatprep.subr.mxu0 0.0
        %5061 = vmatpush1.msra.mxu0 0.0
        %5062 = vmatprep.subr.mxu0 0.0
        %5063 = vmatpush1.msra.mxu0 0.0
        %5064 = vmatprep.subr.mxu0 0.0
        %5065 = vmatpush1.msra.mxu0 0.0
        %5066 = vmatprep.subr.mxu0 0.0
        %5067 = vmatpush1.msra.mxu0 0.0
        %5068 = vmatprep.subr.mxu0 0.0
        %5069 = vmatpush1.msra.mxu0 0.0
        %5070 = vmatprep.subr.mxu0 0.0
        %5071 = vmatpush1.msra.mxu0 0.0
        %5072 = vmatprep.subr.mxu0 0.0
        %5073 = vmatpush1.msra.mxu0 0.0
        %5074 = vmatprep.subr.mxu0 0.0
        %5075 = vmatpush1.msra.mxu0 0.0
        %5076 = vmatprep.subr.mxu0 0.0
        %5077 = vmatpush1.msra.mxu0 0.0
        %5078 = vmatprep.subr.mxu0 0.0
        %5079 = vmatpush1.msra.mxu0 0.0
        %5080 = vmatprep.subr.mxu0 0.0
        %5081 = vmatpush1.msra.mxu0 0.0
        %5082 = vmatprep.subr.mxu0 0.0
        %5083 = vmatpush1.msra.mxu0 0.0
        %5084 = vmatprep.subr.mxu0 0.0
        %5085 = vmatpush1.msra.mxu0 0.0
        %5086 = vmatprep.subr.mxu0 0.0
        %5087 = vmatpush1.msra.mxu0 0.0
        %5088 = vmatprep.subr.mxu0 0.0
        %5089 = vmatpush1.msra.mxu0 0.0
        %5090 = vmatprep.subr.mxu0 0.0
        %5091 = vmatpush1.msra.mxu0 0.0
        %5092 = vmatprep.subr.mxu0 0.0
        %5093 = vmatpush1.msra.mxu0 0.0
        %5094 = vmatprep.subr.mxu0 0.0
        %5095 = vmatpush1.msra.mxu0 0.0
        %5096 = vmatprep.subr.mxu0 0.0
        %5097 = vmatpush1.msra.mxu0 0.0
        %5098 = vmatprep.subr.mxu0 0.0
        %5099 = vmatpush1.msra.mxu0 0.0
        %5100 = vmatprep.subr.mxu0 0.0
        %5101 = vmatpush1.msra.mxu0 0.0
        %5102 = vmatprep.mubr.f32.mxu0 0.0
        %5103 = vmatmul.mubr.f32.gmra.mrb[0].mxu0 %v891
        %v5104 = vpop.f32.mrb[0].mxu0
        %v5105 = vadd.f32 0.0, %v5104
        %v5106 = vpop.f32.mrb[0].mxu0
        %5107 = vdwg.mxu0
        %v5108 = vadd.f32 %v5022, %v5105
        %v5109 = vadd.f32 %v5108, %v970
        %5110 = vadd.xlane.f32.xlu0 %v5109
        %v5111 = vpop.xlane.xlu0 %5110
        %v5112 = vadd.f32 %v4521, %v5111
        %v5113 = vmul.f32 %v5109, %v5109
        %5114 = vadd.xlane.f32.xlu0 %v5113
        %v5115 = vpop.xlane.xlu0 %5114
        %v5116 = vadd.f32 %v4525, %v5115
        %vm5117 = vcmask 7168
        %v5118 = vsel %vm5117, %v5112, %v5116
        %vm5119 = vcmask 15360
        %5120 = vst.msk [vmem:[%s353] sm:$0xff] %vm5119, %v5118
        %p5121 = scmp.lt.s32.totalorder %s26, 1
        %s5122 = scalar_select %p5121, %s26, 1
        %p5123 = scmp.lt.s32.totalorder %s27, 1
        %s5124 = scalar_select %p5123, %s27, 1
        %s5125 = smul.addr %s5122, 2
        %s5126 = sadd.s32 %s5124, %s5125
        %s5127 = smul.addr %s5126, 8
        %s5128 = scalar_lea.vmem %s5, %s5127
        // Predicated region
        $region53: #{tpu_custom_call.1} parent=39 // pred_check
          %p5129 = pneg %p180
        $region54: #{tpu_custom_call.1} parent=39 // pred_check_branch
          %5131 = sbr.rel (%p5129) target = $region56
        $region55: #{tpu_custom_call.1} parent=39 // pred_region
          _
        $region56: #{tpu_custom_call.1} parent=39 // pred_fallthru
          _
      $region40: #{tpu_custom_call.1} parent=5 // pred_fallthru
        _
      %p5132 = scmp.le.s32.totalorder 2, %s17
      // Predicated region
      $region57: #{tpu_custom_call.1} parent=5 // pred_check
        %p5133 = pneg %p5132
      $region58: #{tpu_custom_call.1} parent=5 // pred_check_branch
        %5135 = sbr.rel (%p5133) target = $region60
      $region59: #{tpu_custom_call.1} parent=5 // pred_region
        %s5136 = ssub.s32 %s17, 2
        // Predicated region
        $region61: #{tpu_custom_call.1} parent=59 // pred_check
          %p5137 = pneg %p186
        $region62: #{tpu_custom_call.1} parent=59 // pred_check_branch
          %5139 = sbr.rel (%p5137) target = $region64
        $region63: #{tpu_custom_call.1} parent=59 // pred_region
          %p5140 = scmp.lt.s32.totalorder %s28, 1
          %s5141 = scalar_select %p5140, %s28, 1
          %p5142 = scmp.lt.s32.totalorder %s29, 1
          %s5143 = scalar_select %p5142, %s29, 1
          %s5144 = smul.addr %s5141, 2
          %s5145 = sadd.s32 %s5143, %s5144
          %s5146 = smul.addr %s5145, 8
          %s5147 = scalar_lea.vmem %s5, %s5146
        $region64: #{tpu_custom_call.1} parent=59 // pred_fallthru
          _
      $region60: #{tpu_custom_call.1} parent=5 // pred_fallthru
        _
    $region6: #{tpu_custom_call.1} parent=1 // loop_footer
      %s21 = sadd.s32 1, %s17
    $region7: #{tpu_custom_call.1} parent=1 // loop_footer_branch
      %16 = sbr.rel target = $region3
    $region8: #{tpu_custom_call.1} parent=1 // loop_exit
      _
    %5148 = vsyncpa [#allocation3], 1
    %s5149 = scalar_lea.sflag [#allocation3], 1
    %5150 = vsyncpa %s5149, 1
    %5151 = vsyncpa [#allocation5], 1
    %s5152 = scalar_lea.sflag [#allocation5], 1
    %5153 = vsyncpa %s5152, 1

</llo_original>
